<compile_context>
chip_gen: v7x
topology: tpu7x:2x2x1
jax: 0.10.0
libtpu: 0.0.40
codegen_flags: <defaults>
</compile_context>

<pallas_src>
import functools

import jax
import jax.numpy as jnp
from jax.experimental import pallas as pl
from jax.experimental.pallas import tpu as pltpu


# ----------------------------- Pallas kernel --------------------------------

def _matmul_bias_act_kernel(w_ref, x_ref, b_ref, o_ref, *, activation):
    # w: (Co, K) bf16, x: (K, TM) bf16, b: (Co, 1) f32 -> o: (Co, TM) out dtype.
    acc = jnp.dot(w_ref[...], x_ref[...], preferred_element_type=jnp.float32)
    acc = acc + b_ref[...]
    if activation == "relu":
        acc = jnp.maximum(acc, 0.0)
    elif activation == "tanh":
        acc = jnp.tanh(acc)
    elif activation != "none":
        raise ValueError(activation)
    o_ref[...] = acc.astype(o_ref.dtype)


def _round_up(x, m):
    return ((x + m - 1) // m) * m


def _choose_tile_m(m, cap=1024):
    """Lane tile for the M (= N*Ho*Wo) axis.

    Big tiles (up to 1024 lanes) amortize per-grid-step overhead and give large DMAs,
    but we keep >= 2 tiles whenever M > 256 so both v7x TensorCores get work."""
    if m <= 256:
        return _round_up(m, 128)
    return min(cap, _round_up((m + 1) // 2, 256))


def matmul_bias_act(w, patches, b, activation, out_dtype=jnp.bfloat16):
    """act(w @ patches + b[:, None]) on the MXU.

    w: (Co, K), patches: (K, M), b: (Co,) -> (Co, M) in out_dtype.
    M is the lane (last) axis; bf16 MXU inputs, f32 accumulate / bias / activation.
    Co is zero-padded to a multiple of 8 sublanes, M to a multiple of tile_m."""
    co, k = w.shape
    k2, m = patches.shape
    assert k == k2
    co_pad = _round_up(co, 8)
    tile_m = _choose_tile_m(m)
    m_pad = _round_up(m, tile_m)
    if co_pad != co:
        w = jnp.pad(w, ((0, co_pad - co), (0, 0)))
        b = jnp.pad(b, (0, co_pad - co))
    if m_pad != m:
        patches = jnp.pad(patches, ((0, 0), (0, m_pad - m)))

    w_bf = w.astype(jnp.bfloat16)
    p_bf = patches.astype(jnp.bfloat16)
    b2 = b.reshape(co_pad, 1).astype(jnp.float32)

    kernel = functools.partial(_matmul_bias_act_kernel, activation=activation)
    out = pl.pallas_call(
        kernel,
        out_shape=jax.ShapeDtypeStruct((co_pad, m_pad), out_dtype),
        grid_spec=pltpu.PrefetchScalarGridSpec(
            num_scalar_prefetch=0,
            grid=(m_pad // tile_m,),
            in_specs=[
                pl.BlockSpec((co_pad, k), lambda i: (0, 0)),
                pl.BlockSpec((k, tile_m), lambda i: (0, i)),
                pl.BlockSpec((co_pad, 1), lambda i: (0, 0)),
            ],
            out_specs=pl.BlockSpec((co_pad, tile_m), lambda i: (0, i)),
        ),
        compiler_params=pltpu.CompilerParams(
            dimension_semantics=("parallel",),
            vmem_limit_bytes=32 * 1024 * 1024),
    )(w_bf, p_bf, b2)
    return out[:co, :m]


# ------------------------------ conv glue ------------------------------------

def _im2col_cnhw(xp, k, stride):
    """xp: (C, N, H, W) already padded -> patches (k*k*C, N*Ho*Wo).

    K ordering is (kh, kw, C); only strided slices + stack (no big transposes)."""
    C, N, H, W = xp.shape
    Ho = (H - k) // stride + 1
    Wo = (W - k) // stride + 1
    cols = []
    for kh in range(k):
        for kw in range(k):
            cols.append(xp[:, :, kh:kh + stride * Ho:stride,
                           kw:kw + stride * Wo:stride])
    patches = jnp.stack(cols, axis=0)              # (k*k, C, N, Ho, Wo)
    return patches.reshape(k * k * C, N * Ho * Wo), Ho, Wo


def conv2d_cnhw(x, w, b, stride, pad, activation):
    """x: (Cin, N, H, W) bf16; w: (Cout, Cin, k, k) (PyTorch Conv2d layout) f32.

    Returns (Cout, N, Ho, Wo) bf16."""
    cout, cin, k, _ = w.shape
    n = x.shape[1]
    xp = jnp.pad(x, ((0, 0), (0, 0), (pad, pad), (pad, pad)))
    patches, ho, wo = _im2col_cnhw(xp, k, stride)
    # Flatten weights in the same (kh, kw, Cin) order as the patches.
    wmat = jnp.transpose(w, (0, 2, 3, 1)).reshape(cout, k * k * cin)
    out = matmul_bias_act(wmat, patches, b, activation)
    return out.reshape(cout, n, ho, wo)


def conv_transpose2d_cnhw(x, w, b, activation):
    """x: (Cin, N, H, W) bf16; w: (Cin, Cout, 4, 4) (PyTorch ConvTranspose2d layout).

    stride=2, padding=1, kernel=4 (as in the module).  Shared-window polyphase
    decomposition: y[:, :, 2a+r, 2b+c] only needs the 3x3 input window centered at
    (a, b).  Row parity r=0 uses kernel taps (3, 1) on rows {a-1, a}; r=1 uses
    (2, 0) on rows {a, a+1} (same for columns).  So all 4 parities become ONE
    (4*Cout, 9*Cin) matmul against a single shared k=3/stride=1 im2col (unused taps
    are zero), instead of 4 separate 2x2 sub-convs with 4 separate patch tensors.
    """
    cin, cout, k, _ = w.shape
    assert k == 4
    _, n, h, wdt = x.shape
    w_t = jnp.transpose(w, (1, 0, 2, 3))           # (Cout, Cin, 4, 4)
    # sel[r][d]: kernel tap used for input offset (d - 1) at output parity r; None -> 0
    sel = {0: (3, 1, None), 1: (None, 2, 0)}
    zero = jnp.zeros((cout, cin), w_t.dtype)

    def parity_weight(r, c):
        rows = []
        for dh in range(3):
            taps = []
            for dw in range(3):
                if sel[r][dh] is None or sel[c][dw] is None:
                    taps.append(zero)
                else:
                    taps.append(w_t[:, :, sel[r][dh], sel[c][dw]])
            rows.append(jnp.stack(taps, axis=1))   # (Cout, 3[dw], Cin)
        ws = jnp.stack(rows, axis=1)               # (Cout, 3[dh], 3[dw], Cin)
        return ws.reshape(cout, 9 * cin)

    # Rows stacked in (r, c) order -> row index = (2*r + c) * Cout + co.
    w_all = jnp.concatenate(
        [parity_weight(r, c) for r in (0, 1) for c in (0, 1)], axis=0)  # (4*Cout, 9*Cin)
    b_all = jnp.tile(b, 4)

    xp = jnp.pad(x, ((0, 0), (0, 0), (1, 1), (1, 1)))
    patches, _, _ = _im2col_cnhw(xp, 3, 1)         # Ho=H, Wo=W
    out = matmul_bias_act(w_all, patches, b_all, activation)   # (4*Cout, N*H*W) bf16
    out = out.reshape(2, 2, cout, n, h, wdt)
    # Interleave parities (bf16): out[r, c, :, :, a, b] -> y[:, :, 2a+r, 2b+c]
    y = jnp.transpose(out, (2, 3, 4, 0, 5, 1)).reshape(cout, n, 2 * h, 2 * wdt)
    return y


# --------------------------- parameter creation -------------------------------

def _init_conv_params(key, out_c, in_c, k):
    """Deterministic init mimicking PyTorch default (uniform +/- 1/sqrt(fan_in))."""
    bound = 1.0 / (in_c * k * k) ** 0.5
    kw_, kb_ = jax.random.split(key)
    w = jax.random.uniform(kw_, (out_c, in_c, k, k), jnp.float32, -bound, bound)
    b = jax.random.uniform(kb_, (out_c,), jnp.float32, -bound, bound)
    return w, b


def _init_convT_params(key, in_c, out_c, k):
    bound = 1.0 / (out_c * k * k) ** 0.5  # PyTorch ConvTranspose fan_in = weight.size(1)*k*k
    kw_, kb_ = jax.random.split(key)
    w = jax.random.uniform(kw_, (in_c, out_c, k, k), jnp.float32, -bound, bound)
    b = jax.random.uniform(kb_, (out_c,), jnp.float32, -bound, bound)
    return w, b


def init_params(key):
    keys = jax.random.split(key, 6)
    return {
        "enc1": _init_conv_params(keys[0], 12, 3, 4),
        "enc2": _init_conv_params(keys[1], 24, 12, 4),
        "enc3": _init_conv_params(keys[2], 48, 24, 4),
        "dec1": _init_convT_params(keys[3], 48, 24, 4),
        "dec2": _init_convT_params(keys[4], 24, 12, 4),
        "dec3": _init_convT_params(keys[5], 12, 3, 4),
    }


# ------------------------------ forward pass ----------------------------------

def conv_autoencoder_forward(params, img):
    # img: NCHW f32 (matching PyTorch).  Convert once to channel-major (C, N, H, W)
    # bf16; every layer consumes and produces that layout/dtype, so all inter-layer
    # HBM traffic (pad, im2col, parity interleave) is bf16 and there are no per-layer
    # NCHW round-trips.  Cast back to f32 fused with the final transpose.
    h = jnp.transpose(img, (1, 0, 2, 3)).astype(jnp.bfloat16)
    # Encoder: Conv(3->12) ReLU, Conv(12->24) ReLU, Conv(24->48) ReLU, k=4, s=2, p=1
    h = conv2d_cnhw(h, *params["enc1"], stride=2, pad=1, activation="relu")
    h = conv2d_cnhw(h, *params["enc2"], stride=2, pad=1, activation="relu")
    h = conv2d_cnhw(h, *params["enc3"], stride=2, pad=1, activation="relu")
    # Decoder: ConvT(48->24) ReLU, ConvT(24->12) ReLU, ConvT(12->3) Tanh, k=4, s=2, p=1
    h = conv_transpose2d_cnhw(h, *params["dec1"], activation="relu")
    h = conv_transpose2d_cnhw(h, *params["dec2"], activation="relu")
    h = conv_transpose2d_cnhw(h, *params["dec3"], activation="tanh")
    return jnp.transpose(h, (1, 0, 2, 3)).astype(jnp.float32)


# ----------------------- pure-JAX reference (correctness) ---------------------

def _ref_forward(params, img):
    def conv(x, w, b, act):
        y = jax.lax.conv_general_dilated(
            x, w, window_strides=(2, 2), padding=[(1, 1), (1, 1)],
            dimension_numbers=("NCHW", "OIHW", "NCHW"))
        y = y + b.reshape(1, -1, 1, 1)
        return jnp.maximum(y, 0.0) if act == "relu" else jnp.tanh(y)

    def convT(x, w, b, act):
        k = w.shape[-1]
        w_eq = jnp.flip(w, axis=(2, 3)).transpose(1, 0, 2, 3)  # (Cout, Cin, k, k)
        y = jax.lax.conv_general_dilated(
            x, w_eq, window_strides=(1, 1),
            padding=[(k - 2, k - 2), (k - 2, k - 2)],
            lhs_dilation=(2, 2),
            dimension_numbers=("NCHW", "OIHW", "NCHW"))
        y = y + b.reshape(1, -1, 1, 1)
        return jnp.maximum(y, 0.0) if act == "relu" else jnp.tanh(y)

    h = conv(img, *params["enc1"], "relu")
    h = conv(h, *params["enc2"], "relu")
    h = conv(h, *params["enc3"], "relu")
    h = convT(h, *params["dec1"], "relu")
    h = convT(h, *params["dec2"], "relu")
    h = convT(h, *params["dec3"], "tanh")
    return h


if __name__ == "__main__":
    key = jax.random.PRNGKey(0)
    k_params, k_input = jax.random.split(key)
    params = init_params(k_params)

    # NCHW input (3 channels, spatial divisible by 8 so three stride-2
    # down/upsamples round-trip), small batch.
    x = jax.random.normal(k_input, (2, 3, 32, 32), jnp.float32)

    fwd = jax.jit(conv_autoencoder_forward)
    out = jax.block_until_ready(fwd(params, x))

    assert out.shape == x.shape, (out.shape, x.shape)
    assert out.dtype == jnp.float32
    assert bool(jnp.all(jnp.isfinite(out)))
    # Tanh output must lie in [-1, 1].
    assert bool(jnp.max(jnp.abs(out)) <= 1.0 + 1e-6)

    # Compare against a pure-JAX f32 reference (bf16 MXU inputs / bf16 inter-layer
    # activations => small tolerance; same quantization points as the validated v2).
    ref = jax.block_until_ready(_ref_forward(params, x))
    max_err = float(jnp.max(jnp.abs(out - ref)))
    assert max_err < 5e-2, f"max abs error vs reference: {max_err}"

    print("KERNEL_OK")
</pallas_src>

<mosaic_0001>
module attributes {stable_mosaic.version = 11 : i64} {
  func.func @_matmul_bias_act_kernel(%arg0: i32, %arg1: memref<16x48xbf16, #tpu.memory_space<vmem>>, %arg2: memref<48x256xbf16, #tpu.memory_space<vmem>>, %arg3: memref<16x1xf32, #tpu.memory_space<vmem>>, %arg4: memref<16x256xbf16, #tpu.memory_space<vmem>>) attributes {dimension_semantics = [#tpu.dimension_semantics<parallel>], iteration_bounds = array<i64: 2>, scalar_prefetch = 0 : i64, scratch_operands = 0 : i64, tpu.core_type = #tpu.core_type<tc>, window_params = [{pipeline_mode = #tpu.pipeline_mode<synchronous>, transform_indices = @transform_0, window_bounds = array<i64: 16, 48>}, {transform_indices = @transform_1, window_bounds = array<i64: 48, 256>}, {pipeline_mode = #tpu.pipeline_mode<synchronous>, transform_indices = @transform_2, window_bounds = array<i64: 16, 1>}, {transform_indices = @transform_3, window_bounds = array<i64: 16, 256>}]} {
    %c0 = arith.constant 0 : index
    %c0_0 = arith.constant 0 : index
    %0 = vector.load %arg1[%c0, %c0_0] : memref<16x48xbf16, #tpu.memory_space<vmem>>, vector<16x48xbf16>
    %c0_1 = arith.constant 0 : index
    %c0_2 = arith.constant 0 : index
    %1 = vector.load %arg2[%c0_1, %c0_2] : memref<48x256xbf16, #tpu.memory_space<vmem>>, vector<48x256xbf16>
    %cst = arith.constant dense<0.000000e+00> : vector<16x256xf32>
    %2 = tpu.matmul %0, %1, %cst {dimension_numbers = #tpu.dot_dimension_numbers<[1], [0], [0], [1], [0, 0, 1, 1], [], []>} : vector<16x48xbf16>, vector<48x256xbf16>, vector<16x256xf32> -> vector<16x256xf32>
    %c0_3 = arith.constant 0 : index
    %c0_4 = arith.constant 0 : index
    %3 = vector.load %arg3[%c0_3, %c0_4] : memref<16x1xf32, #tpu.memory_space<vmem>>, vector<16x1xf32>
    %4 = vector.broadcast %3 : vector<16x1xf32> to vector<16x256xf32>
    %5 = arith.addf %2, %4 : vector<16x256xf32>
    %cst_5 = arith.constant 0.000000e+00 : f32
    %6 = vector.broadcast %cst_5 : f32 to vector<16x256xf32>
    %7 = arith.maximumf %5, %6 : vector<16x256xf32>
    %8 = arith.truncf %7 : vector<16x256xf32> to vector<16x256xbf16>
    %c0_6 = arith.constant 0 : index
    %c0_7 = arith.constant 0 : index
    %9 = vector.load %arg4[%c0_6, %c0_7] : memref<16x256xbf16, #tpu.memory_space<vmem>>, vector<16x256xbf16>
    tpu.vector_store %arg4[%c0_6, %c0_7], %8 {strides = array<i32>} : memref<16x256xbf16, #tpu.memory_space<vmem>>, vector<16x256xbf16>,
    return
  }
  func.func @transform_0(%arg0: i32) -> (i32, i32) {
    %c0_i32 = arith.constant 0 : i32
    %c0_i32_0 = arith.constant 0 : i32
    %c0_i32_1 = arith.constant 0 : i32
    return %c0_i32, %c0_i32_0 : i32, i32
  }
  func.func @transform_1(%arg0: i32) -> (i32, i32) {
    %c0_i32 = arith.constant 0 : i32
    %c0_i32_0 = arith.constant 0 : i32
    return %c0_i32, %arg0 : i32, i32
  }
  func.func @transform_2(%arg0: i32) -> (i32, i32) {
    %c0_i32 = arith.constant 0 : i32
    %c0_i32_0 = arith.constant 0 : i32
    %c0_i32_1 = arith.constant 0 : i32
    return %c0_i32, %c0_i32_0 : i32, i32
  }
  func.func @transform_3(%arg0: i32) -> (i32, i32) {
    %c0_i32 = arith.constant 0 : i32
    %c0_i32_0 = arith.constant 0 : i32
    return %c0_i32, %arg0 : i32, i32
  }
}

module attributes {stable_mosaic.version = 11 : i64} {
  func.func @_matmul_bias_act_kernel(%arg0: i32, %arg1: memref<24x192xbf16, #tpu.memory_space<vmem>>, %arg2: memref<192x128xbf16, #tpu.memory_space<vmem>>, %arg3: memref<24x1xf32, #tpu.memory_space<vmem>>, %arg4: memref<24x128xbf16, #tpu.memory_space<vmem>>) attributes {dimension_semantics = [#tpu.dimension_semantics<parallel>], iteration_bounds = array<i64: 1>, scalar_prefetch = 0 : i64, scratch_operands = 0 : i64, tpu.core_type = #tpu.core_type<tc>, window_params = [{pipeline_mode = #tpu.pipeline_mode<synchronous>, transform_indices = @transform_0, window_bounds = array<i64: 24, 192>}, {transform_indices = @transform_1, window_bounds = array<i64: 192, 128>}, {pipeline_mode = #tpu.pipeline_mode<synchronous>, transform_indices = @transform_2, window_bounds = array<i64: 24, 1>}, {transform_indices = @transform_3, window_bounds = array<i64: 24, 128>}]} {
    %c0 = arith.constant 0 : index
    %c0_0 = arith.constant 0 : index
    %0 = vector.load %arg1[%c0, %c0_0] : memref<24x192xbf16, #tpu.memory_space<vmem>>, vector<24x192xbf16>
    %c0_1 = arith.constant 0 : index
    %c0_2 = arith.constant 0 : index
    %1 = vector.load %arg2[%c0_1, %c0_2] : memref<192x128xbf16, #tpu.memory_space<vmem>>, vector<192x128xbf16>
    %cst = arith.constant dense<0.000000e+00> : vector<24x128xf32>
    %2 = tpu.matmul %0, %1, %cst {dimension_numbers = #tpu.dot_dimension_numbers<[1], [0], [0], [1], [0, 0, 1, 1], [], []>} : vector<24x192xbf16>, vector<192x128xbf16>, vector<24x128xf32> -> vector<24x128xf32>
    %c0_3 = arith.constant 0 : index
    %c0_4 = arith.constant 0 : index
    %3 = vector.load %arg3[%c0_3, %c0_4] : memref<24x1xf32, #tpu.memory_space<vmem>>, vector<24x1xf32>
    %4 = vector.broadcast %3 : vector<24x1xf32> to vector<24x128xf32>
    %5 = arith.addf %2, %4 : vector<24x128xf32>
    %cst_5 = arith.constant 0.000000e+00 : f32
    %6 = vector.broadcast %cst_5 : f32 to vector<24x128xf32>
    %7 = arith.maximumf %5, %6 : vector<24x128xf32>
    %8 = arith.truncf %7 : vector<24x128xf32> to vector<24x128xbf16>
    %c0_6 = arith.constant 0 : index
    %c0_7 = arith.constant 0 : index
    %9 = vector.load %arg4[%c0_6, %c0_7] : memref<24x128xbf16, #tpu.memory_space<vmem>>, vector<24x128xbf16>
    tpu.vector_store %arg4[%c0_6, %c0_7], %8 {strides = array<i32>} : memref<24x128xbf16, #tpu.memory_space<vmem>>, vector<24x128xbf16>,
    return
  }
  func.func @transform_0(%arg0: i32) -> (i32, i32) {
    %c0_i32 = arith.constant 0 : i32
    %c0_i32_0 = arith.constant 0 : i32
    %c0_i32_1 = arith.constant 0 : i32
    return %c0_i32, %c0_i32_0 : i32, i32
  }
  func.func @transform_1(%arg0: i32) -> (i32, i32) {
    %c0_i32 = arith.constant 0 : i32
    %c0_i32_0 = arith.constant 0 : i32
    return %c0_i32, %arg0 : i32, i32
  }
  func.func @transform_2(%arg0: i32) -> (i32, i32) {
    %c0_i32 = arith.constant 0 : i32
    %c0_i32_0 = arith.constant 0 : i32
    %c0_i32_1 = arith.constant 0 : i32
    return %c0_i32, %c0_i32_0 : i32, i32
  }
  func.func @transform_3(%arg0: i32) -> (i32, i32) {
    %c0_i32 = arith.constant 0 : i32
    %c0_i32_0 = arith.constant 0 : i32
    return %c0_i32, %arg0 : i32, i32
  }
}

module attributes {stable_mosaic.version = 11 : i64} {
  func.func @_matmul_bias_act_kernel(%arg0: i32, %arg1: memref<48x384xbf16, #tpu.memory_space<vmem>>, %arg2: memref<384x128xbf16, #tpu.memory_space<vmem>>, %arg3: memref<48x1xf32, #tpu.memory_space<vmem>>, %arg4: memref<48x128xbf16, #tpu.memory_space<vmem>>) attributes {dimension_semantics = [#tpu.dimension_semantics<parallel>], iteration_bounds = array<i64: 1>, scalar_prefetch = 0 : i64, scratch_operands = 0 : i64, tpu.core_type = #tpu.core_type<tc>, window_params = [{pipeline_mode = #tpu.pipeline_mode<synchronous>, transform_indices = @transform_0, window_bounds = array<i64: 48, 384>}, {transform_indices = @transform_1, window_bounds = array<i64: 384, 128>}, {pipeline_mode = #tpu.pipeline_mode<synchronous>, transform_indices = @transform_2, window_bounds = array<i64: 48, 1>}, {transform_indices = @transform_3, window_bounds = array<i64: 48, 128>}]} {
    %c0 = arith.constant 0 : index
    %c0_0 = arith.constant 0 : index
    %0 = vector.load %arg1[%c0, %c0_0] : memref<48x384xbf16, #tpu.memory_space<vmem>>, vector<48x384xbf16>
    %c0_1 = arith.constant 0 : index
    %c0_2 = arith.constant 0 : index
    %1 = vector.load %arg2[%c0_1, %c0_2] : memref<384x128xbf16, #tpu.memory_space<vmem>>, vector<384x128xbf16>
    %cst = arith.constant dense<0.000000e+00> : vector<48x128xf32>
    %2 = tpu.matmul %0, %1, %cst {dimension_numbers = #tpu.dot_dimension_numbers<[1], [0], [0], [1], [0, 0, 1, 1], [], []>} : vector<48x384xbf16>, vector<384x128xbf16>, vector<48x128xf32> -> vector<48x128xf32>
    %c0_3 = arith.constant 0 : index
    %c0_4 = arith.constant 0 : index
    %3 = vector.load %arg3[%c0_3, %c0_4] : memref<48x1xf32, #tpu.memory_space<vmem>>, vector<48x1xf32>
    %4 = vector.broadcast %3 : vector<48x1xf32> to vector<48x128xf32>
    %5 = arith.addf %2, %4 : vector<48x128xf32>
    %cst_5 = arith.constant 0.000000e+00 : f32
    %6 = vector.broadcast %cst_5 : f32 to vector<48x128xf32>
    %7 = arith.maximumf %5, %6 : vector<48x128xf32>
    %8 = arith.truncf %7 : vector<48x128xf32> to vector<48x128xbf16>
    %c0_6 = arith.constant 0 : index
    %c0_7 = arith.constant 0 : index
    %9 = vector.load %arg4[%c0_6, %c0_7] : memref<48x128xbf16, #tpu.memory_space<vmem>>, vector<48x128xbf16>
    tpu.vector_store %arg4[%c0_6, %c0_7], %8 {strides = array<i32>} : memref<48x128xbf16, #tpu.memory_space<vmem>>, vector<48x128xbf16>,
    return
  }
  func.func @transform_0(%arg0: i32) -> (i32, i32) {
    %c0_i32 = arith.constant 0 : i32
    %c0_i32_0 = arith.constant 0 : i32
    %c0_i32_1 = arith.constant 0 : i32
    return %c0_i32, %c0_i32_0 : i32, i32
  }
  func.func @transform_1(%arg0: i32) -> (i32, i32) {
    %c0_i32 = arith.constant 0 : i32
    %c0_i32_0 = arith.constant 0 : i32
    return %c0_i32, %arg0 : i32, i32
  }
  func.func @transform_2(%arg0: i32) -> (i32, i32) {
    %c0_i32 = arith.constant 0 : i32
    %c0_i32_0 = arith.constant 0 : i32
    %c0_i32_1 = arith.constant 0 : i32
    return %c0_i32, %c0_i32_0 : i32, i32
  }
  func.func @transform_3(%arg0: i32) -> (i32, i32) {
    %c0_i32 = arith.constant 0 : i32
    %c0_i32_0 = arith.constant 0 : i32
    return %c0_i32, %arg0 : i32, i32
  }
}

module attributes {stable_mosaic.version = 11 : i64} {
  func.func @_matmul_bias_act_kernel(%arg0: i32, %arg1: memref<96x432xbf16, #tpu.memory_space<vmem>>, %arg2: memref<432x128xbf16, #tpu.memory_space<vmem>>, %arg3: memref<96x1xf32, #tpu.memory_space<vmem>>, %arg4: memref<96x128xbf16, #tpu.memory_space<vmem>>) attributes {dimension_semantics = [#tpu.dimension_semantics<parallel>], iteration_bounds = array<i64: 1>, scalar_prefetch = 0 : i64, scratch_operands = 0 : i64, tpu.core_type = #tpu.core_type<tc>, window_params = [{pipeline_mode = #tpu.pipeline_mode<synchronous>, transform_indices = @transform_0, window_bounds = array<i64: 96, 432>}, {transform_indices = @transform_1, window_bounds = array<i64: 432, 128>}, {pipeline_mode = #tpu.pipeline_mode<synchronous>, transform_indices = @transform_2, window_bounds = array<i64: 96, 1>}, {transform_indices = @transform_3, window_bounds = array<i64: 96, 128>}]} {
    %c0 = arith.constant 0 : index
    %c0_0 = arith.constant 0 : index
    %0 = vector.load %arg1[%c0, %c0_0] : memref<96x432xbf16, #tpu.memory_space<vmem>>, vector<96x432xbf16>
    %c0_1 = arith.constant 0 : index
    %c0_2 = arith.constant 0 : index
    %1 = vector.load %arg2[%c0_1, %c0_2] : memref<432x128xbf16, #tpu.memory_space<vmem>>, vector<432x128xbf16>
    %cst = arith.constant dense<0.000000e+00> : vector<96x128xf32>
    %2 = tpu.matmul %0, %1, %cst {dimension_numbers = #tpu.dot_dimension_numbers<[1], [0], [0], [1], [0, 0, 1, 1], [], []>} : vector<96x432xbf16>, vector<432x128xbf16>, vector<96x128xf32> -> vector<96x128xf32>
    %c0_3 = arith.constant 0 : index
    %c0_4 = arith.constant 0 : index
    %3 = vector.load %arg3[%c0_3, %c0_4] : memref<96x1xf32, #tpu.memory_space<vmem>>, vector<96x1xf32>
    %4 = vector.broadcast %3 : vector<96x1xf32> to vector<96x128xf32>
    %5 = arith.addf %2, %4 : vector<96x128xf32>
    %cst_5 = arith.constant 0.000000e+00 : f32
    %6 = vector.broadcast %cst_5 : f32 to vector<96x128xf32>
    %7 = arith.maximumf %5, %6 : vector<96x128xf32>
    %8 = arith.truncf %7 : vector<96x128xf32> to vector<96x128xbf16>
    %c0_6 = arith.constant 0 : index
    %c0_7 = arith.constant 0 : index
    %9 = vector.load %arg4[%c0_6, %c0_7] : memref<96x128xbf16, #tpu.memory_space<vmem>>, vector<96x128xbf16>
    tpu.vector_store %arg4[%c0_6, %c0_7], %8 {strides = array<i32>} : memref<96x128xbf16, #tpu.memory_space<vmem>>, vector<96x128xbf16>,
    return
  }
  func.func @transform_0(%arg0: i32) -> (i32, i32) {
    %c0_i32 = arith.constant 0 : i32
    %c0_i32_0 = arith.constant 0 : i32
    %c0_i32_1 = arith.constant 0 : i32
    return %c0_i32, %c0_i32_0 : i32, i32
  }
  func.func @transform_1(%arg0: i32) -> (i32, i32) {
    %c0_i32 = arith.constant 0 : i32
    %c0_i32_0 = arith.constant 0 : i32
    return %c0_i32, %arg0 : i32, i32
  }
  func.func @transform_2(%arg0: i32) -> (i32, i32) {
    %c0_i32 = arith.constant 0 : i32
    %c0_i32_0 = arith.constant 0 : i32
    %c0_i32_1 = arith.constant 0 : i32
    return %c0_i32, %c0_i32_0 : i32, i32
  }
  func.func @transform_3(%arg0: i32) -> (i32, i32) {
    %c0_i32 = arith.constant 0 : i32
    %c0_i32_0 = arith.constant 0 : i32
    return %c0_i32, %arg0 : i32, i32
  }
}

module attributes {stable_mosaic.version = 11 : i64} {
  func.func @_matmul_bias_act_kernel(%arg0: i32, %arg1: memref<48x216xbf16, #tpu.memory_space<vmem>>, %arg2: memref<216x128xbf16, #tpu.memory_space<vmem>>, %arg3: memref<48x1xf32, #tpu.memory_space<vmem>>, %arg4: memref<48x128xbf16, #tpu.memory_space<vmem>>) attributes {dimension_semantics = [#tpu.dimension_semantics<parallel>], iteration_bounds = array<i64: 1>, scalar_prefetch = 0 : i64, scratch_operands = 0 : i64, tpu.core_type = #tpu.core_type<tc>, window_params = [{pipeline_mode = #tpu.pipeline_mode<synchronous>, transform_indices = @transform_0, window_bounds = array<i64: 48, 216>}, {transform_indices = @transform_1, window_bounds = array<i64: 216, 128>}, {pipeline_mode = #tpu.pipeline_mode<synchronous>, transform_indices = @transform_2, window_bounds = array<i64: 48, 1>}, {transform_indices = @transform_3, window_bounds = array<i64: 48, 128>}]} {
    %c0 = arith.constant 0 : index
    %c0_0 = arith.constant 0 : index
    %0 = vector.load %arg1[%c0, %c0_0] : memref<48x216xbf16, #tpu.memory_space<vmem>>, vector<48x216xbf16>
    %c0_1 = arith.constant 0 : index
    %c0_2 = arith.constant 0 : index
    %1 = vector.load %arg2[%c0_1, %c0_2] : memref<216x128xbf16, #tpu.memory_space<vmem>>, vector<216x128xbf16>
    %cst = arith.constant dense<0.000000e+00> : vector<48x128xf32>
    %2 = tpu.matmul %0, %1, %cst {dimension_numbers = #tpu.dot_dimension_numbers<[1], [0], [0], [1], [0, 0, 1, 1], [], []>} : vector<48x216xbf16>, vector<216x128xbf16>, vector<48x128xf32> -> vector<48x128xf32>
    %c0_3 = arith.constant 0 : index
    %c0_4 = arith.constant 0 : index
    %3 = vector.load %arg3[%c0_3, %c0_4] : memref<48x1xf32, #tpu.memory_space<vmem>>, vector<48x1xf32>
    %4 = vector.broadcast %3 : vector<48x1xf32> to vector<48x128xf32>
    %5 = arith.addf %2, %4 : vector<48x128xf32>
    %cst_5 = arith.constant 0.000000e+00 : f32
    %6 = vector.broadcast %cst_5 : f32 to vector<48x128xf32>
    %7 = arith.maximumf %5, %6 : vector<48x128xf32>
    %8 = arith.truncf %7 : vector<48x128xf32> to vector<48x128xbf16>
    %c0_6 = arith.constant 0 : index
    %c0_7 = arith.constant 0 : index
    %9 = vector.load %arg4[%c0_6, %c0_7] : memref<48x128xbf16, #tpu.memory_space<vmem>>, vector<48x128xbf16>
    tpu.vector_store %arg4[%c0_6, %c0_7], %8 {strides = array<i32>} : memref<48x128xbf16, #tpu.memory_space<vmem>>, vector<48x128xbf16>,
    return
  }
  func.func @transform_0(%arg0: i32) -> (i32, i32) {
    %c0_i32 = arith.constant 0 : i32
    %c0_i32_0 = arith.constant 0 : i32
    %c0_i32_1 = arith.constant 0 : i32
    return %c0_i32, %c0_i32_0 : i32, i32
  }
  func.func @transform_1(%arg0: i32) -> (i32, i32) {
    %c0_i32 = arith.constant 0 : i32
    %c0_i32_0 = arith.constant 0 : i32
    return %c0_i32, %arg0 : i32, i32
  }
  func.func @transform_2(%arg0: i32) -> (i32, i32) {
    %c0_i32 = arith.constant 0 : i32
    %c0_i32_0 = arith.constant 0 : i32
    %c0_i32_1 = arith.constant 0 : i32
    return %c0_i32, %c0_i32_0 : i32, i32
  }
  func.func @transform_3(%arg0: i32) -> (i32, i32) {
    %c0_i32 = arith.constant 0 : i32
    %c0_i32_0 = arith.constant 0 : i32
    return %c0_i32, %arg0 : i32, i32
  }
}

module attributes {stable_mosaic.version = 11 : i64} {
  func.func @_matmul_bias_act_kernel(%arg0: i32, %arg1: memref<16x108xbf16, #tpu.memory_space<vmem>>, %arg2: memref<108x256xbf16, #tpu.memory_space<vmem>>, %arg3: memref<16x1xf32, #tpu.memory_space<vmem>>, %arg4: memref<16x256xbf16, #tpu.memory_space<vmem>>) attributes {dimension_semantics = [#tpu.dimension_semantics<parallel>], iteration_bounds = array<i64: 2>, scalar_prefetch = 0 : i64, scratch_operands = 0 : i64, tpu.core_type = #tpu.core_type<tc>, window_params = [{pipeline_mode = #tpu.pipeline_mode<synchronous>, transform_indices = @transform_0, window_bounds = array<i64: 16, 108>}, {transform_indices = @transform_1, window_bounds = array<i64: 108, 256>}, {pipeline_mode = #tpu.pipeline_mode<synchronous>, transform_indices = @transform_2, window_bounds = array<i64: 16, 1>}, {transform_indices = @transform_3, window_bounds = array<i64: 16, 256>}]} {
    %c0 = arith.constant 0 : index
    %c0_0 = arith.constant 0 : index
    %0 = vector.load %arg1[%c0, %c0_0] : memref<16x108xbf16, #tpu.memory_space<vmem>>, vector<16x108xbf16>
    %c0_1 = arith.constant 0 : index
    %c0_2 = arith.constant 0 : index
    %1 = vector.load %arg2[%c0_1, %c0_2] : memref<108x256xbf16, #tpu.memory_space<vmem>>, vector<108x256xbf16>
    %cst = arith.constant dense<0.000000e+00> : vector<16x256xf32>
    %2 = tpu.matmul %0, %1, %cst {dimension_numbers = #tpu.dot_dimension_numbers<[1], [0], [0], [1], [0, 0, 1, 1], [], []>} : vector<16x108xbf16>, vector<108x256xbf16>, vector<16x256xf32> -> vector<16x256xf32>
    %c0_3 = arith.constant 0 : index
    %c0_4 = arith.constant 0 : index
    %3 = vector.load %arg3[%c0_3, %c0_4] : memref<16x1xf32, #tpu.memory_space<vmem>>, vector<16x1xf32>
    %4 = vector.broadcast %3 : vector<16x1xf32> to vector<16x256xf32>
    %5 = arith.addf %2, %4 : vector<16x256xf32>
    %6 = math.tanh %5 : vector<16x256xf32>
    %7 = arith.truncf %6 : vector<16x256xf32> to vector<16x256xbf16>
    %c0_5 = arith.constant 0 : index
    %c0_6 = arith.constant 0 : index
    %8 = vector.load %arg4[%c0_5, %c0_6] : memref<16x256xbf16, #tpu.memory_space<vmem>>, vector<16x256xbf16>
    tpu.vector_store %arg4[%c0_5, %c0_6], %7 {strides = array<i32>} : memref<16x256xbf16, #tpu.memory_space<vmem>>, vector<16x256xbf16>,
    return
  }
  func.func @transform_0(%arg0: i32) -> (i32, i32) {
    %c0_i32 = arith.constant 0 : i32
    %c0_i32_0 = arith.constant 0 : i32
    %c0_i32_1 = arith.constant 0 : i32
    return %c0_i32, %c0_i32_0 : i32, i32
  }
  func.func @transform_1(%arg0: i32) -> (i32, i32) {
    %c0_i32 = arith.constant 0 : i32
    %c0_i32_0 = arith.constant 0 : i32
    return %c0_i32, %arg0 : i32, i32
  }
  func.func @transform_2(%arg0: i32) -> (i32, i32) {
    %c0_i32 = arith.constant 0 : i32
    %c0_i32_0 = arith.constant 0 : i32
    %c0_i32_1 = arith.constant 0 : i32
    return %c0_i32, %c0_i32_0 : i32, i32
  }
  func.func @transform_3(%arg0: i32) -> (i32, i32) {
    %c0_i32 = arith.constant 0 : i32
    %c0_i32_0 = arith.constant 0 : i32
    return %c0_i32, %arg0 : i32, i32
  }
}

</mosaic_0001>

<llo_original>
// kernel: conv_autoencoder_forward.6
$region0: #{conv_autoencoder_forward.6}
  #allocation0 [shape = 'u32[]', space=smem, size = 0x4, offset = 0x4, fixed_abs, tag = 'smem constant byte address 0x4 - core index']
  #allocation1 [shape = 'u32[144,128]{1,0:T(1,128)}', space=vmem, size = 0x12000, scoped, tag = 'internal scratch']
  %s0 = inlined_call_operand.vmem [shape: bf16[16,48], index: 0, kind: input, shape index: {}]
  %s1 = inlined_call_operand.vmem [shape: bf16[48,512], index: 1, kind: input, shape index: {}]
  %s2 = inlined_call_operand.vmem [shape: f32[16,1], index: 2, kind: input, shape index: {}]
  %s3 = inlined_call_operand.vmem [shape: bf16[16,512], index: 3, kind: output, shape index: {}]
  %s4 = sld [smem:[#allocation0]]
  $region117: #{conv_autoencoder_forward.6} parent=0
    _
  %s6 = ssub.s32 1, %s4
  %s7 = scalar_select 0, %s6, %s4
  $region1: #{conv_autoencoder_forward.6} parent=0
    #allocation2 [shape = 'u8[49152]{0}', space=vmem, size = 0xc000, scoped, tag = 'input window, operand 1']
    #allocation3 [shape = 'u8[16384]{0}', space=vmem, size = 0x4000, scoped, tag = 'output window, operand 0']
    loop: start=0, step=1, limit=4
    $region2: #{conv_autoencoder_forward.6} parent=1 // loop_pre_header
      _
    $region3: #{conv_autoencoder_forward.6} parent=1 // loop_header
      %s9 = sphi 0, %s13
      %p10 = scmp.ge.s32.totalorder %s9, 4
      %s17 = sphi 0, %s17
      %s19 = sphi 0, %s17
      %s20 = sphi 0, %s19
      %s34 = sphi 0, %s20
      %s40 = sphi 0, %s42
      %s43 = sphi 0, %s40
      %s44 = sphi 0, %s43
      %s60 = sphi 0, %s44
      %s64 = sphi 0, %s64
      %s66 = sphi 0, %s64
      %s67 = sphi 0, %s66
      %s81 = sphi 0, %s67
      %s87 = sphi 0, %s89
      %s90 = sphi 0, %s87
      %s91 = sphi 0, %s90
      %s107 = sphi 0, %s91
    $region4: #{conv_autoencoder_forward.6} parent=1 // loop_header_branch
      %12 = sbr.rel (%p10) target = $region8
    $region5: #{conv_autoencoder_forward.6} parent=1 // loop_body
      %s14 = ssub.s32 %s9, 1
      %s15 = ssub.s32 %s9, 2
      %s16 = sadd.s32 %s9, 1
      %s18 = sadd.s32 %s17, 1
      %p21 = scmp.eq.s32.totalorder %s9, 1
      %p22 = scmp.ne.s32.totalorder %s17, %s19
      %p23 = scmp.eq.s32.totalorder %s9, 0
      %p24 = por %p22, %p23
      %p25 = scmp.ne.s32.totalorder %s17, %s19
      %p26 = scmp.eq.s32.totalorder %s14, 1
      %p27 = por %p25, %p26
      %p28 = scmp.ne.s32.totalorder %s19, %s20
      %p29 = scmp.eq.s32.totalorder %s14, 0
      %p30 = por %p28, %p29
      %p31 = scmp.ne.s32.totalorder %s19, %s20
      %p32 = scmp.eq.s32.totalorder %s15, 1
      %p33 = por %p31, %p32
      %p35 = scmp.ne.s32.totalorder %s20, %s34
      %p36 = scmp.eq.s32.totalorder %s15, 0
      %p37 = por %p35, %p36
      %s38 = ssub.s32 %s9, %s16
      %p39 = scmp.eq.s32.totalorder %s38, 0
      %s41 = sadd.s32 %s40, 1
      %s42 = scalar_select %p39, %s40, %s41
      %p45 = pneg %p39
      %p46 = scmp.eq.s32.totalorder %s9, 1
      %p47 = por %p45, %p46
      %p48 = scmp.ne.s32.totalorder %s40, %s43
      %p49 = scmp.eq.s32.totalorder %s9, 0
      %p50 = por %p48, %p49
      %p51 = scmp.ne.s32.totalorder %s40, %s43
      %p52 = scmp.eq.s32.totalorder %s14, 1
      %p53 = por %p51, %p52
      %p54 = scmp.ne.s32.totalorder %s43, %s44
      %p55 = scmp.eq.s32.totalorder %s14, 0
      %p56 = por %p54, %p55
      %p57 = scmp.ne.s32.totalorder %s43, %s44
      %p58 = scmp.eq.s32.totalorder %s15, 1
      %p59 = por %p57, %p58
      %p61 = scmp.ne.s32.totalorder %s44, %s60
      %p62 = scmp.eq.s32.totalorder %s15, 0
      %p63 = por %p61, %p62
      %s65 = sadd.s32 %s64, 1
      %p68 = scmp.eq.s32.totalorder %s9, 1
      %p69 = scmp.ne.s32.totalorder %s64, %s66
      %p70 = scmp.eq.s32.totalorder %s9, 0
      %p71 = por %p69, %p70
      %p72 = scmp.ne.s32.totalorder %s64, %s66
      %p73 = scmp.eq.s32.totalorder %s14, 1
      %p74 = por %p72, %p73
      %p75 = scmp.ne.s32.totalorder %s66, %s67
      %p76 = scmp.eq.s32.totalorder %s14, 0
      %p77 = por %p75, %p76
      %p78 = scmp.ne.s32.totalorder %s66, %s67
      %p79 = scmp.eq.s32.totalorder %s15, 1
      %p80 = por %p78, %p79
      %p82 = scmp.ne.s32.totalorder %s67, %s81
      %p83 = scmp.eq.s32.totalorder %s15, 0
      %p84 = por %p82, %p83
      %s85 = ssub.s32 %s9, %s16
      %p86 = scmp.eq.s32.totalorder %s85, 0
      %s88 = sadd.s32 %s87, 1
      %s89 = scalar_select %p86, %s87, %s88
      %p92 = pneg %p86
      %p93 = scmp.eq.s32.totalorder %s9, 1
      %p94 = por %p92, %p93
      %p95 = scmp.ne.s32.totalorder %s87, %s90
      %p96 = scmp.eq.s32.totalorder %s9, 0
      %p97 = por %p95, %p96
      %p98 = scmp.ne.s32.totalorder %s87, %s90
      %p99 = scmp.eq.s32.totalorder %s14, 1
      %p100 = por %p98, %p99
      %p101 = scmp.ne.s32.totalorder %s90, %s91
      %p102 = scmp.eq.s32.totalorder %s14, 0
      %p103 = por %p101, %p102
      %p104 = scmp.ne.s32.totalorder %s90, %s91
      %p105 = scmp.eq.s32.totalorder %s15, 1
      %p106 = por %p104, %p105
      %p108 = scmp.ne.s32.totalorder %s91, %s107
      %p109 = scmp.eq.s32.totalorder %s15, 0
      %p110 = por %p108, %p109
      %p111 = scmp.le.s32.totalorder 1, %s9
      %p112 = scmp.lt.s32.totalorder %s9, 3
      %p113 = pnand %p111, %p112
      %p114 = pneg %p113
      // Predicated region
      $region9: #{conv_autoencoder_forward.6} parent=5 // pred_check
        _
      $region10: #{conv_autoencoder_forward.6} parent=5 // pred_check_branch
        %116 = sbr.rel (%p113) target = $region12
      $region11: #{conv_autoencoder_forward.6} parent=5 // pred_region
        %s117 = ssub.s32 %s9, 1
        // Predicated region
        $region13: #{conv_autoencoder_forward.6} parent=11 // pred_check
          %p118 = pneg %p30
        $region14: #{conv_autoencoder_forward.6} parent=11 // pred_check_branch
          %120 = sbr.rel (%p118) target = $region16
        $region15: #{conv_autoencoder_forward.6} parent=11 // pred_region
          _
        $region16: #{conv_autoencoder_forward.6} parent=11 // pred_fallthru
          _
        // Predicated region
        $region17: #{conv_autoencoder_forward.6} parent=11 // pred_check
          %p121 = pneg %p77
        $region18: #{conv_autoencoder_forward.6} parent=11 // pred_check_branch
          %123 = sbr.rel (%p121) target = $region20
        $region19: #{conv_autoencoder_forward.6} parent=11 // pred_region
          _
        $region20: #{conv_autoencoder_forward.6} parent=11 // pred_fallthru
          _
      $region12: #{conv_autoencoder_forward.6} parent=5 // pred_fallthru
        _
      %p124 = scmp.lt.s32.totalorder %s9, 2
      // Predicated region
      $region21: #{conv_autoencoder_forward.6} parent=5 // pred_check
        %p125 = pneg %p124
      $region22: #{conv_autoencoder_forward.6} parent=5 // pred_check_branch
        %127 = sbr.rel (%p125) target = $region24
      $region23: #{conv_autoencoder_forward.6} parent=5 // pred_region
        // Predicated region
        $region25: #{conv_autoencoder_forward.6} parent=23 // pred_check
          %p128 = pneg %p50
        $region26: #{conv_autoencoder_forward.6} parent=23 // pred_check_branch
          %130 = sbr.rel (%p128) target = $region28
        $region27: #{conv_autoencoder_forward.6} parent=23 // pred_region
          %s131 = sand.u32 %s40, 1
          %s132 = sand.u32 %s40, 1
          %s133 = smul.addr %s132, 48
          %s134 = scalar_lea.vmem [#allocation2], %s133
          %s135 = smul.u32 2, %s9
          %s136 = smul.addr %s135, 4
          %s137 = scalar_lea.vmem %s1, %s136
          // Predicated region
          $region29: #{conv_autoencoder_forward.6} parent=27 // pred_check
            _
          $region30: #{conv_autoencoder_forward.6} parent=27 // pred_check_branch
            %139 = sbr.rel (0) target = $region32
          $region31: #{conv_autoencoder_forward.6} parent=27 // pred_region
            // Predicated region
            $region33: #{conv_autoencoder_forward.6} parent=31 // pred_check
              _
            $region34: #{conv_autoencoder_forward.6} parent=31 // pred_check_branch
              %141 = sbr.rel (0) target = $region36
            $region35: #{conv_autoencoder_forward.6} parent=31 // pred_region
              // Predicated region
              $region48: #{conv_autoencoder_forward.6} parent=35 // pred_check
                _
              $region49: #{conv_autoencoder_forward.6} parent=35 // pred_check_branch
                %166 = sbr.rel (0) target = $region51
              $region50: #{conv_autoencoder_forward.6} parent=35 // pred_region
                loop: start=0, step=1, limit=1
                $region52: #{conv_autoencoder_forward.6} parent=50 // loop_pre_header
                  _
                $region53: #{conv_autoencoder_forward.6} parent=50 // loop_header
                  %s168 = sphi 0, %s172
                  %p169 = scmp.ge.s32.totalorder %s168, 1
                  %s173 = sphi %s137, %s137
                  %s174 = sphi %s134, %s134
                $region54: #{conv_autoencoder_forward.6} parent=50 // loop_header_branch
                  %171 = sbr.rel (%p169) target = $region58
                $region55: #{conv_autoencoder_forward.6} parent=50 // loop_body
                  %v175 = vld [vmem:[%s173] sm:$0xff]
                  %176 = vst [vmem:[%s174] sm:$0xff] %v175
                  %v177 = vld [vmem:[%s173 + $0x10] sm:$0xff]
                  %178 = vst [vmem:[%s174 + $0x8] sm:$0xff] %v177
                  %v179 = vld [vmem:[%s173 + $0x20] sm:$0xff]
                  %180 = vst [vmem:[%s174 + $0x10] sm:$0xff] %v179
                  %v181 = vld [vmem:[%s173 + $0x30] sm:$0xff]
                  %182 = vst [vmem:[%s174 + $0x18] sm:$0xff] %v181
                  %v183 = vld [vmem:[%s173 + $0x40] sm:$0xff]
                  %184 = vst [vmem:[%s174 + $0x20] sm:$0xff] %v183
                  %v185 = vld [vmem:[%s173 + $0x50] sm:$0xff]
                  %186 = vst [vmem:[%s174 + $0x28] sm:$0xff] %v185
                $region56: #{conv_autoencoder_forward.6} parent=50 // loop_footer
                  %s172 = sadd.s32 1, %s168
                $region57: #{conv_autoencoder_forward.6} parent=50 // loop_footer_branch
                  %167 = sbr.rel target = $region53
                $region58: #{conv_autoencoder_forward.6} parent=50 // loop_exit
                  _
              $region51: #{conv_autoencoder_forward.6} parent=35 // pred_fallthru
                _
              // Predicated region
              $region59: #{conv_autoencoder_forward.6} parent=35 // pred_check
                _
              $region60: #{conv_autoencoder_forward.6} parent=35 // pred_check_branch
                %188 = sbr.rel target = $region62
              $region61: #{conv_autoencoder_forward.6} parent=35 // pred_region
                _
              $region62: #{conv_autoencoder_forward.6} parent=35 // pred_fallthru
                _
            $region36: #{conv_autoencoder_forward.6} parent=31 // pred_fallthru
              _
            // Predicated region
            $region37: #{conv_autoencoder_forward.6} parent=31 // pred_check
              _
            $region38: #{conv_autoencoder_forward.6} parent=31 // pred_check_branch
              %143 = sbr.rel target = $region40
            $region39: #{conv_autoencoder_forward.6} parent=31 // pred_region
              loop: start=0, step=1, limit=1
              $region41: #{conv_autoencoder_forward.6} parent=39 // loop_pre_header
                _
              $region42: #{conv_autoencoder_forward.6} parent=39 // loop_header
                %s146 = sphi 0, %s150
                %p147 = scmp.ge.s32.totalorder %s146, 1
                %s151 = sphi %s137, %s137
                %s152 = sphi %s134, %s134
              $region43: #{conv_autoencoder_forward.6} parent=39 // loop_header_branch
                %149 = sbr.rel (%p147) target = $region47
              $region44: #{conv_autoencoder_forward.6} parent=39 // loop_body
                %v153 = vld [vmem:[%s151] sm:$0xff]
                %154 = vst [vmem:[%s152] sm:$0xff] %v153
                %v155 = vld [vmem:[%s151 + $0x10] sm:$0xff]
                %156 = vst [vmem:[%s152 + $0x8] sm:$0xff] %v155
                %v157 = vld [vmem:[%s151 + $0x20] sm:$0xff]
                %158 = vst [vmem:[%s152 + $0x10] sm:$0xff] %v157
                %v159 = vld [vmem:[%s151 + $0x30] sm:$0xff]
                %160 = vst [vmem:[%s152 + $0x18] sm:$0xff] %v159
                %v161 = vld [vmem:[%s151 + $0x40] sm:$0xff]
                %162 = vst [vmem:[%s152 + $0x20] sm:$0xff] %v161
                %v163 = vld [vmem:[%s151 + $0x50] sm:$0xff]
                %164 = vst [vmem:[%s152 + $0x28] sm:$0xff] %v163
              $region45: #{conv_autoencoder_forward.6} parent=39 // loop_footer
                %s150 = sadd.s32 1, %s146
              $region46: #{conv_autoencoder_forward.6} parent=39 // loop_footer_branch
                %145 = sbr.rel target = $region42
              $region47: #{conv_autoencoder_forward.6} parent=39 // loop_exit
                _
            $region40: #{conv_autoencoder_forward.6} parent=31 // pred_fallthru
              _
          $region32: #{conv_autoencoder_forward.6} parent=27 // pred_fallthru
            _
          %189 = vnop
        $region28: #{conv_autoencoder_forward.6} parent=23 // pred_fallthru
          _
      $region24: #{conv_autoencoder_forward.6} parent=5 // pred_fallthru
        _
      %p190 = scmp.le.s32.totalorder 1, %s9
      %p191 = scmp.lt.s32.totalorder %s9, 3
      %p192 = pnand %p190, %p191
      %p193 = pneg %p192
      // Predicated region
      $region63: #{conv_autoencoder_forward.6} parent=5 // pred_check
        _
      $region64: #{conv_autoencoder_forward.6} parent=5 // pred_check_branch
        %195 = sbr.rel (%p192) target = $region66
      $region65: #{conv_autoencoder_forward.6} parent=5 // pred_region
        %s196 = ssub.s32 %s9, 1
        %s197 = sand.u32 %s43, 1
        %s198 = sand.u32 %s43, 1
        %s199 = smul.addr %s198, 48
        %s200 = scalar_lea.vmem [#allocation2], %s199
        // Predicated region
        $region67: #{conv_autoencoder_forward.6} parent=65 // pred_check
          %p201 = pneg %p56
        $region68: #{conv_autoencoder_forward.6} parent=65 // pred_check_branch
          %203 = sbr.rel (%p201) target = $region70
        $region69: #{conv_autoencoder_forward.6} parent=65 // pred_region
          _
        $region70: #{conv_autoencoder_forward.6} parent=65 // pred_fallthru
          _
        %p204 = pneg %p30
        %p205 = pneg %p27
        %s206 = sand.u32 %s43, 1
        %s207 = sand.u32 %s43, 1
        %s208 = smul.addr %s207, 48
        %s209 = scalar_lea.vmem [#allocation2], %s208
        %p210 = pneg %p56
        %p211 = pneg %p53
        %p212 = pneg %p77
        %p213 = pneg %p74
        %p214 = pneg %p103
        %p215 = pneg %p100
        %s216 = sand.u32 %s90, 1
        %s217 = sand.u32 %s90, 1
        %s218 = smul.addr %s217, 16
        %s219 = scalar_lea.vmem [#allocation3], %s218
        %s220 = smul.u32 2, %s14
        %s221 = smul.u32 2, %s14
        %v223 = vld [vmem:[%s0] sm:$0xf]
        %v224 = vld [vmem:[%s0 + $0x4] sm:$0xf]
        %v225 = vld [vmem:[%s200] sm:$0xff]
        %v226 = vld [vmem:[%s200 + $0x8] sm:$0xff]
        %v227 = vld [vmem:[%s200 + $0x10] sm:$0xff]
        %v228 = vld [vmem:[%s200 + $0x18] sm:$0xff]
        %v229 = vld [vmem:[%s200 + $0x20] sm:$0xff]
        %v230 = vld [vmem:[%s200 + $0x28] sm:$0xff]
        %v231 = vld [vmem:[%s2] sm:$0xff]
        %v232 = vld [vmem:[%s2 + $0x8] sm:$0xff]
        %234 = vset.pattern.permute.xlu0 0
        %235 = vperm.xlu0 %234, %v231
        %v236 = vpop.permute.xlu0 %235
        %239 = vset.pattern.permute.xlu0 0
        %240 = vperm.xlu0 %239, %v232
        %v241 = vpop.permute.xlu0 %240
        %v245 = vunpack.c.l.b16 %v223
        %v246 = vunpack.c.l.b16 %v224
        %v247 = vpack.c.b16 %v246, %v245
        %v254 = vunpack.c.l.b16 %v225
        %v255 = vunpack.c.h.b16 %v225
        %v256 = vunpack.c.l.b16 %v226
        %v257 = vunpack.c.h.b16 %v226
        %v258 = vunpack.c.l.b16 %v227
        %v259 = vunpack.c.h.b16 %v227
        %v260 = vunpack.c.l.b16 %v228
        %v261 = vunpack.c.h.b16 %v228
        %v262 = vunpack.c.l.b16 %v229
        %v263 = vunpack.c.h.b16 %v229
        %v264 = vunpack.c.l.b16 %v230
        %v265 = vunpack.c.h.b16 %v230
        %v266 = vpack.c.b16 %v256, %v254
        %v267 = vpack.c.b16 %v257, %v255
        %v268 = vpack.c.b16 %v260, %v258
        %v269 = vpack.c.b16 %v261, %v259
        %v270 = vpack.c.b16 %v264, %v262
        %v271 = vpack.c.b16 %v265, %v263
        %vm278 = vcmask 392192
        %v280 = vsel %vm278, %v247, 0
        %282 = vmatprep.subr.bf16.mxu0 %v267
        %283 = vmatpush1.bf16.msra.mxu0 %v266
        %284 = vmatprep.subr.bf16.mxu0 %v269
        %285 = vmatpush1.bf16.msra.mxu0 %v268
        %286 = vmatprep.subr.bf16.mxu0 %v271
        %287 = vmatpush1.bf16.msra.mxu0 %v270
        %288 = vmatprep.subr.bf16.mxu0 0
        %289 = vmatpush1.bf16.msra.mxu0 0
        %290 = vmatprep.subr.bf16.mxu0 0
        %291 = vmatpush1.bf16.msra.mxu0 0
        %292 = vmatprep.subr.bf16.mxu0 0
        %293 = vmatpush1.bf16.msra.mxu0 0
        %294 = vmatprep.subr.bf16.mxu0 0
        %295 = vmatpush1.bf16.msra.mxu0 0
        %296 = vmatprep.subr.bf16.mxu0 0
        %297 = vmatpush1.bf16.msra.mxu0 0
        %298 = vmatprep.subr.bf16.mxu0 0
        %299 = vmatpush1.bf16.msra.mxu0 0
        %300 = vmatprep.subr.bf16.mxu0 0
        %301 = vmatpush1.bf16.msra.mxu0 0
        %302 = vmatprep.subr.bf16.mxu0 0
        %303 = vmatpush1.bf16.msra.mxu0 0
        %304 = vmatprep.subr.bf16.mxu0 0
        %305 = vmatpush1.bf16.msra.mxu0 0
        %306 = vmatprep.subr.bf16.mxu0 0
        %307 = vmatpush1.bf16.msra.mxu0 0
        %308 = vmatprep.subr.bf16.mxu0 0
        %309 = vmatpush1.bf16.msra.mxu0 0
        %310 = vmatprep.subr.bf16.mxu0 0
        %311 = vmatpush1.bf16.msra.mxu0 0
        %312 = vmatprep.subr.bf16.mxu0 0
        %313 = vmatpush1.bf16.msra.mxu0 0
        %314 = vmatprep.mubr.bf16.mxu0 0
        %315 = vmatmul.mubr.bf16.gmra.mrb[0].mxu0 %v280
        %v316 = vpop.f32.mrb[0].mxu0
        %v317 = vadd.f32 %v236, %v316
        %v318 = vpop.f32.mrb[0].mxu0
        %v319 = vadd.f32 %v236, %v318
        %v320 = vpop.f32.mrb[0].mxu0
        %v321 = vadd.f32 %v241, %v320
        %v322 = vpop.f32.mrb[0].mxu0
        %v323 = vadd.f32 %v241, %v322
        %324 = vdwg.mxu0
        %v325 = vmax.f32 %v317, 0.0
        %v326 = vmax.f32 %v319, 0.0
        %v327 = vmax.f32 %v321, 0.0
        %v328 = vmax.f32 %v323, 0.0
        %v329 = vpack.c.bf16 %v327, %v325
        %v330 = vpack.c.bf16 %v328, %v326
        %v333 = vunpack.c.l.b16 %v329
        %v334 = vunpack.c.l.b16 %v330
        %v335 = vunpack.c.h.b16 %v329
        %v336 = vunpack.c.h.b16 %v330
        %v337 = vpack.c.b16 %v334, %v333
        %v338 = vpack.c.b16 %v336, %v335
        %341 = vst [vmem:[%s219] sm:$0xff] %v337
        %342 = vst [vmem:[%s219 + $0x8] sm:$0xff] %v338
        %s343 = sand.u32 %s90, 1
        %s344 = sand.u32 %s90, 1
        %s345 = smul.addr %s344, 16
        %s346 = scalar_lea.vmem [#allocation3], %s345
        // Predicated region
        $region71: #{conv_autoencoder_forward.6} parent=65 // pred_check
          %p347 = pneg %p100
        $region72: #{conv_autoencoder_forward.6} parent=65 // pred_check_branch
          %349 = sbr.rel (%p347) target = $region74
        $region73: #{conv_autoencoder_forward.6} parent=65 // pred_region
          %s350 = smul.u32 2, %s14
          %s351 = smul.addr %s350, 4
          %s352 = scalar_lea.vmem %s3, %s351
          // Predicated region
          $region75: #{conv_autoencoder_forward.6} parent=73 // pred_check
            _
          $region76: #{conv_autoencoder_forward.6} parent=73 // pred_check_branch
            %354 = sbr.rel (0) target = $region78
          $region77: #{conv_autoencoder_forward.6} parent=73 // pred_region
            // Predicated region
            $region79: #{conv_autoencoder_forward.6} parent=77 // pred_check
              _
            $region80: #{conv_autoencoder_forward.6} parent=77 // pred_check_branch
              %356 = sbr.rel (0) target = $region82
            $region81: #{conv_autoencoder_forward.6} parent=77 // pred_region
              // Predicated region
              $region94: #{conv_autoencoder_forward.6} parent=81 // pred_check
                _
              $region95: #{conv_autoencoder_forward.6} parent=81 // pred_check_branch
                %373 = sbr.rel (0) target = $region97
              $region96: #{conv_autoencoder_forward.6} parent=81 // pred_region
                loop: start=0, step=1, limit=1
                $region98: #{conv_autoencoder_forward.6} parent=96 // loop_pre_header
                  _
                $region99: #{conv_autoencoder_forward.6} parent=96 // loop_header
                  %s375 = sphi 0, %s379
                  %p376 = scmp.ge.s32.totalorder %s375, 1
                  %s380 = sphi %s346, %s346
                  %s381 = sphi %s352, %s352
                $region100: #{conv_autoencoder_forward.6} parent=96 // loop_header_branch
                  %378 = sbr.rel (%p376) target = $region104
                $region101: #{conv_autoencoder_forward.6} parent=96 // loop_body
                  %v382 = vld [vmem:[%s380] sm:$0xff]
                  %383 = vst [vmem:[%s381] sm:$0xff] %v382
                  %v384 = vld [vmem:[%s380 + $0x8] sm:$0xff]
                  %385 = vst [vmem:[%s381 + $0x10] sm:$0xff] %v384
                $region102: #{conv_autoencoder_forward.6} parent=96 // loop_footer
                  %s379 = sadd.s32 1, %s375
                $region103: #{conv_autoencoder_forward.6} parent=96 // loop_footer_branch
                  %374 = sbr.rel target = $region99
                $region104: #{conv_autoencoder_forward.6} parent=96 // loop_exit
                  _
              $region97: #{conv_autoencoder_forward.6} parent=81 // pred_fallthru
                _
              // Predicated region
              $region105: #{conv_autoencoder_forward.6} parent=81 // pred_check
                _
              $region106: #{conv_autoencoder_forward.6} parent=81 // pred_check_branch
                %387 = sbr.rel target = $region108
              $region107: #{conv_autoencoder_forward.6} parent=81 // pred_region
                _
              $region108: #{conv_autoencoder_forward.6} parent=81 // pred_fallthru
                _
            $region82: #{conv_autoencoder_forward.6} parent=77 // pred_fallthru
              _
            // Predicated region
            $region83: #{conv_autoencoder_forward.6} parent=77 // pred_check
              _
            $region84: #{conv_autoencoder_forward.6} parent=77 // pred_check_branch
              %358 = sbr.rel target = $region86
            $region85: #{conv_autoencoder_forward.6} parent=77 // pred_region
              loop: start=0, step=1, limit=1
              $region87: #{conv_autoencoder_forward.6} parent=85 // loop_pre_header
                _
              $region88: #{conv_autoencoder_forward.6} parent=85 // loop_header
                %s361 = sphi 0, %s365
                %p362 = scmp.ge.s32.totalorder %s361, 1
                %s366 = sphi %s346, %s346
                %s367 = sphi %s352, %s352
              $region89: #{conv_autoencoder_forward.6} parent=85 // loop_header_branch
                %364 = sbr.rel (%p362) target = $region93
              $region90: #{conv_autoencoder_forward.6} parent=85 // loop_body
                %v368 = vld [vmem:[%s366] sm:$0xff]
                %369 = vst [vmem:[%s367] sm:$0xff] %v368
                %v370 = vld [vmem:[%s366 + $0x8] sm:$0xff]
                %371 = vst [vmem:[%s367 + $0x10] sm:$0xff] %v370
              $region91: #{conv_autoencoder_forward.6} parent=85 // loop_footer
                %s365 = sadd.s32 1, %s361
              $region92: #{conv_autoencoder_forward.6} parent=85 // loop_footer_branch
                %360 = sbr.rel target = $region88
              $region93: #{conv_autoencoder_forward.6} parent=85 // loop_exit
                _
            $region86: #{conv_autoencoder_forward.6} parent=77 // pred_fallthru
              _
          $region78: #{conv_autoencoder_forward.6} parent=73 // pred_fallthru
            _
          %388 = vnop
        $region74: #{conv_autoencoder_forward.6} parent=65 // pred_fallthru
          _
      $region66: #{conv_autoencoder_forward.6} parent=5 // pred_fallthru
        _
      %p389 = scmp.le.s32.totalorder 2, %s9
      // Predicated region
      $region109: #{conv_autoencoder_forward.6} parent=5 // pred_check
        %p390 = pneg %p389
      $region110: #{conv_autoencoder_forward.6} parent=5 // pred_check_branch
        %392 = sbr.rel (%p390) target = $region112
      $region111: #{conv_autoencoder_forward.6} parent=5 // pred_region
        %s393 = ssub.s32 %s9, 2
        // Predicated region
        $region113: #{conv_autoencoder_forward.6} parent=111 // pred_check
          %p394 = pneg %p106
        $region114: #{conv_autoencoder_forward.6} parent=111 // pred_check_branch
          %396 = sbr.rel (%p394) target = $region116
        $region115: #{conv_autoencoder_forward.6} parent=111 // pred_region
          %s397 = sand.u32 %s91, 1
          %s398 = sand.u32 %s91, 1
          %s399 = smul.addr %s398, 16
          %s400 = scalar_lea.vmem [#allocation3], %s399
        $region116: #{conv_autoencoder_forward.6} parent=111 // pred_fallthru
          _
      $region112: #{conv_autoencoder_forward.6} parent=5 // pred_fallthru
        _
    $region6: #{conv_autoencoder_forward.6} parent=1 // loop_footer
      %s13 = sadd.s32 1, %s9
    $region7: #{conv_autoencoder_forward.6} parent=1 // loop_footer_branch
      %8 = sbr.rel target = $region3
    $region8: #{conv_autoencoder_forward.6} parent=1 // loop_exit
      _

// kernel: conv_autoencoder_forward.7
$region0: #{conv_autoencoder_forward.7}
  #allocation0 [shape = 'u32[]', space=smem, size = 0x4, offset = 0x4, fixed_abs, tag = 'smem constant byte address 0x4 - core index']
  #allocation1 [shape = 'u32[144,128]{1,0:T(1,128)}', space=vmem, size = 0x12000, scoped, tag = 'internal scratch']
  %s0 = inlined_call_operand.vmem [shape: bf16[24,192], index: 0, kind: input, shape index: {}]
  %s1 = inlined_call_operand.vmem [shape: bf16[192,128], index: 1, kind: input, shape index: {}]
  %s2 = inlined_call_operand.vmem [shape: f32[24,1], index: 2, kind: input, shape index: {}]
  %s3 = inlined_call_operand.vmem [shape: bf16[24,128], index: 3, kind: output, shape index: {}]
  %s4 = sld [smem:[#allocation0]]
  $region22: #{conv_autoencoder_forward.7} parent=0
    _
  %s6 = ssub.s32 1, %s4
  %s7 = scalar_select 0, %s6, %s4
  // Predicated region
  $region2: #{conv_autoencoder_forward.7} parent=0 // pred_check
    _
  $region3: #{conv_autoencoder_forward.7} parent=0 // pred_check_branch
    %9 = sbr.rel (0) target = $region5
  $region4: #{conv_autoencoder_forward.7} parent=0 // pred_region
    _
  $region5: #{conv_autoencoder_forward.7} parent=0 // pred_fallthru
    _
  // Predicated region
  $region6: #{conv_autoencoder_forward.7} parent=0 // pred_check
    _
  $region7: #{conv_autoencoder_forward.7} parent=0 // pred_check_branch
    %11 = sbr.rel (0) target = $region9
  $region8: #{conv_autoencoder_forward.7} parent=0 // pred_region
    _
  $region9: #{conv_autoencoder_forward.7} parent=0 // pred_fallthru
    _
  // Predicated region
  $region10: #{conv_autoencoder_forward.7} parent=0 // pred_check
    _
  $region11: #{conv_autoencoder_forward.7} parent=0 // pred_check_branch
    %13 = sbr.rel (0) target = $region13
  $region12: #{conv_autoencoder_forward.7} parent=0 // pred_region
    _
  $region13: #{conv_autoencoder_forward.7} parent=0 // pred_fallthru
    _
  %v15 = vld [vmem:[%s0] sm:$0xff]
  %v16 = vld [vmem:[%s0 + $0x8] sm:$0xff]
  %v17 = vld [vmem:[%s0 + $0x10] sm:$0xff]
  %v18 = vld [vmem:[%s1] sm:$0xf]
  %v19 = vld [vmem:[%s1 + $0x4] sm:$0xf]
  %v20 = vld [vmem:[%s1 + $0x8] sm:$0xf]
  %v21 = vld [vmem:[%s1 + $0xc] sm:$0xf]
  %v22 = vld [vmem:[%s1 + $0x10] sm:$0xf]
  %v23 = vld [vmem:[%s1 + $0x14] sm:$0xf]
  %v24 = vld [vmem:[%s1 + $0x18] sm:$0xf]
  %v25 = vld [vmem:[%s1 + $0x1c] sm:$0xf]
  %v26 = vld [vmem:[%s1 + $0x20] sm:$0xf]
  %v27 = vld [vmem:[%s1 + $0x24] sm:$0xf]
  %v28 = vld [vmem:[%s1 + $0x28] sm:$0xf]
  %v29 = vld [vmem:[%s1 + $0x2c] sm:$0xf]
  %v30 = vld [vmem:[%s1 + $0x30] sm:$0xf]
  %v31 = vld [vmem:[%s1 + $0x34] sm:$0xf]
  %v32 = vld [vmem:[%s1 + $0x38] sm:$0xf]
  %v33 = vld [vmem:[%s1 + $0x3c] sm:$0xf]
  %v34 = vld [vmem:[%s1 + $0x40] sm:$0xf]
  %v35 = vld [vmem:[%s1 + $0x44] sm:$0xf]
  %v36 = vld [vmem:[%s1 + $0x48] sm:$0xf]
  %v37 = vld [vmem:[%s1 + $0x4c] sm:$0xf]
  %v38 = vld [vmem:[%s1 + $0x50] sm:$0xf]
  %v39 = vld [vmem:[%s1 + $0x54] sm:$0xf]
  %v40 = vld [vmem:[%s1 + $0x58] sm:$0xf]
  %v41 = vld [vmem:[%s1 + $0x5c] sm:$0xf]
  %v42 = vld [vmem:[%s2] sm:$0xff]
  %v43 = vld [vmem:[%s2 + $0x8] sm:$0xff]
  %v44 = vld [vmem:[%s2 + $0x10] sm:$0xff]
  %46 = vset.pattern.permute.xlu0 0
  %47 = vperm.xlu0 %46, %v42
  %v48 = vpop.permute.xlu0 %47
  %51 = vset.pattern.permute.xlu0 0
  %52 = vperm.xlu0 %51, %v43
  %v53 = vpop.permute.xlu0 %52
  %56 = vset.pattern.permute.xlu0 0
  %57 = vperm.xlu0 %56, %v44
  %v58 = vpop.permute.xlu0 %57
  %v63 = vunpack.c.l.b16 %v15
  %v64 = vunpack.c.h.b16 %v15
  %v65 = vunpack.c.l.b16 %v16
  %v66 = vunpack.c.h.b16 %v16
  %v67 = vunpack.c.l.b16 %v17
  %v68 = vunpack.c.h.b16 %v17
  %v69 = vpack.c.b16 %v65, %v63
  %v70 = vpack.c.b16 %v66, %v64
  %v71 = vpack.c.b16 %v67, %v67
  %v72 = vpack.c.b16 %v68, %v68
  %v99 = vunpack.c.l.b16 %v18
  %v100 = vunpack.c.l.b16 %v19
  %v101 = vunpack.c.l.b16 %v20
  %v102 = vunpack.c.l.b16 %v21
  %v103 = vunpack.c.l.b16 %v22
  %v104 = vunpack.c.l.b16 %v23
  %v105 = vunpack.c.l.b16 %v24
  %v106 = vunpack.c.l.b16 %v25
  %v107 = vunpack.c.l.b16 %v26
  %v108 = vunpack.c.l.b16 %v27
  %v109 = vunpack.c.l.b16 %v28
  %v110 = vunpack.c.l.b16 %v29
  %v111 = vunpack.c.l.b16 %v30
  %v112 = vunpack.c.l.b16 %v31
  %v113 = vunpack.c.l.b16 %v32
  %v114 = vunpack.c.l.b16 %v33
  %v115 = vunpack.c.l.b16 %v34
  %v116 = vunpack.c.l.b16 %v35
  %v117 = vunpack.c.l.b16 %v36
  %v118 = vunpack.c.l.b16 %v37
  %v119 = vunpack.c.l.b16 %v38
  %v120 = vunpack.c.l.b16 %v39
  %v121 = vunpack.c.l.b16 %v40
  %v122 = vunpack.c.l.b16 %v41
  %v123 = vpack.c.b16 %v100, %v99
  %v124 = vpack.c.b16 %v102, %v101
  %v125 = vpack.c.b16 %v104, %v103
  %v126 = vpack.c.b16 %v106, %v105
  %v127 = vpack.c.b16 %v108, %v107
  %v128 = vpack.c.b16 %v110, %v109
  %v129 = vpack.c.b16 %v112, %v111
  %v130 = vpack.c.b16 %v114, %v113
  %v131 = vpack.c.b16 %v116, %v115
  %v132 = vpack.c.b16 %v118, %v117
  %v133 = vpack.c.b16 %v120, %v119
  %v134 = vpack.c.b16 %v122, %v121
  %vm147 = vcmask 523264
  %v149 = vsel %vm147, %v70, 0
  %v152 = vsel %vm147, %v72, 0
  %154 = vmatprep.subr.bf16.mxu0 0
  %155 = vmatpush1.bf16.msra.mxu0 %v123
  %156 = vmatprep.subr.bf16.mxu0 0
  %157 = vmatpush1.bf16.msra.mxu0 %v124
  %158 = vmatprep.subr.bf16.mxu0 0
  %159 = vmatpush1.bf16.msra.mxu0 %v125
  %160 = vmatprep.subr.bf16.mxu0 0
  %161 = vmatpush1.bf16.msra.mxu0 %v126
  %162 = vmatprep.subr.bf16.mxu0 0
  %163 = vmatpush1.bf16.msra.mxu0 %v127
  %164 = vmatprep.subr.bf16.mxu0 0
  %165 = vmatpush1.bf16.msra.mxu0 %v128
  %166 = vmatprep.subr.bf16.mxu0 0
  %167 = vmatpush1.bf16.msra.mxu0 %v129
  %168 = vmatprep.subr.bf16.mxu0 0
  %169 = vmatpush1.bf16.msra.mxu0 %v130
  %170 = vmatprep.subr.bf16.mxu0 0
  %171 = vmatpush1.bf16.msra.mxu0 %v131
  %172 = vmatprep.subr.bf16.mxu0 0
  %173 = vmatpush1.bf16.msra.mxu0 %v132
  %174 = vmatprep.subr.bf16.mxu0 0
  %175 = vmatpush1.bf16.msra.mxu0 %v133
  %176 = vmatprep.subr.bf16.mxu0 0
  %177 = vmatpush1.bf16.msra.mxu0 %v134
  %178 = vmatprep.subr.bf16.mxu0 0
  %179 = vmatpush1.bf16.msra.mxu0 0
  %180 = vmatprep.subr.bf16.mxu0 0
  %181 = vmatpush1.bf16.msra.mxu0 0
  %182 = vmatprep.subr.bf16.mxu0 0
  %183 = vmatpush1.bf16.msra.mxu0 0
  %184 = vmatprep.subr.bf16.mxu0 0
  %185 = vmatpush1.bf16.msra.mxu0 0
  %186 = vmatprep.mubr.bf16.mxu0 %v149
  %187 = vmatmul.mubr.bf16.gmra.mrb[0].mxu0 %v69
  %v188 = vpop.f32.mrb[0].mxu0
  %v189 = vadd.f32 %v48, %v188
  %v190 = vpop.f32.mrb[0].mxu0
  %v191 = vpop.f32.mrb[0].mxu0
  %v192 = vadd.f32 %v53, %v191
  %v193 = vpop.f32.mrb[0].mxu0
  %194 = vmatprep.mubr.bf16.mxu0 %v152
  %195 = vmatmul.mubr.bf16.gmra.mrb[0].mxu0 %v71
  %v196 = vpop.f32.mrb[0].mxu0
  %v197 = vadd.f32 %v58, %v196
  %v198 = vpop.f32.mrb[0].mxu0
  %v199 = vpop.f32.mrb[0].mxu0
  %v200 = vpop.f32.mrb[0].mxu0
  %201 = vdwg.mxu0
  %v202 = vmax.f32 %v189, 0.0
  %v203 = vmax.f32 %v192, 0.0
  %v204 = vmax.f32 %v197, 0.0
  %v205 = vpack.c.bf16 %v203, %v202
  %v206 = vpack.c.bf16 %v204, %v204
  %v209 = vunpack.c.l.b16 %v205
  %v210 = vunpack.c.h.b16 %v205
  %v211 = vunpack.c.l.b16 %v206
  %v212 = vpack.c.b16 %v209, %v209
  %v213 = vpack.c.b16 %v210, %v210
  %v214 = vpack.c.b16 %v211, %v211
  %218 = vst [vmem:[%s3] sm:$0xf] %v212
  %219 = vst [vmem:[%s3 + $0x4] sm:$0xf] %v213
  %220 = vst [vmem:[%s3 + $0x8] sm:$0xf] %v214
  // Predicated region
  $region14: #{conv_autoencoder_forward.7} parent=0 // pred_check
    _
  $region15: #{conv_autoencoder_forward.7} parent=0 // pred_check_branch
    %222 = sbr.rel (0) target = $region17
  $region16: #{conv_autoencoder_forward.7} parent=0 // pred_region
    _
  $region17: #{conv_autoencoder_forward.7} parent=0 // pred_fallthru
    _
  // Predicated region
  $region18: #{conv_autoencoder_forward.7} parent=0 // pred_check
    _
  $region19: #{conv_autoencoder_forward.7} parent=0 // pred_check_branch
    %224 = sbr.rel (0) target = $region21
  $region20: #{conv_autoencoder_forward.7} parent=0 // pred_region
    _
  $region21: #{conv_autoencoder_forward.7} parent=0 // pred_fallthru
    _

// kernel: conv_autoencoder_forward.8
$region0: #{conv_autoencoder_forward.8}
  #allocation0 [shape = 'u32[]', space=smem, size = 0x4, offset = 0x4, fixed_abs, tag = 'smem constant byte address 0x4 - core index']
  #allocation1 [shape = 'u32[144,128]{1,0:T(1,128)}', space=vmem, size = 0x12000, scoped, tag = 'internal scratch']
  %s0 = inlined_call_operand.vmem [shape: bf16[48,384], index: 0, kind: input, shape index: {}]
  %s1 = inlined_call_operand.vmem [shape: bf16[384,128], index: 1, kind: input, shape index: {}]
  %s2 = inlined_call_operand.vmem [shape: f32[48,1], index: 2, kind: input, shape index: {}]
  %s3 = inlined_call_operand.vmem [shape: bf16[48,128], index: 3, kind: output, shape index: {}]
  %s4 = sld [smem:[#allocation0]]
  $region22: #{conv_autoencoder_forward.8} parent=0
    _
  %s6 = ssub.s32 1, %s4
  %s7 = scalar_select 0, %s6, %s4
  // Predicated region
  $region2: #{conv_autoencoder_forward.8} parent=0 // pred_check
    _
  $region3: #{conv_autoencoder_forward.8} parent=0 // pred_check_branch
    %9 = sbr.rel (0) target = $region5
  $region4: #{conv_autoencoder_forward.8} parent=0 // pred_region
    _
  $region5: #{conv_autoencoder_forward.8} parent=0 // pred_fallthru
    _
  // Predicated region
  $region6: #{conv_autoencoder_forward.8} parent=0 // pred_check
    _
  $region7: #{conv_autoencoder_forward.8} parent=0 // pred_check_branch
    %11 = sbr.rel (0) target = $region9
  $region8: #{conv_autoencoder_forward.8} parent=0 // pred_region
    _
  $region9: #{conv_autoencoder_forward.8} parent=0 // pred_fallthru
    _
  // Predicated region
  $region10: #{conv_autoencoder_forward.8} parent=0 // pred_check
    _
  $region11: #{conv_autoencoder_forward.8} parent=0 // pred_check_branch
    %13 = sbr.rel (0) target = $region13
  $region12: #{conv_autoencoder_forward.8} parent=0 // pred_region
    _
  $region13: #{conv_autoencoder_forward.8} parent=0 // pred_fallthru
    _
  %v15 = vld [vmem:[%s0] sm:$0xff]
  %v16 = vld [vmem:[%s0 + $0x8] sm:$0xf]
  %v17 = vld [vmem:[%s0 + $0xc] sm:$0xff]
  %v18 = vld [vmem:[%s0 + $0x14] sm:$0xf]
  %v19 = vld [vmem:[%s0 + $0x18] sm:$0xff]
  %v20 = vld [vmem:[%s0 + $0x20] sm:$0xf]
  %v21 = vld [vmem:[%s0 + $0x24] sm:$0xff]
  %v22 = vld [vmem:[%s0 + $0x2c] sm:$0xf]
  %v23 = vld [vmem:[%s0 + $0x30] sm:$0xff]
  %v24 = vld [vmem:[%s0 + $0x38] sm:$0xf]
  %v25 = vld [vmem:[%s0 + $0x3c] sm:$0xff]
  %v26 = vld [vmem:[%s0 + $0x44] sm:$0xf]
  %v27 = vld [vmem:[%s1] sm:$0xf]
  %v28 = vld [vmem:[%s1 + $0x4] sm:$0xf]
  %v29 = vld [vmem:[%s1 + $0x8] sm:$0xf]
  %v30 = vld [vmem:[%s1 + $0xc] sm:$0xf]
  %v31 = vld [vmem:[%s1 + $0x10] sm:$0xf]
  %v32 = vld [vmem:[%s1 + $0x14] sm:$0xf]
  %v33 = vld [vmem:[%s1 + $0x18] sm:$0xf]
  %v34 = vld [vmem:[%s1 + $0x1c] sm:$0xf]
  %v35 = vld [vmem:[%s1 + $0x20] sm:$0xf]
  %v36 = vld [vmem:[%s1 + $0x24] sm:$0xf]
  %v37 = vld [vmem:[%s1 + $0x28] sm:$0xf]
  %v38 = vld [vmem:[%s1 + $0x2c] sm:$0xf]
  %v39 = vld [vmem:[%s1 + $0x30] sm:$0xf]
  %v40 = vld [vmem:[%s1 + $0x34] sm:$0xf]
  %v41 = vld [vmem:[%s1 + $0x38] sm:$0xf]
  %v42 = vld [vmem:[%s1 + $0x3c] sm:$0xf]
  %v43 = vld [vmem:[%s1 + $0x40] sm:$0xf]
  %v44 = vld [vmem:[%s1 + $0x44] sm:$0xf]
  %v45 = vld [vmem:[%s1 + $0x48] sm:$0xf]
  %v46 = vld [vmem:[%s1 + $0x4c] sm:$0xf]
  %v47 = vld [vmem:[%s1 + $0x50] sm:$0xf]
  %v48 = vld [vmem:[%s1 + $0x54] sm:$0xf]
  %v49 = vld [vmem:[%s1 + $0x58] sm:$0xf]
  %v50 = vld [vmem:[%s1 + $0x5c] sm:$0xf]
  %v51 = vld [vmem:[%s1 + $0x60] sm:$0xf]
  %v52 = vld [vmem:[%s1 + $0x64] sm:$0xf]
  %v53 = vld [vmem:[%s1 + $0x68] sm:$0xf]
  %v54 = vld [vmem:[%s1 + $0x6c] sm:$0xf]
  %v55 = vld [vmem:[%s1 + $0x70] sm:$0xf]
  %v56 = vld [vmem:[%s1 + $0x74] sm:$0xf]
  %v57 = vld [vmem:[%s1 + $0x78] sm:$0xf]
  %v58 = vld [vmem:[%s1 + $0x7c] sm:$0xf]
  %v59 = vld [vmem:[%s1 + $0x80] sm:$0xf]
  %v60 = vld [vmem:[%s1 + $0x84] sm:$0xf]
  %v61 = vld [vmem:[%s1 + $0x88] sm:$0xf]
  %v62 = vld [vmem:[%s1 + $0x8c] sm:$0xf]
  %v63 = vld [vmem:[%s1 + $0x90] sm:$0xf]
  %v64 = vld [vmem:[%s1 + $0x94] sm:$0xf]
  %v65 = vld [vmem:[%s1 + $0x98] sm:$0xf]
  %v66 = vld [vmem:[%s1 + $0x9c] sm:$0xf]
  %v67 = vld [vmem:[%s1 + $0xa0] sm:$0xf]
  %v68 = vld [vmem:[%s1 + $0xa4] sm:$0xf]
  %v69 = vld [vmem:[%s1 + $0xa8] sm:$0xf]
  %v70 = vld [vmem:[%s1 + $0xac] sm:$0xf]
  %v71 = vld [vmem:[%s1 + $0xb0] sm:$0xf]
  %v72 = vld [vmem:[%s1 + $0xb4] sm:$0xf]
  %v73 = vld [vmem:[%s1 + $0xb8] sm:$0xf]
  %v74 = vld [vmem:[%s1 + $0xbc] sm:$0xf]
  %v75 = vld [vmem:[%s2] sm:$0xff]
  %v76 = vld [vmem:[%s2 + $0x8] sm:$0xff]
  %v77 = vld [vmem:[%s2 + $0x10] sm:$0xff]
  %v78 = vld [vmem:[%s2 + $0x18] sm:$0xff]
  %v79 = vld [vmem:[%s2 + $0x20] sm:$0xff]
  %v80 = vld [vmem:[%s2 + $0x28] sm:$0xff]
  %82 = vset.pattern.permute.xlu0 0
  %83 = vperm.xlu0 %82, %v75
  %v84 = vpop.permute.xlu0 %83
  %87 = vset.pattern.permute.xlu0 0
  %88 = vperm.xlu0 %87, %v76
  %v89 = vpop.permute.xlu0 %88
  %92 = vset.pattern.permute.xlu0 0
  %93 = vperm.xlu0 %92, %v77
  %v94 = vpop.permute.xlu0 %93
  %97 = vset.pattern.permute.xlu0 0
  %98 = vperm.xlu0 %97, %v78
  %v99 = vpop.permute.xlu0 %98
  %102 = vset.pattern.permute.xlu0 0
  %103 = vperm.xlu0 %102, %v79
  %v104 = vpop.permute.xlu0 %103
  %107 = vset.pattern.permute.xlu0 0
  %108 = vperm.xlu0 %107, %v80
  %v109 = vpop.permute.xlu0 %108
  %v123 = vunpack.c.l.b16 %v15
  %v124 = vunpack.c.h.b16 %v15
  %v125 = vunpack.c.l.b16 %v16
  %v126 = vunpack.c.l.b16 %v17
  %v127 = vunpack.c.h.b16 %v17
  %v128 = vunpack.c.l.b16 %v18
  %v129 = vunpack.c.l.b16 %v19
  %v130 = vunpack.c.h.b16 %v19
  %v131 = vunpack.c.l.b16 %v20
  %v132 = vunpack.c.l.b16 %v21
  %v133 = vunpack.c.h.b16 %v21
  %v134 = vunpack.c.l.b16 %v22
  %v135 = vunpack.c.l.b16 %v23
  %v136 = vunpack.c.h.b16 %v23
  %v137 = vunpack.c.l.b16 %v24
  %v138 = vunpack.c.l.b16 %v25
  %v139 = vunpack.c.h.b16 %v25
  %v140 = vunpack.c.l.b16 %v26
  %v141 = vpack.c.b16 %v126, %v123
  %v142 = vpack.c.b16 %v127, %v124
  %v143 = vpack.c.b16 %v128, %v125
  %v144 = vpack.c.b16 %v132, %v129
  %v145 = vpack.c.b16 %v133, %v130
  %v146 = vpack.c.b16 %v134, %v131
  %v147 = vpack.c.b16 %v138, %v135
  %v148 = vpack.c.b16 %v139, %v136
  %v149 = vpack.c.b16 %v140, %v137
  %v207 = vunpack.c.l.b16 %v27
  %v208 = vunpack.c.l.b16 %v28
  %v209 = vunpack.c.l.b16 %v29
  %v210 = vunpack.c.l.b16 %v30
  %v211 = vunpack.c.l.b16 %v31
  %v212 = vunpack.c.l.b16 %v32
  %v213 = vunpack.c.l.b16 %v33
  %v214 = vunpack.c.l.b16 %v34
  %v215 = vunpack.c.l.b16 %v35
  %v216 = vunpack.c.l.b16 %v36
  %v217 = vunpack.c.l.b16 %v37
  %v218 = vunpack.c.l.b16 %v38
  %v219 = vunpack.c.l.b16 %v39
  %v220 = vunpack.c.l.b16 %v40
  %v221 = vunpack.c.l.b16 %v41
  %v222 = vunpack.c.l.b16 %v42
  %v223 = vunpack.c.l.b16 %v43
  %v224 = vunpack.c.l.b16 %v44
  %v225 = vunpack.c.l.b16 %v45
  %v226 = vunpack.c.l.b16 %v46
  %v227 = vunpack.c.l.b16 %v47
  %v228 = vunpack.c.l.b16 %v48
  %v229 = vunpack.c.l.b16 %v49
  %v230 = vunpack.c.l.b16 %v50
  %v231 = vunpack.c.l.b16 %v51
  %v232 = vunpack.c.l.b16 %v52
  %v233 = vunpack.c.l.b16 %v53
  %v234 = vunpack.c.l.b16 %v54
  %v235 = vunpack.c.l.b16 %v55
  %v236 = vunpack.c.l.b16 %v56
  %v237 = vunpack.c.l.b16 %v57
  %v238 = vunpack.c.l.b16 %v58
  %v239 = vunpack.c.l.b16 %v59
  %v240 = vunpack.c.l.b16 %v60
  %v241 = vunpack.c.l.b16 %v61
  %v242 = vunpack.c.l.b16 %v62
  %v243 = vunpack.c.l.b16 %v63
  %v244 = vunpack.c.l.b16 %v64
  %v245 = vunpack.c.l.b16 %v65
  %v246 = vunpack.c.l.b16 %v66
  %v247 = vunpack.c.l.b16 %v67
  %v248 = vunpack.c.l.b16 %v68
  %v249 = vunpack.c.l.b16 %v69
  %v250 = vunpack.c.l.b16 %v70
  %v251 = vunpack.c.l.b16 %v71
  %v252 = vunpack.c.l.b16 %v72
  %v253 = vunpack.c.l.b16 %v73
  %v254 = vunpack.c.l.b16 %v74
  %v255 = vpack.c.b16 %v208, %v207
  %v256 = vpack.c.b16 %v210, %v209
  %v257 = vpack.c.b16 %v212, %v211
  %v258 = vpack.c.b16 %v214, %v213
  %v259 = vpack.c.b16 %v216, %v215
  %v260 = vpack.c.b16 %v218, %v217
  %v261 = vpack.c.b16 %v220, %v219
  %v262 = vpack.c.b16 %v222, %v221
  %v263 = vpack.c.b16 %v224, %v223
  %v264 = vpack.c.b16 %v226, %v225
  %v265 = vpack.c.b16 %v228, %v227
  %v266 = vpack.c.b16 %v230, %v229
  %v267 = vpack.c.b16 %v232, %v231
  %v268 = vpack.c.b16 %v234, %v233
  %v269 = vpack.c.b16 %v236, %v235
  %v270 = vpack.c.b16 %v238, %v237
  %v271 = vpack.c.b16 %v240, %v239
  %v272 = vpack.c.b16 %v242, %v241
  %v273 = vpack.c.b16 %v244, %v243
  %v274 = vpack.c.b16 %v246, %v245
  %v275 = vpack.c.b16 %v248, %v247
  %v276 = vpack.c.b16 %v250, %v249
  %v277 = vpack.c.b16 %v252, %v251
  %v278 = vpack.c.b16 %v254, %v253
  %303 = vmatprep.subr.bf16.mxu0 0
  %304 = vmatpush1.bf16.msra.mxu0 %v255
  %305 = vmatprep.subr.bf16.mxu0 0
  %306 = vmatpush1.bf16.msra.mxu0 %v256
  %307 = vmatprep.subr.bf16.mxu0 0
  %308 = vmatpush1.bf16.msra.mxu0 %v257
  %309 = vmatprep.subr.bf16.mxu0 0
  %310 = vmatpush1.bf16.msra.mxu0 %v258
  %311 = vmatprep.subr.bf16.mxu0 0
  %312 = vmatpush1.bf16.msra.mxu0 %v259
  %313 = vmatprep.subr.bf16.mxu0 0
  %314 = vmatpush1.bf16.msra.mxu0 %v260
  %315 = vmatprep.subr.bf16.mxu0 0
  %316 = vmatpush1.bf16.msra.mxu0 %v261
  %317 = vmatprep.subr.bf16.mxu0 0
  %318 = vmatpush1.bf16.msra.mxu0 %v262
  %319 = vmatprep.subr.bf16.mxu0 0
  %320 = vmatpush1.bf16.msra.mxu0 %v263
  %321 = vmatprep.subr.bf16.mxu0 0
  %322 = vmatpush1.bf16.msra.mxu0 %v264
  %323 = vmatprep.subr.bf16.mxu0 0
  %324 = vmatpush1.bf16.msra.mxu0 %v265
  %325 = vmatprep.subr.bf16.mxu0 0
  %326 = vmatpush1.bf16.msra.mxu0 %v266
  %327 = vmatprep.subr.bf16.mxu0 0
  %328 = vmatpush1.bf16.msra.mxu0 %v267
  %329 = vmatprep.subr.bf16.mxu0 0
  %330 = vmatpush1.bf16.msra.mxu0 %v268
  %331 = vmatprep.subr.bf16.mxu0 0
  %332 = vmatpush1.bf16.msra.mxu0 %v269
  %333 = vmatprep.subr.bf16.mxu0 0
  %334 = vmatpush1.bf16.msra.mxu0 %v270
  %335 = vmatprep.mubr.bf16.mxu0 %v142
  %336 = vmatmul.mubr.bf16.gmra.mrb[0].mxu0 %v141
  %v337 = vpop.f32.mrb[0].mxu0
  %v338 = vadd.f32 %v84, %v337
  %v339 = vpop.f32.mrb[0].mxu0
  %v340 = vpop.f32.mrb[0].mxu0
  %v341 = vadd.f32 %v89, %v340
  %v342 = vpop.f32.mrb[0].mxu0
  %343 = vmatprep.mubr.bf16.mxu0 %v145
  %344 = vmatmul.mubr.bf16.gmra.mrb[0].mxu0 %v144
  %v345 = vpop.f32.mrb[0].mxu0
  %v346 = vadd.f32 %v94, %v345
  %v347 = vpop.f32.mrb[0].mxu0
  %v348 = vpop.f32.mrb[0].mxu0
  %v349 = vadd.f32 %v99, %v348
  %v350 = vpop.f32.mrb[0].mxu0
  %351 = vmatprep.mubr.bf16.mxu0 %v148
  %352 = vmatmul.mubr.bf16.gmra.mrb[0].mxu0 %v147
  %v353 = vpop.f32.mrb[0].mxu0
  %v354 = vadd.f32 %v104, %v353
  %v355 = vpop.f32.mrb[0].mxu0
  %v356 = vpop.f32.mrb[0].mxu0
  %v357 = vadd.f32 %v109, %v356
  %v358 = vpop.f32.mrb[0].mxu0
  %359 = vdwg.mxu0
  %360 = vmatprep.subr.bf16.mxu0 0
  %361 = vmatpush1.bf16.msra.mxu0 %v271
  %362 = vmatprep.subr.bf16.mxu0 0
  %363 = vmatpush1.bf16.msra.mxu0 %v272
  %364 = vmatprep.subr.bf16.mxu0 0
  %365 = vmatpush1.bf16.msra.mxu0 %v273
  %366 = vmatprep.subr.bf16.mxu0 0
  %367 = vmatpush1.bf16.msra.mxu0 %v274
  %368 = vmatprep.subr.bf16.mxu0 0
  %369 = vmatpush1.bf16.msra.mxu0 %v275
  %370 = vmatprep.subr.bf16.mxu0 0
  %371 = vmatpush1.bf16.msra.mxu0 %v276
  %372 = vmatprep.subr.bf16.mxu0 0
  %373 = vmatpush1.bf16.msra.mxu0 %v277
  %374 = vmatprep.subr.bf16.mxu0 0
  %375 = vmatpush1.bf16.msra.mxu0 %v278
  %376 = vmatprep.subr.bf16.mxu0 0
  %377 = vmatpush1.bf16.msra.mxu0 0
  %378 = vmatprep.subr.bf16.mxu0 0
  %379 = vmatpush1.bf16.msra.mxu0 0
  %380 = vmatprep.subr.bf16.mxu0 0
  %381 = vmatpush1.bf16.msra.mxu0 0
  %382 = vmatprep.subr.bf16.mxu0 0
  %383 = vmatpush1.bf16.msra.mxu0 0
  %384 = vmatprep.subr.bf16.mxu0 0
  %385 = vmatpush1.bf16.msra.mxu0 0
  %386 = vmatprep.subr.bf16.mxu0 0
  %387 = vmatpush1.bf16.msra.mxu0 0
  %388 = vmatprep.subr.bf16.mxu0 0
  %389 = vmatpush1.bf16.msra.mxu0 0
  %390 = vmatprep.subr.bf16.mxu0 0
  %391 = vmatpush1.bf16.msra.mxu0 0
  %392 = vmatprep.mubr.bf16.mxu0 0
  %393 = vmatmul.mubr.bf16.gmra.mrb[0].mxu0 %v143
  %v394 = vpop.f32.mrb[0].mxu0
  %v395 = vadd.f32 %v338, %v394
  %v396 = vpop.f32.mrb[0].mxu0
  %v397 = vpop.f32.mrb[0].mxu0
  %v398 = vadd.f32 %v341, %v397
  %v399 = vpop.f32.mrb[0].mxu0
  %400 = vmatprep.mubr.bf16.mxu0 0
  %401 = vmatmul.mubr.bf16.gmra.mrb[0].mxu0 %v146
  %v402 = vpop.f32.mrb[0].mxu0
  %v403 = vadd.f32 %v346, %v402
  %v404 = vpop.f32.mrb[0].mxu0
  %v405 = vpop.f32.mrb[0].mxu0
  %v406 = vadd.f32 %v349, %v405
  %v407 = vpop.f32.mrb[0].mxu0
  %408 = vmatprep.mubr.bf16.mxu0 0
  %409 = vmatmul.mubr.bf16.gmra.mrb[0].mxu0 %v149
  %v410 = vpop.f32.mrb[0].mxu0
  %v411 = vadd.f32 %v354, %v410
  %v412 = vpop.f32.mrb[0].mxu0
  %v413 = vpop.f32.mrb[0].mxu0
  %v414 = vadd.f32 %v357, %v413
  %v415 = vpop.f32.mrb[0].mxu0
  %416 = vdwg.mxu0
  %v417 = vmax.f32 %v395, 0.0
  %v418 = vmax.f32 %v398, 0.0
  %v419 = vmax.f32 %v403, 0.0
  %v420 = vmax.f32 %v406, 0.0
  %v421 = vmax.f32 %v411, 0.0
  %v422 = vmax.f32 %v414, 0.0
  %v423 = vpack.c.bf16 %v418, %v417
  %v424 = vpack.c.bf16 %v420, %v419
  %v425 = vpack.c.bf16 %v422, %v421
  %v429 = vunpack.c.l.b16 %v423
  %v430 = vunpack.c.h.b16 %v423
  %v431 = vunpack.c.l.b16 %v424
  %v432 = vunpack.c.h.b16 %v424
  %v433 = vunpack.c.l.b16 %v425
  %v434 = vunpack.c.h.b16 %v425
  %v435 = vpack.c.b16 %v429, %v429
  %v436 = vpack.c.b16 %v430, %v430
  %v437 = vpack.c.b16 %v431, %v431
  %v438 = vpack.c.b16 %v432, %v432
  %v439 = vpack.c.b16 %v433, %v433
  %v440 = vpack.c.b16 %v434, %v434
  %447 = vst [vmem:[%s3] sm:$0xf] %v435
  %448 = vst [vmem:[%s3 + $0x4] sm:$0xf] %v436
  %449 = vst [vmem:[%s3 + $0x8] sm:$0xf] %v437
  %450 = vst [vmem:[%s3 + $0xc] sm:$0xf] %v438
  %451 = vst [vmem:[%s3 + $0x10] sm:$0xf] %v439
  %452 = vst [vmem:[%s3 + $0x14] sm:$0xf] %v440
  // Predicated region
  $region14: #{conv_autoencoder_forward.8} parent=0 // pred_check
    _
  $region15: #{conv_autoencoder_forward.8} parent=0 // pred_check_branch
    %454 = sbr.rel (0) target = $region17
  $region16: #{conv_autoencoder_forward.8} parent=0 // pred_region
    _
  $region17: #{conv_autoencoder_forward.8} parent=0 // pred_fallthru
    _
  // Predicated region
  $region18: #{conv_autoencoder_forward.8} parent=0 // pred_check
    _
  $region19: #{conv_autoencoder_forward.8} parent=0 // pred_check_branch
    %456 = sbr.rel (0) target = $region21
  $region20: #{conv_autoencoder_forward.8} parent=0 // pred_region
    _
  $region21: #{conv_autoencoder_forward.8} parent=0 // pred_fallthru
    _

// kernel: tile.18
$region0: #{tile.18}
  #allocation0 [shape = 's32[1]{0}', space=sflag, size = 0x4, scoped, tag = 'scoped memory for tile.18']
  %s0 = inlined_call_operand.vmem [shape: f32[24], index: 0, kind: input, shape index: {}]
  %s1 = inlined_call_operand.vmem [shape: f32[4,24], index: 1, kind: output, shape index: {}]
  // Predicated region
  $region2: #{tile.18} parent=0 // pred_check
    _
  $region3: #{tile.18} parent=0 // pred_check_branch
    %3 = sbr.rel (0) target = $region5
  $region4: #{tile.18} parent=0 // pred_region
    _
  $region5: #{tile.18} parent=0 // pred_fallthru
    _
  %v4 = vld [vmem:[%s0] ss:$0 sm:$0xff]
  %5 = vst [vmem:[%s1] sm:$0xf] %v4

// kernel: tile.0
$region0: #{tile.0}
  %s0 = inlined_call_operand.vmem [shape: f32[4,24], index: 0, kind: input, shape index: {}]
  %s1 = inlined_call_operand.vmem [shape: f32[96,1], index: 1, kind: output, shape index: {}]
  $region1: #{tile.0} parent=0
    #allocation0 [shape = 'u8[4096]{0}', space=vmem, size = 0x1000, scoped, tag = 'scoped mem for input reshape']
    %s3 = sshllo.u32 0, 4
    %v4 = vld [vmem:[%s0] sm:%s3]
    %5 = vst [vmem:[#allocation0] sm:%s3] %v4
    %v6 = vld [vmem:[#allocation0] sm:$0xf]
    %vm7 = vcmask 7168
    %8 = vst.msk [vmem:[%s1] ss:$24 sm:$0xf] %vm7, %v6
    %v9 = vld.sshfl [vmem:[#allocation0] sm:$0xff pattern:$0x11111230]
    %10 = vrot.lane.b32.xlu0 %v9, 127
    %v11 = vpop.permute.xlu0 %10
    %vm12 = vcmask 7168
    %s13 = scalar_lea.vmem %s1, 1
    %14 = vst.msk [vmem:[%s13] ss:$72 sm:$0x3] %vm12, %v11
    %s15 = scalar_lea.vmem %s1, 97
    %16 = vst.msk [vmem:[%s15] ss:$-24 sm:$0xc] %vm12, %v11
    %v17 = vld.sshfl [vmem:[#allocation0] sm:$0xff pattern:$0x11111230]
    %18 = vrot.lane.b32.xlu0 %v17, 126
    %v19 = vpop.permute.xlu0 %18
    %vm20 = vcmask 7168
    %s21 = scalar_lea.vmem %s1, 2
    %22 = vst.msk [vmem:[%s21] ss:$72 sm:$0x3] %vm20, %v19
    %s23 = scalar_lea.vmem %s1, 98
    %24 = vst.msk [vmem:[%s23] ss:$-24 sm:$0xc] %vm20, %v19
    %v25 = vld.sshfl [vmem:[#allocation0] sm:$0xff pattern:$0x11111230]
    %26 = vrot.lane.b32.xlu0 %v25, 125
    %v27 = vpop.permute.xlu0 %26
    %vm28 = vcmask 7168
    %s29 = scalar_lea.vmem %s1, 3
    %30 = vst.msk [vmem:[%s29] ss:$72 sm:$0x3] %vm28, %v27
    %s31 = scalar_lea.vmem %s1, 99
    %32 = vst.msk [vmem:[%s31] ss:$-24 sm:$0xc] %vm28, %v27
    %v33 = vld.sshfl [vmem:[#allocation0] sm:$0xff pattern:$0x11111230]
    %34 = vrot.lane.b32.xlu0 %v33, 124
    %v35 = vpop.permute.xlu0 %34
    %vm36 = vcmask 7168
    %s37 = scalar_lea.vmem %s1, 4
    %38 = vst.msk [vmem:[%s37] ss:$72 sm:$0x3] %vm36, %v35
    %s39 = scalar_lea.vmem %s1, 100
    %40 = vst.msk [vmem:[%s39] ss:$-24 sm:$0xc] %vm36, %v35
    %v41 = vld.sshfl [vmem:[#allocation0] sm:$0xff pattern:$0x11111230]
    %42 = vrot.lane.b32.xlu0 %v41, 123
    %v43 = vpop.permute.xlu0 %42
    %vm44 = vcmask 7168
    %s45 = scalar_lea.vmem %s1, 5
    %46 = vst.msk [vmem:[%s45] ss:$72 sm:$0x3] %vm44, %v43
    %s47 = scalar_lea.vmem %s1, 101
    %48 = vst.msk [vmem:[%s47] ss:$-24 sm:$0xc] %vm44, %v43
    %v49 = vld.sshfl [vmem:[#allocation0] sm:$0xff pattern:$0x11111230]
    %50 = vrot.lane.b32.xlu0 %v49, 122
    %v51 = vpop.permute.xlu0 %50
    %vm52 = vcmask 7168
    %s53 = scalar_lea.vmem %s1, 6
    %54 = vst.msk [vmem:[%s53] ss:$72 sm:$0x3] %vm52, %v51
    %s55 = scalar_lea.vmem %s1, 102
    %56 = vst.msk [vmem:[%s55] ss:$-24 sm:$0xc] %vm52, %v51
    %v57 = vld.sshfl [vmem:[#allocation0] sm:$0xff pattern:$0x11111230]
    %58 = vrot.lane.b32.xlu0 %v57, 121
    %v59 = vpop.permute.xlu0 %58
    %vm60 = vcmask 7168
    %s61 = scalar_lea.vmem %s1, 7
    %62 = vst.msk [vmem:[%s61] ss:$72 sm:$0x3] %vm60, %v59
    %s63 = scalar_lea.vmem %s1, 103
    %64 = vst.msk [vmem:[%s63] ss:$-24 sm:$0xc] %vm60, %v59
    %v65 = vld.sshfl [vmem:[#allocation0] sm:$0xff pattern:$0x22222301]
    %66 = vrot.lane.b32.xlu0 %v65, 120
    %v67 = vpop.permute.xlu0 %66
    %vm68 = vcmask 7168
    %s69 = scalar_lea.vmem %s1, 32
    %70 = vst.msk [vmem:[%s69] ss:$-24 sm:$0x3] %vm68, %v67
    %s71 = scalar_lea.vmem %s1, 128
    %72 = vst.msk [vmem:[%s71] ss:$-24 sm:$0xc] %vm68, %v67
    %v73 = vld.sshfl [vmem:[#allocation0] sm:$0xff pattern:$0x22222301]
    %74 = vrot.lane.b32.xlu0 %v73, 119
    %v75 = vpop.permute.xlu0 %74
    %vm76 = vcmask 7168
    %s77 = scalar_lea.vmem %s1, 33
    %78 = vst.msk [vmem:[%s77] ss:$-24 sm:$0x3] %vm76, %v75
    %s79 = scalar_lea.vmem %s1, 129
    %80 = vst.msk [vmem:[%s79] ss:$-24 sm:$0xc] %vm76, %v75
    %v81 = vld.sshfl [vmem:[#allocation0] sm:$0xff pattern:$0x22222301]
    %82 = vrot.lane.b32.xlu0 %v81, 118
    %v83 = vpop.permute.xlu0 %82
    %vm84 = vcmask 7168
    %s85 = scalar_lea.vmem %s1, 34
    %86 = vst.msk [vmem:[%s85] ss:$-24 sm:$0x3] %vm84, %v83
    %s87 = scalar_lea.vmem %s1, 130
    %88 = vst.msk [vmem:[%s87] ss:$-24 sm:$0xc] %vm84, %v83
    %v89 = vld.sshfl [vmem:[#allocation0] sm:$0xff pattern:$0x22222301]
    %90 = vrot.lane.b32.xlu0 %v89, 117
    %v91 = vpop.permute.xlu0 %90
    %vm92 = vcmask 7168
    %s93 = scalar_lea.vmem %s1, 35
    %94 = vst.msk [vmem:[%s93] ss:$-24 sm:$0x3] %vm92, %v91
    %s95 = scalar_lea.vmem %s1, 131
    %96 = vst.msk [vmem:[%s95] ss:$-24 sm:$0xc] %vm92, %v91
    %v97 = vld.sshfl [vmem:[#allocation0] sm:$0xff pattern:$0x22222301]
    %98 = vrot.lane.b32.xlu0 %v97, 116
    %v99 = vpop.permute.xlu0 %98
    %vm100 = vcmask 7168
    %s101 = scalar_lea.vmem %s1, 36
    %102 = vst.msk [vmem:[%s101] ss:$-24 sm:$0x3] %vm100, %v99
    %s103 = scalar_lea.vmem %s1, 132
    %104 = vst.msk [vmem:[%s103] ss:$-24 sm:$0xc] %vm100, %v99
    %v105 = vld.sshfl [vmem:[#allocation0] sm:$0xff pattern:$0x22222301]
    %106 = vrot.lane.b32.xlu0 %v105, 115
    %v107 = vpop.permute.xlu0 %106
    %vm108 = vcmask 7168
    %s109 = scalar_lea.vmem %s1, 37
    %110 = vst.msk [vmem:[%s109] ss:$-24 sm:$0x3] %vm108, %v107
    %s111 = scalar_lea.vmem %s1, 133
    %112 = vst.msk [vmem:[%s111] ss:$-24 sm:$0xc] %vm108, %v107
    %v113 = vld.sshfl [vmem:[#allocation0] sm:$0xff pattern:$0x22222301]
    %114 = vrot.lane.b32.xlu0 %v113, 114
    %v115 = vpop.permute.xlu0 %114
    %vm116 = vcmask 7168
    %s117 = scalar_lea.vmem %s1, 38
    %118 = vst.msk [vmem:[%s117] ss:$-24 sm:$0x3] %vm116, %v115
    %s119 = scalar_lea.vmem %s1, 134
    %120 = vst.msk [vmem:[%s119] ss:$-24 sm:$0xc] %vm116, %v115
    %v121 = vld.sshfl [vmem:[#allocation0] sm:$0xff pattern:$0x22222301]
    %122 = vrot.lane.b32.xlu0 %v121, 113
    %v123 = vpop.permute.xlu0 %122
    %vm124 = vcmask 7168
    %s125 = scalar_lea.vmem %s1, 39
    %126 = vst.msk [vmem:[%s125] ss:$-24 sm:$0x3] %vm124, %v123
    %s127 = scalar_lea.vmem %s1, 135
    %128 = vst.msk [vmem:[%s127] ss:$-24 sm:$0xc] %vm124, %v123
    %v129 = vld.sshfl [vmem:[#allocation0] sm:$0xff pattern:$0x33333012]
    %130 = vrot.lane.b32.xlu0 %v129, 112
    %v131 = vpop.permute.xlu0 %130
    %vm132 = vcmask 7168
    %s133 = scalar_lea.vmem %s1, 64
    %134 = vst.msk [vmem:[%s133] ss:$-24 sm:$0x7] %vm132, %v131
    %s135 = scalar_lea.vmem %s1, 85
    %136 = vst.msk [vmem:[%s135] sm:$0x8] %vm132, %v131
    %v137 = vld.sshfl [vmem:[#allocation0] sm:$0xff pattern:$0x33333012]
    %138 = vrot.lane.b32.xlu0 %v137, 111
    %v139 = vpop.permute.xlu0 %138
    %vm140 = vcmask 7168
    %s141 = scalar_lea.vmem %s1, 65
    %142 = vst.msk [vmem:[%s141] ss:$-24 sm:$0x7] %vm140, %v139
    %s143 = scalar_lea.vmem %s1, 86
    %144 = vst.msk [vmem:[%s143] sm:$0x8] %vm140, %v139
    %v145 = vld.sshfl [vmem:[#allocation0] sm:$0xff pattern:$0x33333012]
    %146 = vrot.lane.b32.xlu0 %v145, 110
    %v147 = vpop.permute.xlu0 %146
    %vm148 = vcmask 7168
    %s149 = scalar_lea.vmem %s1, 66
    %150 = vst.msk [vmem:[%s149] ss:$-24 sm:$0x7] %vm148, %v147
    %s151 = scalar_lea.vmem %s1, 87
    %152 = vst.msk [vmem:[%s151] sm:$0x8] %vm148, %v147
    %v153 = vld.sshfl [vmem:[#allocation0] sm:$0xff pattern:$0x33333012]
    %154 = vrot.lane.b32.xlu0 %v153, 109
    %v155 = vpop.permute.xlu0 %154
    %vm156 = vcmask 7168
    %s157 = scalar_lea.vmem %s1, 67
    %158 = vst.msk [vmem:[%s157] ss:$-24 sm:$0x7] %vm156, %v155
    %s159 = scalar_lea.vmem %s1, 88
    %160 = vst.msk [vmem:[%s159] sm:$0x8] %vm156, %v155
    %v161 = vld.sshfl [vmem:[#allocation0] sm:$0xff pattern:$0x33333012]
    %162 = vrot.lane.b32.xlu0 %v161, 108
    %v163 = vpop.permute.xlu0 %162
    %vm164 = vcmask 7168
    %s165 = scalar_lea.vmem %s1, 68
    %166 = vst.msk [vmem:[%s165] ss:$-24 sm:$0x7] %vm164, %v163
    %s167 = scalar_lea.vmem %s1, 89
    %168 = vst.msk [vmem:[%s167] sm:$0x8] %vm164, %v163
    %v169 = vld.sshfl [vmem:[#allocation0] sm:$0xff pattern:$0x33333012]
    %170 = vrot.lane.b32.xlu0 %v169, 107
    %v171 = vpop.permute.xlu0 %170
    %vm172 = vcmask 7168
    %s173 = scalar_lea.vmem %s1, 69
    %174 = vst.msk [vmem:[%s173] ss:$-24 sm:$0x7] %vm172, %v171
    %s175 = scalar_lea.vmem %s1, 90
    %176 = vst.msk [vmem:[%s175] sm:$0x8] %vm172, %v171
    %v177 = vld.sshfl [vmem:[#allocation0] sm:$0xff pattern:$0x33333012]
    %178 = vrot.lane.b32.xlu0 %v177, 106
    %v179 = vpop.permute.xlu0 %178
    %vm180 = vcmask 7168
    %s181 = scalar_lea.vmem %s1, 70
    %182 = vst.msk [vmem:[%s181] ss:$-24 sm:$0x7] %vm180, %v179
    %s183 = scalar_lea.vmem %s1, 91
    %184 = vst.msk [vmem:[%s183] sm:$0x8] %vm180, %v179
    %v185 = vld.sshfl [vmem:[#allocation0] sm:$0xff pattern:$0x33333012]
    %186 = vrot.lane.b32.xlu0 %v185, 105
    %v187 = vpop.permute.xlu0 %186
    %vm188 = vcmask 7168
    %s189 = scalar_lea.vmem %s1, 71
    %190 = vst.msk [vmem:[%s189] ss:$-24 sm:$0x7] %vm188, %v187
    %s191 = scalar_lea.vmem %s1, 92
    %192 = vst.msk [vmem:[%s191] sm:$0x8] %vm188, %v187

// kernel: conv_autoencoder_forward.9
$region0: #{conv_autoencoder_forward.9}
  #allocation0 [shape = 'u32[]', space=smem, size = 0x4, offset = 0x4, fixed_abs, tag = 'smem constant byte address 0x4 - core index']
  #allocation1 [shape = 'u32[144,128]{1,0:T(1,128)}', space=vmem, size = 0x12000, scoped, tag = 'internal scratch']
  %s0 = inlined_call_operand.vmem [shape: bf16[96,432], index: 0, kind: input, shape index: {}]
  %s1 = inlined_call_operand.vmem [shape: bf16[432,128], index: 1, kind: input, shape index: {}]
  %s2 = inlined_call_operand.vmem [shape: f32[96,1], index: 2, kind: input, shape index: {}]
  %s3 = inlined_call_operand.vmem [shape: bf16[96,128], index: 3, kind: output, shape index: {}]
  %s4 = sld [smem:[#allocation0]]
  $region22: #{conv_autoencoder_forward.9} parent=0
    _
  %s6 = ssub.s32 1, %s4
  %s7 = scalar_select 0, %s6, %s4
  // Predicated region
  $region2: #{conv_autoencoder_forward.9} parent=0 // pred_check
    _
  $region3: #{conv_autoencoder_forward.9} parent=0 // pred_check_branch
    %9 = sbr.rel (0) target = $region5
  $region4: #{conv_autoencoder_forward.9} parent=0 // pred_region
    _
  $region5: #{conv_autoencoder_forward.9} parent=0 // pred_fallthru
    _
  // Predicated region
  $region6: #{conv_autoencoder_forward.9} parent=0 // pred_check
    _
  $region7: #{conv_autoencoder_forward.9} parent=0 // pred_check_branch
    %11 = sbr.rel (0) target = $region9
  $region8: #{conv_autoencoder_forward.9} parent=0 // pred_region
    _
  $region9: #{conv_autoencoder_forward.9} parent=0 // pred_fallthru
    _
  // Predicated region
  $region10: #{conv_autoencoder_forward.9} parent=0 // pred_check
    _
  $region11: #{conv_autoencoder_forward.9} parent=0 // pred_check_branch
    %13 = sbr.rel (0) target = $region13
  $region12: #{conv_autoencoder_forward.9} parent=0 // pred_region
    _
  $region13: #{conv_autoencoder_forward.9} parent=0 // pred_fallthru
    _
  %v15 = vld [vmem:[%s0] sm:$0xff]
  %v16 = vld [vmem:[%s0 + $0x8] sm:$0xff]
  %v17 = vld [vmem:[%s0 + $0x10] sm:$0xff]
  %v18 = vld [vmem:[%s0 + $0x18] sm:$0xff]
  %v19 = vld [vmem:[%s0 + $0x20] sm:$0xff]
  %v20 = vld [vmem:[%s0 + $0x28] sm:$0xff]
  %v21 = vld [vmem:[%s0 + $0x30] sm:$0xff]
  %v22 = vld [vmem:[%s0 + $0x38] sm:$0xff]
  %v23 = vld [vmem:[%s0 + $0x40] sm:$0xff]
  %v24 = vld [vmem:[%s0 + $0x48] sm:$0xff]
  %v25 = vld [vmem:[%s0 + $0x50] sm:$0xff]
  %v26 = vld [vmem:[%s0 + $0x58] sm:$0xff]
  %v27 = vld [vmem:[%s0 + $0x60] sm:$0xff]
  %v28 = vld [vmem:[%s0 + $0x68] sm:$0xff]
  %v29 = vld [vmem:[%s0 + $0x70] sm:$0xff]
  %v30 = vld [vmem:[%s0 + $0x78] sm:$0xff]
  %v31 = vld [vmem:[%s0 + $0x80] sm:$0xff]
  %v32 = vld [vmem:[%s0 + $0x88] sm:$0xff]
  %v33 = vld [vmem:[%s0 + $0x90] sm:$0xff]
  %v34 = vld [vmem:[%s0 + $0x98] sm:$0xff]
  %v35 = vld [vmem:[%s0 + $0xa0] sm:$0xff]
  %v36 = vld [vmem:[%s0 + $0xa8] sm:$0xff]
  %v37 = vld [vmem:[%s0 + $0xb0] sm:$0xff]
  %v38 = vld [vmem:[%s0 + $0xb8] sm:$0xff]
  %v39 = vld [vmem:[%s1] sm:$0xf]
  %v40 = vld [vmem:[%s1 + $0x4] sm:$0xf]
  %v41 = vld [vmem:[%s1 + $0x8] sm:$0xf]
  %v42 = vld [vmem:[%s1 + $0xc] sm:$0xf]
  %v43 = vld [vmem:[%s1 + $0x10] sm:$0xf]
  %v44 = vld [vmem:[%s1 + $0x14] sm:$0xf]
  %v45 = vld [vmem:[%s1 + $0x18] sm:$0xf]
  %v46 = vld [vmem:[%s1 + $0x1c] sm:$0xf]
  %v47 = vld [vmem:[%s1 + $0x20] sm:$0xf]
  %v48 = vld [vmem:[%s1 + $0x24] sm:$0xf]
  %v49 = vld [vmem:[%s1 + $0x28] sm:$0xf]
  %v50 = vld [vmem:[%s1 + $0x2c] sm:$0xf]
  %v51 = vld [vmem:[%s1 + $0x30] sm:$0xf]
  %v52 = vld [vmem:[%s1 + $0x34] sm:$0xf]
  %v53 = vld [vmem:[%s1 + $0x38] sm:$0xf]
  %v54 = vld [vmem:[%s1 + $0x3c] sm:$0xf]
  %v55 = vld [vmem:[%s1 + $0x40] sm:$0xf]
  %v56 = vld [vmem:[%s1 + $0x44] sm:$0xf]
  %v57 = vld [vmem:[%s1 + $0x48] sm:$0xf]
  %v58 = vld [vmem:[%s1 + $0x4c] sm:$0xf]
  %v59 = vld [vmem:[%s1 + $0x50] sm:$0xf]
  %v60 = vld [vmem:[%s1 + $0x54] sm:$0xf]
  %v61 = vld [vmem:[%s1 + $0x58] sm:$0xf]
  %v62 = vld [vmem:[%s1 + $0x5c] sm:$0xf]
  %v63 = vld [vmem:[%s1 + $0x60] sm:$0xf]
  %v64 = vld [vmem:[%s1 + $0x64] sm:$0xf]
  %v65 = vld [vmem:[%s1 + $0x68] sm:$0xf]
  %v66 = vld [vmem:[%s1 + $0x6c] sm:$0xf]
  %v67 = vld [vmem:[%s1 + $0x70] sm:$0xf]
  %v68 = vld [vmem:[%s1 + $0x74] sm:$0xf]
  %v69 = vld [vmem:[%s1 + $0x78] sm:$0xf]
  %v70 = vld [vmem:[%s1 + $0x7c] sm:$0xf]
  %v71 = vld [vmem:[%s1 + $0x80] sm:$0xf]
  %v72 = vld [vmem:[%s1 + $0x84] sm:$0xf]
  %v73 = vld [vmem:[%s1 + $0x88] sm:$0xf]
  %v74 = vld [vmem:[%s1 + $0x8c] sm:$0xf]
  %v75 = vld [vmem:[%s1 + $0x90] sm:$0xf]
  %v76 = vld [vmem:[%s1 + $0x94] sm:$0xf]
  %v77 = vld [vmem:[%s1 + $0x98] sm:$0xf]
  %v78 = vld [vmem:[%s1 + $0x9c] sm:$0xf]
  %v79 = vld [vmem:[%s1 + $0xa0] sm:$0xf]
  %v80 = vld [vmem:[%s1 + $0xa4] sm:$0xf]
  %v81 = vld [vmem:[%s1 + $0xa8] sm:$0xf]
  %v82 = vld [vmem:[%s1 + $0xac] sm:$0xf]
  %v83 = vld [vmem:[%s1 + $0xb0] sm:$0xf]
  %v84 = vld [vmem:[%s1 + $0xb4] sm:$0xf]
  %v85 = vld [vmem:[%s1 + $0xb8] sm:$0xf]
  %v86 = vld [vmem:[%s1 + $0xbc] sm:$0xf]
  %v87 = vld [vmem:[%s1 + $0xc0] sm:$0xf]
  %v88 = vld [vmem:[%s1 + $0xc4] sm:$0xf]
  %v89 = vld [vmem:[%s1 + $0xc8] sm:$0xf]
  %v90 = vld [vmem:[%s1 + $0xcc] sm:$0xf]
  %v91 = vld [vmem:[%s1 + $0xd0] sm:$0xf]
  %v92 = vld [vmem:[%s1 + $0xd4] sm:$0xf]
  %v93 = vld [vmem:[%s2] sm:$0xff]
  %v94 = vld [vmem:[%s2 + $0x8] sm:$0xff]
  %v95 = vld [vmem:[%s2 + $0x10] sm:$0xff]
  %v96 = vld [vmem:[%s2 + $0x18] sm:$0xff]
  %v97 = vld [vmem:[%s2 + $0x20] sm:$0xff]
  %v98 = vld [vmem:[%s2 + $0x28] sm:$0xff]
  %v99 = vld [vmem:[%s2 + $0x30] sm:$0xff]
  %v100 = vld [vmem:[%s2 + $0x38] sm:$0xff]
  %v101 = vld [vmem:[%s2 + $0x40] sm:$0xff]
  %v102 = vld [vmem:[%s2 + $0x48] sm:$0xff]
  %v103 = vld [vmem:[%s2 + $0x50] sm:$0xff]
  %v104 = vld [vmem:[%s2 + $0x58] sm:$0xff]
  %106 = vset.pattern.permute.xlu0 0
  %107 = vperm.xlu0 %106, %v93
  %v108 = vpop.permute.xlu0 %107
  %111 = vset.pattern.permute.xlu0 0
  %112 = vperm.xlu0 %111, %v94
  %v113 = vpop.permute.xlu0 %112
  %116 = vset.pattern.permute.xlu0 0
  %117 = vperm.xlu0 %116, %v95
  %v118 = vpop.permute.xlu0 %117
  %121 = vset.pattern.permute.xlu0 0
  %122 = vperm.xlu0 %121, %v96
  %v123 = vpop.permute.xlu0 %122
  %126 = vset.pattern.permute.xlu0 0
  %127 = vperm.xlu0 %126, %v97
  %v128 = vpop.permute.xlu0 %127
  %131 = vset.pattern.permute.xlu0 0
  %132 = vperm.xlu0 %131, %v98
  %v133 = vpop.permute.xlu0 %132
  %136 = vset.pattern.permute.xlu0 0
  %137 = vperm.xlu0 %136, %v99
  %v138 = vpop.permute.xlu0 %137
  %141 = vset.pattern.permute.xlu0 0
  %142 = vperm.xlu0 %141, %v100
  %v143 = vpop.permute.xlu0 %142
  %146 = vset.pattern.permute.xlu0 0
  %147 = vperm.xlu0 %146, %v101
  %v148 = vpop.permute.xlu0 %147
  %151 = vset.pattern.permute.xlu0 0
  %152 = vperm.xlu0 %151, %v102
  %v153 = vpop.permute.xlu0 %152
  %156 = vset.pattern.permute.xlu0 0
  %157 = vperm.xlu0 %156, %v103
  %v158 = vpop.permute.xlu0 %157
  %161 = vset.pattern.permute.xlu0 0
  %162 = vperm.xlu0 %161, %v104
  %v163 = vpop.permute.xlu0 %162
  %v189 = vunpack.c.l.b16 %v15
  %v190 = vunpack.c.h.b16 %v15
  %v191 = vunpack.c.l.b16 %v16
  %v192 = vunpack.c.h.b16 %v16
  %v193 = vunpack.c.l.b16 %v17
  %v194 = vunpack.c.h.b16 %v17
  %v195 = vunpack.c.l.b16 %v18
  %v196 = vunpack.c.h.b16 %v18
  %v197 = vunpack.c.l.b16 %v19
  %v198 = vunpack.c.h.b16 %v19
  %v199 = vunpack.c.l.b16 %v20
  %v200 = vunpack.c.h.b16 %v20
  %v201 = vunpack.c.l.b16 %v21
  %v202 = vunpack.c.h.b16 %v21
  %v203 = vunpack.c.l.b16 %v22
  %v204 = vunpack.c.h.b16 %v22
  %v205 = vunpack.c.l.b16 %v23
  %v206 = vunpack.c.h.b16 %v23
  %v207 = vunpack.c.l.b16 %v24
  %v208 = vunpack.c.h.b16 %v24
  %v209 = vunpack.c.l.b16 %v25
  %v210 = vunpack.c.h.b16 %v25
  %v211 = vunpack.c.l.b16 %v26
  %v212 = vunpack.c.h.b16 %v26
  %v213 = vunpack.c.l.b16 %v27
  %v214 = vunpack.c.h.b16 %v27
  %v215 = vunpack.c.l.b16 %v28
  %v216 = vunpack.c.h.b16 %v28
  %v217 = vunpack.c.l.b16 %v29
  %v218 = vunpack.c.h.b16 %v29
  %v219 = vunpack.c.l.b16 %v30
  %v220 = vunpack.c.h.b16 %v30
  %v221 = vunpack.c.l.b16 %v31
  %v222 = vunpack.c.h.b16 %v31
  %v223 = vunpack.c.l.b16 %v32
  %v224 = vunpack.c.h.b16 %v32
  %v225 = vunpack.c.l.b16 %v33
  %v226 = vunpack.c.h.b16 %v33
  %v227 = vunpack.c.l.b16 %v34
  %v228 = vunpack.c.h.b16 %v34
  %v229 = vunpack.c.l.b16 %v35
  %v230 = vunpack.c.h.b16 %v35
  %v231 = vunpack.c.l.b16 %v36
  %v232 = vunpack.c.h.b16 %v36
  %v233 = vunpack.c.l.b16 %v37
  %v234 = vunpack.c.h.b16 %v37
  %v235 = vunpack.c.l.b16 %v38
  %v236 = vunpack.c.h.b16 %v38
  %v237 = vpack.c.b16 %v193, %v189
  %v238 = vpack.c.b16 %v194, %v190
  %v239 = vpack.c.b16 %v195, %v191
  %v240 = vpack.c.b16 %v196, %v192
  %v241 = vpack.c.b16 %v201, %v197
  %v242 = vpack.c.b16 %v202, %v198
  %v243 = vpack.c.b16 %v203, %v199
  %v244 = vpack.c.b16 %v204, %v200
  %v245 = vpack.c.b16 %v209, %v205
  %v246 = vpack.c.b16 %v210, %v206
  %v247 = vpack.c.b16 %v211, %v207
  %v248 = vpack.c.b16 %v212, %v208
  %v249 = vpack.c.b16 %v217, %v213
  %v250 = vpack.c.b16 %v218, %v214
  %v251 = vpack.c.b16 %v219, %v215
  %v252 = vpack.c.b16 %v220, %v216
  %v253 = vpack.c.b16 %v225, %v221
  %v254 = vpack.c.b16 %v226, %v222
  %v255 = vpack.c.b16 %v227, %v223
  %v256 = vpack.c.b16 %v228, %v224
  %v257 = vpack.c.b16 %v233, %v229
  %v258 = vpack.c.b16 %v234, %v230
  %v259 = vpack.c.b16 %v235, %v231
  %v260 = vpack.c.b16 %v236, %v232
  %v333 = vunpack.c.l.b16 %v39
  %v334 = vunpack.c.l.b16 %v40
  %v335 = vunpack.c.l.b16 %v41
  %v336 = vunpack.c.l.b16 %v42
  %v337 = vunpack.c.l.b16 %v43
  %v338 = vunpack.c.l.b16 %v44
  %v339 = vunpack.c.l.b16 %v45
  %v340 = vunpack.c.l.b16 %v46
  %v341 = vunpack.c.l.b16 %v47
  %v342 = vunpack.c.l.b16 %v48
  %v343 = vunpack.c.l.b16 %v49
  %v344 = vunpack.c.l.b16 %v50
  %v345 = vunpack.c.l.b16 %v51
  %v346 = vunpack.c.l.b16 %v52
  %v347 = vunpack.c.l.b16 %v53
  %v348 = vunpack.c.l.b16 %v54
  %v349 = vunpack.c.l.b16 %v55
  %v350 = vunpack.c.l.b16 %v56
  %v351 = vunpack.c.l.b16 %v57
  %v352 = vunpack.c.l.b16 %v58
  %v353 = vunpack.c.l.b16 %v59
  %v354 = vunpack.c.l.b16 %v60
  %v355 = vunpack.c.l.b16 %v61
  %v356 = vunpack.c.l.b16 %v62
  %v357 = vunpack.c.l.b16 %v63
  %v358 = vunpack.c.l.b16 %v64
  %v359 = vunpack.c.l.b16 %v65
  %v360 = vunpack.c.l.b16 %v66
  %v361 = vunpack.c.l.b16 %v67
  %v362 = vunpack.c.l.b16 %v68
  %v363 = vunpack.c.l.b16 %v69
  %v364 = vunpack.c.l.b16 %v70
  %v365 = vunpack.c.l.b16 %v71
  %v366 = vunpack.c.l.b16 %v72
  %v367 = vunpack.c.l.b16 %v73
  %v368 = vunpack.c.l.b16 %v74
  %v369 = vunpack.c.l.b16 %v75
  %v370 = vunpack.c.l.b16 %v76
  %v371 = vunpack.c.l.b16 %v77
  %v372 = vunpack.c.l.b16 %v78
  %v373 = vunpack.c.l.b16 %v79
  %v374 = vunpack.c.l.b16 %v80
  %v375 = vunpack.c.l.b16 %v81
  %v376 = vunpack.c.l.b16 %v82
  %v377 = vunpack.c.l.b16 %v83
  %v378 = vunpack.c.l.b16 %v84
  %v379 = vunpack.c.l.b16 %v85
  %v380 = vunpack.c.l.b16 %v86
  %v381 = vunpack.c.l.b16 %v87
  %v382 = vunpack.c.l.b16 %v88
  %v383 = vunpack.c.l.b16 %v89
  %v384 = vunpack.c.l.b16 %v90
  %v385 = vunpack.c.l.b16 %v91
  %v386 = vunpack.c.l.b16 %v92
  %v387 = vpack.c.b16 %v334, %v333
  %v388 = vpack.c.b16 %v336, %v335
  %v389 = vpack.c.b16 %v338, %v337
  %v390 = vpack.c.b16 %v340, %v339
  %v391 = vpack.c.b16 %v342, %v341
  %v392 = vpack.c.b16 %v344, %v343
  %v393 = vpack.c.b16 %v346, %v345
  %v394 = vpack.c.b16 %v348, %v347
  %v395 = vpack.c.b16 %v350, %v349
  %v396 = vpack.c.b16 %v352, %v351
  %v397 = vpack.c.b16 %v354, %v353
  %v398 = vpack.c.b16 %v356, %v355
  %v399 = vpack.c.b16 %v358, %v357
  %v400 = vpack.c.b16 %v360, %v359
  %v401 = vpack.c.b16 %v362, %v361
  %v402 = vpack.c.b16 %v364, %v363
  %v403 = vpack.c.b16 %v366, %v365
  %v404 = vpack.c.b16 %v368, %v367
  %v405 = vpack.c.b16 %v370, %v369
  %v406 = vpack.c.b16 %v372, %v371
  %v407 = vpack.c.b16 %v374, %v373
  %v408 = vpack.c.b16 %v376, %v375
  %v409 = vpack.c.b16 %v378, %v377
  %v410 = vpack.c.b16 %v380, %v379
  %v411 = vpack.c.b16 %v382, %v381
  %v412 = vpack.c.b16 %v384, %v383
  %v413 = vpack.c.b16 %v386, %v385
  %vm441 = vcmask 392192
  %v443 = vsel %vm441, %v240, 0
  %v446 = vsel %vm441, %v244, 0
  %v449 = vsel %vm441, %v248, 0
  %v452 = vsel %vm441, %v252, 0
  %v455 = vsel %vm441, %v256, 0
  %v458 = vsel %vm441, %v260, 0
  %460 = vmatprep.subr.bf16.mxu0 0
  %461 = vmatpush1.bf16.msra.mxu0 %v387
  %462 = vmatprep.subr.bf16.mxu0 0
  %463 = vmatpush1.bf16.msra.mxu0 %v388
  %464 = vmatprep.subr.bf16.mxu0 0
  %465 = vmatpush1.bf16.msra.mxu0 %v389
  %466 = vmatprep.subr.bf16.mxu0 0
  %467 = vmatpush1.bf16.msra.mxu0 %v390
  %468 = vmatprep.subr.bf16.mxu0 0
  %469 = vmatpush1.bf16.msra.mxu0 %v391
  %470 = vmatprep.subr.bf16.mxu0 0
  %471 = vmatpush1.bf16.msra.mxu0 %v392
  %472 = vmatprep.subr.bf16.mxu0 0
  %473 = vmatpush1.bf16.msra.mxu0 %v393
  %474 = vmatprep.subr.bf16.mxu0 0
  %475 = vmatpush1.bf16.msra.mxu0 %v394
  %476 = vmatprep.subr.bf16.mxu0 0
  %477 = vmatpush1.bf16.msra.mxu0 %v395
  %478 = vmatprep.subr.bf16.mxu0 0
  %479 = vmatpush1.bf16.msra.mxu0 %v396
  %480 = vmatprep.subr.bf16.mxu0 0
  %481 = vmatpush1.bf16.msra.mxu0 %v397
  %482 = vmatprep.subr.bf16.mxu0 0
  %483 = vmatpush1.bf16.msra.mxu0 %v398
  %484 = vmatprep.subr.bf16.mxu0 0
  %485 = vmatpush1.bf16.msra.mxu0 %v399
  %486 = vmatprep.subr.bf16.mxu0 0
  %487 = vmatpush1.bf16.msra.mxu0 %v400
  %488 = vmatprep.subr.bf16.mxu0 0
  %489 = vmatpush1.bf16.msra.mxu0 %v401
  %490 = vmatprep.subr.bf16.mxu0 0
  %491 = vmatpush1.bf16.msra.mxu0 %v402
  %492 = vmatprep.mubr.bf16.mxu0 %v238
  %493 = vmatmul.mubr.bf16.gmra.mrb[0].mxu0 %v237
  %v494 = vpop.f32.mrb[0].mxu0
  %v495 = vadd.f32 %v108, %v494
  %v496 = vpop.f32.mrb[0].mxu0
  %v497 = vpop.f32.mrb[0].mxu0
  %v498 = vadd.f32 %v113, %v497
  %v499 = vpop.f32.mrb[0].mxu0
  %500 = vmatprep.mubr.bf16.mxu0 %v242
  %501 = vmatmul.mubr.bf16.gmra.mrb[0].mxu0 %v241
  %v502 = vpop.f32.mrb[0].mxu0
  %v503 = vadd.f32 %v118, %v502
  %v504 = vpop.f32.mrb[0].mxu0
  %v505 = vpop.f32.mrb[0].mxu0
  %v506 = vadd.f32 %v123, %v505
  %v507 = vpop.f32.mrb[0].mxu0
  %508 = vmatprep.mubr.bf16.mxu0 %v246
  %509 = vmatmul.mubr.bf16.gmra.mrb[0].mxu0 %v245
  %v510 = vpop.f32.mrb[0].mxu0
  %v511 = vadd.f32 %v128, %v510
  %v512 = vpop.f32.mrb[0].mxu0
  %v513 = vpop.f32.mrb[0].mxu0
  %v514 = vadd.f32 %v133, %v513
  %v515 = vpop.f32.mrb[0].mxu0
  %516 = vmatprep.mubr.bf16.mxu0 %v250
  %517 = vmatmul.mubr.bf16.gmra.mrb[0].mxu0 %v249
  %v518 = vpop.f32.mrb[0].mxu0
  %v519 = vadd.f32 %v138, %v518
  %v520 = vpop.f32.mrb[0].mxu0
  %v521 = vpop.f32.mrb[0].mxu0
  %v522 = vadd.f32 %v143, %v521
  %v523 = vpop.f32.mrb[0].mxu0
  %524 = vmatprep.mubr.bf16.mxu0 %v254
  %525 = vmatmul.mubr.bf16.gmra.mrb[0].mxu0 %v253
  %v526 = vpop.f32.mrb[0].mxu0
  %v527 = vadd.f32 %v148, %v526
  %v528 = vpop.f32.mrb[0].mxu0
  %v529 = vpop.f32.mrb[0].mxu0
  %v530 = vadd.f32 %v153, %v529
  %v531 = vpop.f32.mrb[0].mxu0
  %532 = vmatprep.mubr.bf16.mxu0 %v258
  %533 = vmatmul.mubr.bf16.gmra.mrb[0].mxu0 %v257
  %v534 = vpop.f32.mrb[0].mxu0
  %v535 = vadd.f32 %v158, %v534
  %v536 = vpop.f32.mrb[0].mxu0
  %v537 = vpop.f32.mrb[0].mxu0
  %v538 = vadd.f32 %v163, %v537
  %v539 = vpop.f32.mrb[0].mxu0
  %540 = vdwg.mxu0
  %541 = vmatprep.subr.bf16.mxu0 0
  %542 = vmatpush1.bf16.msra.mxu0 %v403
  %543 = vmatprep.subr.bf16.mxu0 0
  %544 = vmatpush1.bf16.msra.mxu0 %v404
  %545 = vmatprep.subr.bf16.mxu0 0
  %546 = vmatpush1.bf16.msra.mxu0 %v405
  %547 = vmatprep.subr.bf16.mxu0 0
  %548 = vmatpush1.bf16.msra.mxu0 %v406
  %549 = vmatprep.subr.bf16.mxu0 0
  %550 = vmatpush1.bf16.msra.mxu0 %v407
  %551 = vmatprep.subr.bf16.mxu0 0
  %552 = vmatpush1.bf16.msra.mxu0 %v408
  %553 = vmatprep.subr.bf16.mxu0 0
  %554 = vmatpush1.bf16.msra.mxu0 %v409
  %555 = vmatprep.subr.bf16.mxu0 0
  %556 = vmatpush1.bf16.msra.mxu0 %v410
  %557 = vmatprep.subr.bf16.mxu0 0
  %558 = vmatpush1.bf16.msra.mxu0 %v411
  %559 = vmatprep.subr.bf16.mxu0 0
  %560 = vmatpush1.bf16.msra.mxu0 %v412
  %561 = vmatprep.subr.bf16.mxu0 0
  %562 = vmatpush1.bf16.msra.mxu0 %v413
  %563 = vmatprep.subr.bf16.mxu0 0
  %564 = vmatpush1.bf16.msra.mxu0 0
  %565 = vmatprep.subr.bf16.mxu0 0
  %566 = vmatpush1.bf16.msra.mxu0 0
  %567 = vmatprep.subr.bf16.mxu0 0
  %568 = vmatpush1.bf16.msra.mxu0 0
  %569 = vmatprep.subr.bf16.mxu0 0
  %570 = vmatpush1.bf16.msra.mxu0 0
  %571 = vmatprep.subr.bf16.mxu0 0
  %572 = vmatpush1.bf16.msra.mxu0 0
  %573 = vmatprep.mubr.bf16.mxu0 %v443
  %574 = vmatmul.mubr.bf16.gmra.mrb[0].mxu0 %v239
  %v575 = vpop.f32.mrb[0].mxu0
  %v576 = vadd.f32 %v495, %v575
  %v577 = vpop.f32.mrb[0].mxu0
  %v578 = vpop.f32.mrb[0].mxu0
  %v579 = vadd.f32 %v498, %v578
  %v580 = vpop.f32.mrb[0].mxu0
  %581 = vmatprep.mubr.bf16.mxu0 %v446
  %582 = vmatmul.mubr.bf16.gmra.mrb[0].mxu0 %v243
  %v583 = vpop.f32.mrb[0].mxu0
  %v584 = vadd.f32 %v503, %v583
  %v585 = vpop.f32.mrb[0].mxu0
  %v586 = vpop.f32.mrb[0].mxu0
  %v587 = vadd.f32 %v506, %v586
  %v588 = vpop.f32.mrb[0].mxu0
  %589 = vmatprep.mubr.bf16.mxu0 %v449
  %590 = vmatmul.mubr.bf16.gmra.mrb[0].mxu0 %v247
  %v591 = vpop.f32.mrb[0].mxu0
  %v592 = vadd.f32 %v511, %v591
  %v593 = vpop.f32.mrb[0].mxu0
  %v594 = vpop.f32.mrb[0].mxu0
  %v595 = vadd.f32 %v514, %v594
  %v596 = vpop.f32.mrb[0].mxu0
  %597 = vmatprep.mubr.bf16.mxu0 %v452
  %598 = vmatmul.mubr.bf16.gmra.mrb[0].mxu0 %v251
  %v599 = vpop.f32.mrb[0].mxu0
  %v600 = vadd.f32 %v519, %v599
  %v601 = vpop.f32.mrb[0].mxu0
  %v602 = vpop.f32.mrb[0].mxu0
  %v603 = vadd.f32 %v522, %v602
  %v604 = vpop.f32.mrb[0].mxu0
  %605 = vmatprep.mubr.bf16.mxu0 %v455
  %606 = vmatmul.mubr.bf16.gmra.mrb[0].mxu0 %v255
  %v607 = vpop.f32.mrb[0].mxu0
  %v608 = vadd.f32 %v527, %v607
  %v609 = vpop.f32.mrb[0].mxu0
  %v610 = vpop.f32.mrb[0].mxu0
  %v611 = vadd.f32 %v530, %v610
  %v612 = vpop.f32.mrb[0].mxu0
  %613 = vmatprep.mubr.bf16.mxu0 %v458
  %614 = vmatmul.mubr.bf16.gmra.mrb[0].mxu0 %v259
  %v615 = vpop.f32.mrb[0].mxu0
  %v616 = vadd.f32 %v535, %v615
  %v617 = vpop.f32.mrb[0].mxu0
  %v618 = vpop.f32.mrb[0].mxu0
  %v619 = vadd.f32 %v538, %v618
  %v620 = vpop.f32.mrb[0].mxu0
  %621 = vdwg.mxu0
  %v622 = vmax.f32 %v576, 0.0
  %v623 = vmax.f32 %v579, 0.0
  %v624 = vmax.f32 %v584, 0.0
  %v625 = vmax.f32 %v587, 0.0
  %v626 = vmax.f32 %v592, 0.0
  %v627 = vmax.f32 %v595, 0.0
  %v628 = vmax.f32 %v600, 0.0
  %v629 = vmax.f32 %v603, 0.0
  %v630 = vmax.f32 %v608, 0.0
  %v631 = vmax.f32 %v611, 0.0
  %v632 = vmax.f32 %v616, 0.0
  %v633 = vmax.f32 %v619, 0.0
  %v634 = vpack.c.bf16 %v623, %v622
  %v635 = vpack.c.bf16 %v625, %v624
  %v636 = vpack.c.bf16 %v627, %v626
  %v637 = vpack.c.bf16 %v629, %v628
  %v638 = vpack.c.bf16 %v631, %v630
  %v639 = vpack.c.bf16 %v633, %v632
  %v646 = vunpack.c.l.b16 %v634
  %v647 = vunpack.c.h.b16 %v634
  %v648 = vunpack.c.l.b16 %v635
  %v649 = vunpack.c.h.b16 %v635
  %v650 = vunpack.c.l.b16 %v636
  %v651 = vunpack.c.h.b16 %v636
  %v652 = vunpack.c.l.b16 %v637
  %v653 = vunpack.c.h.b16 %v637
  %v654 = vunpack.c.l.b16 %v638
  %v655 = vunpack.c.h.b16 %v638
  %v656 = vunpack.c.l.b16 %v639
  %v657 = vunpack.c.h.b16 %v639
  %v658 = vpack.c.b16 %v646, %v646
  %v659 = vpack.c.b16 %v647, %v647
  %v660 = vpack.c.b16 %v648, %v648
  %v661 = vpack.c.b16 %v649, %v649
  %v662 = vpack.c.b16 %v650, %v650
  %v663 = vpack.c.b16 %v651, %v651
  %v664 = vpack.c.b16 %v652, %v652
  %v665 = vpack.c.b16 %v653, %v653
  %v666 = vpack.c.b16 %v654, %v654
  %v667 = vpack.c.b16 %v655, %v655
  %v668 = vpack.c.b16 %v656, %v656
  %v669 = vpack.c.b16 %v657, %v657
  %682 = vst [vmem:[%s3] sm:$0xf] %v658
  %683 = vst [vmem:[%s3 + $0x4] sm:$0xf] %v659
  %684 = vst [vmem:[%s3 + $0x8] sm:$0xf] %v660
  %685 = vst [vmem:[%s3 + $0xc] sm:$0xf] %v661
  %686 = vst [vmem:[%s3 + $0x10] sm:$0xf] %v662
  %687 = vst [vmem:[%s3 + $0x14] sm:$0xf] %v663
  %688 = vst [vmem:[%s3 + $0x18] sm:$0xf] %v664
  %689 = vst [vmem:[%s3 + $0x1c] sm:$0xf] %v665
  %690 = vst [vmem:[%s3 + $0x20] sm:$0xf] %v666
  %691 = vst [vmem:[%s3 + $0x24] sm:$0xf] %v667
  %692 = vst [vmem:[%s3 + $0x28] sm:$0xf] %v668
  %693 = vst [vmem:[%s3 + $0x2c] sm:$0xf] %v669
  // Predicated region
  $region14: #{conv_autoencoder_forward.9} parent=0 // pred_check
    _
  $region15: #{conv_autoencoder_forward.9} parent=0 // pred_check_branch
    %695 = sbr.rel (0) target = $region17
  $region16: #{conv_autoencoder_forward.9} parent=0 // pred_region
    _
  $region17: #{conv_autoencoder_forward.9} parent=0 // pred_fallthru
    _
  // Predicated region
  $region18: #{conv_autoencoder_forward.9} parent=0 // pred_check
    _
  $region19: #{conv_autoencoder_forward.9} parent=0 // pred_check_branch
    %697 = sbr.rel (0) target = $region21
  $region20: #{conv_autoencoder_forward.9} parent=0 // pred_region
    _
  $region21: #{conv_autoencoder_forward.9} parent=0 // pred_fallthru
    _

// kernel: tile.23
$region0: #{tile.23}
  #allocation0 [shape = 's32[1]{0}', space=sflag, size = 0x4, scoped, tag = 'scoped memory for tile.23']
  %s0 = inlined_call_operand.vmem [shape: f32[12], index: 0, kind: input, shape index: {}]
  %s1 = inlined_call_operand.vmem [shape: f32[4,12], index: 1, kind: output, shape index: {}]
  // Predicated region
  $region2: #{tile.23} parent=0 // pred_check
    _
  $region3: #{tile.23} parent=0 // pred_check_branch
    %3 = sbr.rel (0) target = $region5
  $region4: #{tile.23} parent=0 // pred_region
    _
  $region5: #{tile.23} parent=0 // pred_fallthru
    _
  %v4 = vld [vmem:[%s0] ss:$0 sm:$0xff]
  %5 = vst [vmem:[%s1] sm:$0xf] %v4

// kernel: tile.1
$region0: #{tile.1}
  %s0 = inlined_call_operand.vmem [shape: f32[4,12], index: 0, kind: input, shape index: {}]
  %s1 = inlined_call_operand.vmem [shape: f32[48,1], index: 1, kind: output, shape index: {}]
  $region1: #{tile.1} parent=0
    #allocation0 [shape = 'u8[4096]{0}', space=vmem, size = 0x1000, scoped, tag = 'scoped mem for input reshape']
    %s3 = sshllo.u32 0, 4
    %v4 = vld [vmem:[%s0] sm:%s3]
    %5 = vst [vmem:[#allocation0] sm:%s3] %v4
    %v6 = vld [vmem:[#allocation0] sm:$0xf]
    %vm7 = vcmask 7168
    %8 = vst.msk [vmem:[%s1] ss:$12 sm:$0xf] %vm7, %v6
    %v9 = vld.sshfl [vmem:[#allocation0] sm:$0xff pattern:$0x22222130]
    %10 = vrot.lane.b32.xlu0 %v9, 127
    %v11 = vpop.permute.xlu0 %10
    %vm12 = vcmask 7168
    %s13 = scalar_lea.vmem %s1, 1
    %14 = vst.msk [vmem:[%s13] ss:$36 sm:$0x3] %vm12, %v11
    %s15 = scalar_lea.vmem %s1, 4294967285
    %16 = vst.msk [vmem:[%s15] ss:$12 sm:$0xc] %vm12, %v11
    %v17 = vld.sshfl [vmem:[#allocation0] sm:$0xff pattern:$0x22222130]
    %18 = vrot.lane.b32.xlu0 %v17, 126
    %v19 = vpop.permute.xlu0 %18
    %vm20 = vcmask 7168
    %s21 = scalar_lea.vmem %s1, 2
    %22 = vst.msk [vmem:[%s21] ss:$36 sm:$0x3] %vm20, %v19
    %s23 = scalar_lea.vmem %s1, 4294967286
    %24 = vst.msk [vmem:[%s23] ss:$12 sm:$0xc] %vm20, %v19
    %v25 = vld.sshfl [vmem:[#allocation0] sm:$0xff pattern:$0x22222130]
    %26 = vrot.lane.b32.xlu0 %v25, 125
    %v27 = vpop.permute.xlu0 %26
    %vm28 = vcmask 7168
    %s29 = scalar_lea.vmem %s1, 3
    %30 = vst.msk [vmem:[%s29] ss:$36 sm:$0x3] %vm28, %v27
    %s31 = scalar_lea.vmem %s1, 4294967287
    %32 = vst.msk [vmem:[%s31] ss:$12 sm:$0xc] %vm28, %v27
    %v33 = vld.sshfl [vmem:[#allocation0] sm:$0xff pattern:$0x22222130]
    %34 = vrot.lane.b32.xlu0 %v33, 124
    %v35 = vpop.permute.xlu0 %34
    %vm36 = vcmask 7168
    %s37 = scalar_lea.vmem %s1, 4
    %38 = vst.msk [vmem:[%s37] ss:$36 sm:$0x3] %vm36, %v35
    %s39 = scalar_lea.vmem %s1, 4294967288
    %40 = vst.msk [vmem:[%s39] ss:$12 sm:$0xc] %vm36, %v35
    %v41 = vld.sshfl [vmem:[#allocation0] sm:$0xff pattern:$0x22222130]
    %42 = vrot.lane.b32.xlu0 %v41, 123
    %v43 = vpop.permute.xlu0 %42
    %vm44 = vcmask 7168
    %s45 = scalar_lea.vmem %s1, 5
    %46 = vst.msk [vmem:[%s45] ss:$36 sm:$0x3] %vm44, %v43
    %s47 = scalar_lea.vmem %s1, 4294967289
    %48 = vst.msk [vmem:[%s47] ss:$12 sm:$0xc] %vm44, %v43
    %v49 = vld.sshfl [vmem:[#allocation0] sm:$0xff pattern:$0x22222130]
    %50 = vrot.lane.b32.xlu0 %v49, 122
    %v51 = vpop.permute.xlu0 %50
    %vm52 = vcmask 7168
    %s53 = scalar_lea.vmem %s1, 6
    %54 = vst.msk [vmem:[%s53] ss:$36 sm:$0x3] %vm52, %v51
    %s55 = scalar_lea.vmem %s1, 4294967290
    %56 = vst.msk [vmem:[%s55] ss:$12 sm:$0xc] %vm52, %v51
    %v57 = vld.sshfl [vmem:[#allocation0] sm:$0xff pattern:$0x22222130]
    %58 = vrot.lane.b32.xlu0 %v57, 121
    %v59 = vpop.permute.xlu0 %58
    %vm60 = vcmask 7168
    %s61 = scalar_lea.vmem %s1, 7
    %62 = vst.msk [vmem:[%s61] ss:$36 sm:$0x3] %vm60, %v59
    %s63 = scalar_lea.vmem %s1, 4294967291
    %64 = vst.msk [vmem:[%s63] ss:$12 sm:$0xc] %vm60, %v59
    %v65 = vld.sshfl [vmem:[#allocation0] sm:$0xff pattern:$0x11111302]
    %66 = vrot.lane.b32.xlu0 %v65, 120
    %v67 = vpop.permute.xlu0 %66
    %vm68 = vcmask 7168
    %s69 = scalar_lea.vmem %s1, 32
    %70 = vst.msk [vmem:[%s69] ss:$-24 sm:$0x3] %vm68, %v67
    %s71 = scalar_lea.vmem %s1, 92
    %72 = vst.msk [vmem:[%s71] ss:$-24 sm:$0xc] %vm68, %v67
    %v73 = vld.sshfl [vmem:[#allocation0] sm:$0xff pattern:$0x11111302]
    %74 = vrot.lane.b32.xlu0 %v73, 119
    %v75 = vpop.permute.xlu0 %74
    %vm76 = vcmask 7168
    %s77 = scalar_lea.vmem %s1, 33
    %78 = vst.msk [vmem:[%s77] ss:$-24 sm:$0x3] %vm76, %v75
    %s79 = scalar_lea.vmem %s1, 93
    %80 = vst.msk [vmem:[%s79] ss:$-24 sm:$0xc] %vm76, %v75
    %v81 = vld.sshfl [vmem:[#allocation0] sm:$0xff pattern:$0x11111302]
    %82 = vrot.lane.b32.xlu0 %v81, 118
    %v83 = vpop.permute.xlu0 %82
    %vm84 = vcmask 7168
    %s85 = scalar_lea.vmem %s1, 34
    %86 = vst.msk [vmem:[%s85] ss:$-24 sm:$0x3] %vm84, %v83
    %s87 = scalar_lea.vmem %s1, 94
    %88 = vst.msk [vmem:[%s87] ss:$-24 sm:$0xc] %vm84, %v83
    %v89 = vld.sshfl [vmem:[#allocation0] sm:$0xff pattern:$0x11111302]
    %90 = vrot.lane.b32.xlu0 %v89, 117
    %v91 = vpop.permute.xlu0 %90
    %vm92 = vcmask 7168
    %s93 = scalar_lea.vmem %s1, 35
    %94 = vst.msk [vmem:[%s93] ss:$-24 sm:$0x3] %vm92, %v91
    %s95 = scalar_lea.vmem %s1, 95
    %96 = vst.msk [vmem:[%s95] ss:$-24 sm:$0xc] %vm92, %v91

// kernel: conv_autoencoder_forward.10
$region0: #{conv_autoencoder_forward.10}
  #allocation0 [shape = 'u32[]', space=smem, size = 0x4, offset = 0x4, fixed_abs, tag = 'smem constant byte address 0x4 - core index']
  #allocation1 [shape = 'u32[144,128]{1,0:T(1,128)}', space=vmem, size = 0x12000, scoped, tag = 'internal scratch']
  %s0 = inlined_call_operand.vmem [shape: bf16[48,216], index: 0, kind: input, shape index: {}]
  %s1 = inlined_call_operand.vmem [shape: bf16[216,128], index: 1, kind: input, shape index: {}]
  %s2 = inlined_call_operand.vmem [shape: f32[48,1], index: 2, kind: input, shape index: {}]
  %s3 = inlined_call_operand.vmem [shape: bf16[48,128], index: 3, kind: output, shape index: {}]
  %s4 = sld [smem:[#allocation0]]
  $region22: #{conv_autoencoder_forward.10} parent=0
    _
  %s6 = ssub.s32 1, %s4
  %s7 = scalar_select 0, %s6, %s4
  // Predicated region
  $region2: #{conv_autoencoder_forward.10} parent=0 // pred_check
    _
  $region3: #{conv_autoencoder_forward.10} parent=0 // pred_check_branch
    %9 = sbr.rel (0) target = $region5
  $region4: #{conv_autoencoder_forward.10} parent=0 // pred_region
    _
  $region5: #{conv_autoencoder_forward.10} parent=0 // pred_fallthru
    _
  // Predicated region
  $region6: #{conv_autoencoder_forward.10} parent=0 // pred_check
    _
  $region7: #{conv_autoencoder_forward.10} parent=0 // pred_check_branch
    %11 = sbr.rel (0) target = $region9
  $region8: #{conv_autoencoder_forward.10} parent=0 // pred_region
    _
  $region9: #{conv_autoencoder_forward.10} parent=0 // pred_fallthru
    _
  // Predicated region
  $region10: #{conv_autoencoder_forward.10} parent=0 // pred_check
    _
  $region11: #{conv_autoencoder_forward.10} parent=0 // pred_check_branch
    %13 = sbr.rel (0) target = $region13
  $region12: #{conv_autoencoder_forward.10} parent=0 // pred_region
    _
  $region13: #{conv_autoencoder_forward.10} parent=0 // pred_fallthru
    _
  %v15 = vld [vmem:[%s0] sm:$0xff]
  %v16 = vld [vmem:[%s0 + $0x8] sm:$0xff]
  %v17 = vld [vmem:[%s0 + $0x10] sm:$0xff]
  %v18 = vld [vmem:[%s0 + $0x18] sm:$0xff]
  %v19 = vld [vmem:[%s0 + $0x20] sm:$0xff]
  %v20 = vld [vmem:[%s0 + $0x28] sm:$0xff]
  %v21 = vld [vmem:[%s1] sm:$0xf]
  %v22 = vld [vmem:[%s1 + $0x4] sm:$0xf]
  %v23 = vld [vmem:[%s1 + $0x8] sm:$0xf]
  %v24 = vld [vmem:[%s1 + $0xc] sm:$0xf]
  %v25 = vld [vmem:[%s1 + $0x10] sm:$0xf]
  %v26 = vld [vmem:[%s1 + $0x14] sm:$0xf]
  %v27 = vld [vmem:[%s1 + $0x18] sm:$0xf]
  %v28 = vld [vmem:[%s1 + $0x1c] sm:$0xf]
  %v29 = vld [vmem:[%s1 + $0x20] sm:$0xf]
  %v30 = vld [vmem:[%s1 + $0x24] sm:$0xf]
  %v31 = vld [vmem:[%s1 + $0x28] sm:$0xf]
  %v32 = vld [vmem:[%s1 + $0x2c] sm:$0xf]
  %v33 = vld [vmem:[%s1 + $0x30] sm:$0xf]
  %v34 = vld [vmem:[%s1 + $0x34] sm:$0xf]
  %v35 = vld [vmem:[%s1 + $0x38] sm:$0xf]
  %v36 = vld [vmem:[%s1 + $0x3c] sm:$0xf]
  %v37 = vld [vmem:[%s1 + $0x40] sm:$0xf]
  %v38 = vld [vmem:[%s1 + $0x44] sm:$0xf]
  %v39 = vld [vmem:[%s1 + $0x48] sm:$0xf]
  %v40 = vld [vmem:[%s1 + $0x4c] sm:$0xf]
  %v41 = vld [vmem:[%s1 + $0x50] sm:$0xf]
  %v42 = vld [vmem:[%s1 + $0x54] sm:$0xf]
  %v43 = vld [vmem:[%s1 + $0x58] sm:$0xf]
  %v44 = vld [vmem:[%s1 + $0x5c] sm:$0xf]
  %v45 = vld [vmem:[%s1 + $0x60] sm:$0xf]
  %v46 = vld [vmem:[%s1 + $0x64] sm:$0xf]
  %v47 = vld [vmem:[%s1 + $0x68] sm:$0xf]
  %v48 = vld [vmem:[%s2] sm:$0xff]
  %v49 = vld [vmem:[%s2 + $0x8] sm:$0xff]
  %v50 = vld [vmem:[%s2 + $0x10] sm:$0xff]
  %v51 = vld [vmem:[%s2 + $0x18] sm:$0xff]
  %v52 = vld [vmem:[%s2 + $0x20] sm:$0xff]
  %v53 = vld [vmem:[%s2 + $0x28] sm:$0xff]
  %55 = vset.pattern.permute.xlu0 0
  %56 = vperm.xlu0 %55, %v48
  %v57 = vpop.permute.xlu0 %56
  %60 = vset.pattern.permute.xlu0 0
  %61 = vperm.xlu0 %60, %v49
  %v62 = vpop.permute.xlu0 %61
  %65 = vset.pattern.permute.xlu0 0
  %66 = vperm.xlu0 %65, %v50
  %v67 = vpop.permute.xlu0 %66
  %70 = vset.pattern.permute.xlu0 0
  %71 = vperm.xlu0 %70, %v51
  %v72 = vpop.permute.xlu0 %71
  %75 = vset.pattern.permute.xlu0 0
  %76 = vperm.xlu0 %75, %v52
  %v77 = vpop.permute.xlu0 %76
  %80 = vset.pattern.permute.xlu0 0
  %81 = vperm.xlu0 %80, %v53
  %v82 = vpop.permute.xlu0 %81
  %v90 = vunpack.c.l.b16 %v15
  %v91 = vunpack.c.h.b16 %v15
  %v92 = vunpack.c.l.b16 %v16
  %v93 = vunpack.c.h.b16 %v16
  %v94 = vunpack.c.l.b16 %v17
  %v95 = vunpack.c.h.b16 %v17
  %v96 = vunpack.c.l.b16 %v18
  %v97 = vunpack.c.h.b16 %v18
  %v98 = vunpack.c.l.b16 %v19
  %v99 = vunpack.c.h.b16 %v19
  %v100 = vunpack.c.l.b16 %v20
  %v101 = vunpack.c.h.b16 %v20
  %v102 = vpack.c.b16 %v92, %v90
  %v103 = vpack.c.b16 %v93, %v91
  %v104 = vpack.c.b16 %v96, %v94
  %v105 = vpack.c.b16 %v97, %v95
  %v106 = vpack.c.b16 %v100, %v98
  %v107 = vpack.c.b16 %v101, %v99
  %v138 = vunpack.c.l.b16 %v21
  %v139 = vunpack.c.l.b16 %v22
  %v140 = vunpack.c.l.b16 %v23
  %v141 = vunpack.c.l.b16 %v24
  %v142 = vunpack.c.l.b16 %v25
  %v143 = vunpack.c.l.b16 %v26
  %v144 = vunpack.c.l.b16 %v27
  %v145 = vunpack.c.l.b16 %v28
  %v146 = vunpack.c.l.b16 %v29
  %v147 = vunpack.c.l.b16 %v30
  %v148 = vunpack.c.l.b16 %v31
  %v149 = vunpack.c.l.b16 %v32
  %v150 = vunpack.c.l.b16 %v33
  %v151 = vunpack.c.l.b16 %v34
  %v152 = vunpack.c.l.b16 %v35
  %v153 = vunpack.c.l.b16 %v36
  %v154 = vunpack.c.l.b16 %v37
  %v155 = vunpack.c.l.b16 %v38
  %v156 = vunpack.c.l.b16 %v39
  %v157 = vunpack.c.l.b16 %v40
  %v158 = vunpack.c.l.b16 %v41
  %v159 = vunpack.c.l.b16 %v42
  %v160 = vunpack.c.l.b16 %v43
  %v161 = vunpack.c.l.b16 %v44
  %v162 = vunpack.c.l.b16 %v45
  %v163 = vunpack.c.l.b16 %v46
  %v164 = vunpack.c.l.b16 %v47
  %v165 = vpack.c.b16 %v139, %v138
  %v166 = vpack.c.b16 %v141, %v140
  %v167 = vpack.c.b16 %v143, %v142
  %v168 = vpack.c.b16 %v145, %v144
  %v169 = vpack.c.b16 %v147, %v146
  %v170 = vpack.c.b16 %v149, %v148
  %v171 = vpack.c.b16 %v151, %v150
  %v172 = vpack.c.b16 %v153, %v152
  %v173 = vpack.c.b16 %v155, %v154
  %v174 = vpack.c.b16 %v157, %v156
  %v175 = vpack.c.b16 %v159, %v158
  %v176 = vpack.c.b16 %v161, %v160
  %v177 = vpack.c.b16 %v163, %v162
  %v178 = vpack.c.b16 %v164, %v164
  %vm192 = vcmask 719872
  %v194 = vsel %vm192, %v103, 0
  %v197 = vsel %vm192, %v105, 0
  %v200 = vsel %vm192, %v107, 0
  %vm202 = vcmask 1043456
  %v204 = vsel %vm202, %v178, 0
  %206 = vmatprep.subr.bf16.mxu0 0
  %207 = vmatpush1.bf16.msra.mxu0 %v165
  %208 = vmatprep.subr.bf16.mxu0 0
  %209 = vmatpush1.bf16.msra.mxu0 %v166
  %210 = vmatprep.subr.bf16.mxu0 0
  %211 = vmatpush1.bf16.msra.mxu0 %v167
  %212 = vmatprep.subr.bf16.mxu0 0
  %213 = vmatpush1.bf16.msra.mxu0 %v168
  %214 = vmatprep.subr.bf16.mxu0 0
  %215 = vmatpush1.bf16.msra.mxu0 %v169
  %216 = vmatprep.subr.bf16.mxu0 0
  %217 = vmatpush1.bf16.msra.mxu0 %v170
  %218 = vmatprep.subr.bf16.mxu0 0
  %219 = vmatpush1.bf16.msra.mxu0 %v171
  %220 = vmatprep.subr.bf16.mxu0 0
  %221 = vmatpush1.bf16.msra.mxu0 %v172
  %222 = vmatprep.subr.bf16.mxu0 0
  %223 = vmatpush1.bf16.msra.mxu0 %v173
  %224 = vmatprep.subr.bf16.mxu0 0
  %225 = vmatpush1.bf16.msra.mxu0 %v174
  %226 = vmatprep.subr.bf16.mxu0 0
  %227 = vmatpush1.bf16.msra.mxu0 %v175
  %228 = vmatprep.subr.bf16.mxu0 0
  %229 = vmatpush1.bf16.msra.mxu0 %v176
  %230 = vmatprep.subr.bf16.mxu0 0
  %231 = vmatpush1.bf16.msra.mxu0 %v177
  %232 = vmatprep.subr.bf16.mxu0 0
  %233 = vmatpush1.bf16.msra.mxu0 %v204
  %234 = vmatprep.subr.bf16.mxu0 0
  %235 = vmatpush1.bf16.msra.mxu0 0
  %236 = vmatprep.subr.bf16.mxu0 0
  %237 = vmatpush1.bf16.msra.mxu0 0
  %238 = vmatprep.mubr.bf16.mxu0 %v194
  %239 = vmatmul.mubr.bf16.gmra.mrb[0].mxu0 %v102
  %v240 = vpop.f32.mrb[0].mxu0
  %v241 = vadd.f32 %v57, %v240
  %v242 = vpop.f32.mrb[0].mxu0
  %v243 = vpop.f32.mrb[0].mxu0
  %v244 = vadd.f32 %v62, %v243
  %v245 = vpop.f32.mrb[0].mxu0
  %246 = vmatprep.mubr.bf16.mxu0 %v197
  %247 = vmatmul.mubr.bf16.gmra.mrb[0].mxu0 %v104
  %v248 = vpop.f32.mrb[0].mxu0
  %v249 = vadd.f32 %v67, %v248
  %v250 = vpop.f32.mrb[0].mxu0
  %v251 = vpop.f32.mrb[0].mxu0
  %v252 = vadd.f32 %v72, %v251
  %v253 = vpop.f32.mrb[0].mxu0
  %254 = vmatprep.mubr.bf16.mxu0 %v200
  %255 = vmatmul.mubr.bf16.gmra.mrb[0].mxu0 %v106
  %v256 = vpop.f32.mrb[0].mxu0
  %v257 = vadd.f32 %v77, %v256
  %v258 = vpop.f32.mrb[0].mxu0
  %v259 = vpop.f32.mrb[0].mxu0
  %v260 = vadd.f32 %v82, %v259
  %v261 = vpop.f32.mrb[0].mxu0
  %262 = vdwg.mxu0
  %v263 = vmax.f32 %v241, 0.0
  %v264 = vmax.f32 %v244, 0.0
  %v265 = vmax.f32 %v249, 0.0
  %v266 = vmax.f32 %v252, 0.0
  %v267 = vmax.f32 %v257, 0.0
  %v268 = vmax.f32 %v260, 0.0
  %v269 = vpack.c.bf16 %v264, %v263
  %v270 = vpack.c.bf16 %v266, %v265
  %v271 = vpack.c.bf16 %v268, %v267
  %v275 = vunpack.c.l.b16 %v269
  %v276 = vunpack.c.h.b16 %v269
  %v277 = vunpack.c.l.b16 %v270
  %v278 = vunpack.c.h.b16 %v270
  %v279 = vunpack.c.l.b16 %v271
  %v280 = vunpack.c.h.b16 %v271
  %v281 = vpack.c.b16 %v275, %v275
  %v282 = vpack.c.b16 %v276, %v276
  %v283 = vpack.c.b16 %v277, %v277
  %v284 = vpack.c.b16 %v278, %v278
  %v285 = vpack.c.b16 %v279, %v279
  %v286 = vpack.c.b16 %v280, %v280
  %293 = vst [vmem:[%s3] sm:$0xf] %v281
  %294 = vst [vmem:[%s3 + $0x4] sm:$0xf] %v282
  %295 = vst [vmem:[%s3 + $0x8] sm:$0xf] %v283
  %296 = vst [vmem:[%s3 + $0xc] sm:$0xf] %v284
  %297 = vst [vmem:[%s3 + $0x10] sm:$0xf] %v285
  %298 = vst [vmem:[%s3 + $0x14] sm:$0xf] %v286
  // Predicated region
  $region14: #{conv_autoencoder_forward.10} parent=0 // pred_check
    _
  $region15: #{conv_autoencoder_forward.10} parent=0 // pred_check_branch
    %300 = sbr.rel (0) target = $region17
  $region16: #{conv_autoencoder_forward.10} parent=0 // pred_region
    _
  $region17: #{conv_autoencoder_forward.10} parent=0 // pred_fallthru
    _
  // Predicated region
  $region18: #{conv_autoencoder_forward.10} parent=0 // pred_check
    _
  $region19: #{conv_autoencoder_forward.10} parent=0 // pred_check_branch
    %302 = sbr.rel (0) target = $region21
  $region20: #{conv_autoencoder_forward.10} parent=0 // pred_region
    _
  $region21: #{conv_autoencoder_forward.10} parent=0 // pred_fallthru
    _

// kernel: tile.28
$region0: #{tile.28}
  #allocation0 [shape = 's32[1]{0}', space=sflag, size = 0x4, scoped, tag = 'scoped memory for tile.28']
  %s0 = inlined_call_operand.vmem [shape: f32[3], index: 0, kind: input, shape index: {}]
  %s1 = inlined_call_operand.vmem [shape: f32[4,3], index: 1, kind: output, shape index: {}]
  // Predicated region
  $region2: #{tile.28} parent=0 // pred_check
    _
  $region3: #{tile.28} parent=0 // pred_check_branch
    %3 = sbr.rel (0) target = $region5
  $region4: #{tile.28} parent=0 // pred_region
    _
  $region5: #{tile.28} parent=0 // pred_fallthru
    _
  %v4 = vld [vmem:[%s0] ss:$0 sm:$0xff]
  %5 = vst [vmem:[%s1] sm:$0xf] %v4

// kernel: tile.29
$region0: #{tile.29}
  %s0 = inlined_call_operand.vmem [shape: f32[4,3], index: 0, kind: input, shape index: {}]
  %s1 = inlined_call_operand.vmem [shape: f32[12], index: 1, kind: output, shape index: {}]
  $region1: #{tile.29} parent=0
    #allocation0 [shape = 'u8[4096]{0}', space=vmem, size = 0x1000, scoped, tag = 'scoped mem for output reshape']
    #allocation1 [shape = 'u8[4096]{0}', space=vmem, size = 0x1000, scoped, tag = 'scoped mem for input reshape']
    %s3 = sshllo.u32 0, 4
    %v4 = vld [vmem:[%s0] sm:%s3]
    %5 = vst [vmem:[#allocation1] sm:%s3] %v4
    %v6 = vld [vmem:[#allocation1] sm:$0x1]
    %vm7 = vcmask 23552
    %8 = vst.msk [vmem:[#allocation0] sm:$0x1] %vm7, %v6
    %s9 = scalar_lea.vmem [#allocation1], 3
    %v10 = vld [vmem:[%s9] sm:$0x1]
    %11 = vrot.lane.b32.xlu0 %v10, 9
    %v12 = vpop.permute.xlu0 %11
    %vm13 = vcmask 97352
    %14 = vst.msk [vmem:[#allocation0] sm:$0x1] %vm13, %v12
    %s15 = scalar_lea.vmem [#allocation1], 2
    %v16 = vld [vmem:[%s15] sm:$0x1]
    %17 = vrot.lane.b32.xlu0 %v16, 6
    %v18 = vpop.permute.xlu0 %17
    %vm19 = vcmask 72752
    %20 = vst.msk [vmem:[#allocation0] sm:$0x1] %vm19, %v18
    %s21 = scalar_lea.vmem [#allocation1], 1
    %v22 = vld [vmem:[%s21] sm:$0x1]
    %23 = vrot.lane.b32.xlu0 %v22, 3
    %v24 = vpop.permute.xlu0 %23
    %vm25 = vcmask 48152
    %26 = vst.msk [vmem:[#allocation0] sm:$0x1] %vm25, %v24
    %s28 = sshllo.u32 0, 1
    %v30 = vld [vmem:[#allocation0] sm:%s28]
    %s31 = sshllo.u32 0, 1
    %32 = vst [vmem:[%s1] sm:%s31] %v30

// kernel: conv_autoencoder_forward.11
$region0: #{conv_autoencoder_forward.11}
  #allocation0 [shape = 'u32[]', space=smem, size = 0x4, offset = 0x4, fixed_abs, tag = 'smem constant byte address 0x4 - core index']
  #allocation1 [shape = 'u32[144,128]{1,0:T(1,128)}', space=vmem, size = 0x12000, scoped, tag = 'internal scratch']
  %s0 = inlined_call_operand.vmem [shape: bf16[16,108], index: 0, kind: input, shape index: {}]
  %s1 = inlined_call_operand.vmem [shape: bf16[108,512], index: 1, kind: input, shape index: {}]
  %s2 = inlined_call_operand.vmem [shape: f32[16,1], index: 2, kind: input, shape index: {}]
  %s3 = inlined_call_operand.vmem [shape: bf16[16,512], index: 3, kind: output, shape index: {}]
  %s4 = sld [smem:[#allocation0]]
  $region117: #{conv_autoencoder_forward.11} parent=0
    _
  %s6 = ssub.s32 1, %s4
  %s7 = scalar_select 0, %s6, %s4
  $region1: #{conv_autoencoder_forward.11} parent=0
    #allocation2 [shape = 'u8[114688]{0}', space=vmem, size = 0x1c000, scoped, tag = 'input window, operand 1']
    #allocation3 [shape = 'u8[16384]{0}', space=vmem, size = 0x4000, scoped, tag = 'output window, operand 0']
    loop: start=0, step=1, limit=4
    $region2: #{conv_autoencoder_forward.11} parent=1 // loop_pre_header
      _
    $region3: #{conv_autoencoder_forward.11} parent=1 // loop_header
      %s9 = sphi 0, %s13
      %p10 = scmp.ge.s32.totalorder %s9, 4
      %s17 = sphi 0, %s17
      %s19 = sphi 0, %s17
      %s20 = sphi 0, %s19
      %s34 = sphi 0, %s20
      %s40 = sphi 0, %s42
      %s43 = sphi 0, %s40
      %s44 = sphi 0, %s43
      %s60 = sphi 0, %s44
      %s64 = sphi 0, %s64
      %s66 = sphi 0, %s64
      %s67 = sphi 0, %s66
      %s81 = sphi 0, %s67
      %s87 = sphi 0, %s89
      %s90 = sphi 0, %s87
      %s91 = sphi 0, %s90
      %s107 = sphi 0, %s91
    $region4: #{conv_autoencoder_forward.11} parent=1 // loop_header_branch
      %12 = sbr.rel (%p10) target = $region8
    $region5: #{conv_autoencoder_forward.11} parent=1 // loop_body
      %s14 = ssub.s32 %s9, 1
      %s15 = ssub.s32 %s9, 2
      %s16 = sadd.s32 %s9, 1
      %s18 = sadd.s32 %s17, 1
      %p21 = scmp.eq.s32.totalorder %s9, 1
      %p22 = scmp.ne.s32.totalorder %s17, %s19
      %p23 = scmp.eq.s32.totalorder %s9, 0
      %p24 = por %p22, %p23
      %p25 = scmp.ne.s32.totalorder %s17, %s19
      %p26 = scmp.eq.s32.totalorder %s14, 1
      %p27 = por %p25, %p26
      %p28 = scmp.ne.s32.totalorder %s19, %s20
      %p29 = scmp.eq.s32.totalorder %s14, 0
      %p30 = por %p28, %p29
      %p31 = scmp.ne.s32.totalorder %s19, %s20
      %p32 = scmp.eq.s32.totalorder %s15, 1
      %p33 = por %p31, %p32
      %p35 = scmp.ne.s32.totalorder %s20, %s34
      %p36 = scmp.eq.s32.totalorder %s15, 0
      %p37 = por %p35, %p36
      %s38 = ssub.s32 %s9, %s16
      %p39 = scmp.eq.s32.totalorder %s38, 0
      %s41 = sadd.s32 %s40, 1
      %s42 = scalar_select %p39, %s40, %s41
      %p45 = pneg %p39
      %p46 = scmp.eq.s32.totalorder %s9, 1
      %p47 = por %p45, %p46
      %p48 = scmp.ne.s32.totalorder %s40, %s43
      %p49 = scmp.eq.s32.totalorder %s9, 0
      %p50 = por %p48, %p49
      %p51 = scmp.ne.s32.totalorder %s40, %s43
      %p52 = scmp.eq.s32.totalorder %s14, 1
      %p53 = por %p51, %p52
      %p54 = scmp.ne.s32.totalorder %s43, %s44
      %p55 = scmp.eq.s32.totalorder %s14, 0
      %p56 = por %p54, %p55
      %p57 = scmp.ne.s32.totalorder %s43, %s44
      %p58 = scmp.eq.s32.totalorder %s15, 1
      %p59 = por %p57, %p58
      %p61 = scmp.ne.s32.totalorder %s44, %s60
      %p62 = scmp.eq.s32.totalorder %s15, 0
      %p63 = por %p61, %p62
      %s65 = sadd.s32 %s64, 1
      %p68 = scmp.eq.s32.totalorder %s9, 1
      %p69 = scmp.ne.s32.totalorder %s64, %s66
      %p70 = scmp.eq.s32.totalorder %s9, 0
      %p71 = por %p69, %p70
      %p72 = scmp.ne.s32.totalorder %s64, %s66
      %p73 = scmp.eq.s32.totalorder %s14, 1
      %p74 = por %p72, %p73
      %p75 = scmp.ne.s32.totalorder %s66, %s67
      %p76 = scmp.eq.s32.totalorder %s14, 0
      %p77 = por %p75, %p76
      %p78 = scmp.ne.s32.totalorder %s66, %s67
      %p79 = scmp.eq.s32.totalorder %s15, 1
      %p80 = por %p78, %p79
      %p82 = scmp.ne.s32.totalorder %s67, %s81
      %p83 = scmp.eq.s32.totalorder %s15, 0
      %p84 = por %p82, %p83
      %s85 = ssub.s32 %s9, %s16
      %p86 = scmp.eq.s32.totalorder %s85, 0
      %s88 = sadd.s32 %s87, 1
      %s89 = scalar_select %p86, %s87, %s88
      %p92 = pneg %p86
      %p93 = scmp.eq.s32.totalorder %s9, 1
      %p94 = por %p92, %p93
      %p95 = scmp.ne.s32.totalorder %s87, %s90
      %p96 = scmp.eq.s32.totalorder %s9, 0
      %p97 = por %p95, %p96
      %p98 = scmp.ne.s32.totalorder %s87, %s90
      %p99 = scmp.eq.s32.totalorder %s14, 1
      %p100 = por %p98, %p99
      %p101 = scmp.ne.s32.totalorder %s90, %s91
      %p102 = scmp.eq.s32.totalorder %s14, 0
      %p103 = por %p101, %p102
      %p104 = scmp.ne.s32.totalorder %s90, %s91
      %p105 = scmp.eq.s32.totalorder %s15, 1
      %p106 = por %p104, %p105
      %p108 = scmp.ne.s32.totalorder %s91, %s107
      %p109 = scmp.eq.s32.totalorder %s15, 0
      %p110 = por %p108, %p109
      %p111 = scmp.le.s32.totalorder 1, %s9
      %p112 = scmp.lt.s32.totalorder %s9, 3
      %p113 = pnand %p111, %p112
      %p114 = pneg %p113
      // Predicated region
      $region9: #{conv_autoencoder_forward.11} parent=5 // pred_check
        _
      $region10: #{conv_autoencoder_forward.11} parent=5 // pred_check_branch
        %116 = sbr.rel (%p113) target = $region12
      $region11: #{conv_autoencoder_forward.11} parent=5 // pred_region
        %s117 = ssub.s32 %s9, 1
        // Predicated region
        $region13: #{conv_autoencoder_forward.11} parent=11 // pred_check
          %p118 = pneg %p30
        $region14: #{conv_autoencoder_forward.11} parent=11 // pred_check_branch
          %120 = sbr.rel (%p118) target = $region16
        $region15: #{conv_autoencoder_forward.11} parent=11 // pred_region
          _
        $region16: #{conv_autoencoder_forward.11} parent=11 // pred_fallthru
          _
        // Predicated region
        $region17: #{conv_autoencoder_forward.11} parent=11 // pred_check
          %p121 = pneg %p77
        $region18: #{conv_autoencoder_forward.11} parent=11 // pred_check_branch
          %123 = sbr.rel (%p121) target = $region20
        $region19: #{conv_autoencoder_forward.11} parent=11 // pred_region
          _
        $region20: #{conv_autoencoder_forward.11} parent=11 // pred_fallthru
          _
      $region12: #{conv_autoencoder_forward.11} parent=5 // pred_fallthru
        _
      %p124 = scmp.lt.s32.totalorder %s9, 2
      // Predicated region
      $region21: #{conv_autoencoder_forward.11} parent=5 // pred_check
        %p125 = pneg %p124
      $region22: #{conv_autoencoder_forward.11} parent=5 // pred_check_branch
        %127 = sbr.rel (%p125) target = $region24
      $region23: #{conv_autoencoder_forward.11} parent=5 // pred_region
        // Predicated region
        $region25: #{conv_autoencoder_forward.11} parent=23 // pred_check
          %p128 = pneg %p50
        $region26: #{conv_autoencoder_forward.11} parent=23 // pred_check_branch
          %130 = sbr.rel (%p128) target = $region28
        $region27: #{conv_autoencoder_forward.11} parent=23 // pred_region
          %s131 = sand.u32 %s40, 1
          %s132 = sand.u32 %s40, 1
          %s133 = smul.addr %s132, 112
          %s134 = scalar_lea.vmem [#allocation2], %s133
          %s135 = smul.u32 2, %s9
          %s136 = smul.addr %s135, 4
          %s137 = scalar_lea.vmem %s1, %s136
          // Predicated region
          $region29: #{conv_autoencoder_forward.11} parent=27 // pred_check
            _
          $region30: #{conv_autoencoder_forward.11} parent=27 // pred_check_branch
            %139 = sbr.rel (0) target = $region32
          $region31: #{conv_autoencoder_forward.11} parent=27 // pred_region
            // Predicated region
            $region33: #{conv_autoencoder_forward.11} parent=31 // pred_check
              _
            $region34: #{conv_autoencoder_forward.11} parent=31 // pred_check_branch
              %141 = sbr.rel (0) target = $region36
            $region35: #{conv_autoencoder_forward.11} parent=31 // pred_region
              // Predicated region
              $region48: #{conv_autoencoder_forward.11} parent=35 // pred_check
                _
              $region49: #{conv_autoencoder_forward.11} parent=35 // pred_check_branch
                %182 = sbr.rel (0) target = $region51
              $region50: #{conv_autoencoder_forward.11} parent=35 // pred_region
                loop: start=0, step=1, limit=1
                $region52: #{conv_autoencoder_forward.11} parent=50 // loop_pre_header
                  _
                $region53: #{conv_autoencoder_forward.11} parent=50 // loop_header
                  %s184 = sphi 0, %s188
                  %p185 = scmp.ge.s32.totalorder %s184, 1
                  %s189 = sphi %s137, %s137
                  %s190 = sphi %s134, %s134
                $region54: #{conv_autoencoder_forward.11} parent=50 // loop_header_branch
                  %187 = sbr.rel (%p185) target = $region58
                $region55: #{conv_autoencoder_forward.11} parent=50 // loop_body
                  %v191 = vld [vmem:[%s189] sm:$0xff]
                  %192 = vst [vmem:[%s190] sm:$0xff] %v191
                  %v193 = vld [vmem:[%s189 + $0x10] sm:$0xff]
                  %194 = vst [vmem:[%s190 + $0x8] sm:$0xff] %v193
                  %v195 = vld [vmem:[%s189 + $0x20] sm:$0xff]
                  %196 = vst [vmem:[%s190 + $0x10] sm:$0xff] %v195
                  %v197 = vld [vmem:[%s189 + $0x30] sm:$0xff]
                  %198 = vst [vmem:[%s190 + $0x18] sm:$0xff] %v197
                  %v199 = vld [vmem:[%s189 + $0x40] sm:$0xff]
                  %200 = vst [vmem:[%s190 + $0x20] sm:$0xff] %v199
                  %v201 = vld [vmem:[%s189 + $0x50] sm:$0xff]
                  %202 = vst [vmem:[%s190 + $0x28] sm:$0xff] %v201
                  %v203 = vld [vmem:[%s189 + $0x60] sm:$0xff]
                  %204 = vst [vmem:[%s190 + $0x30] sm:$0xff] %v203
                  %v205 = vld [vmem:[%s189 + $0x70] sm:$0xff]
                  %206 = vst [vmem:[%s190 + $0x38] sm:$0xff] %v205
                  %v207 = vld [vmem:[%s189 + $0x80] sm:$0xff]
                  %208 = vst [vmem:[%s190 + $0x40] sm:$0xff] %v207
                  %v209 = vld [vmem:[%s189 + $0x90] sm:$0xff]
                  %210 = vst [vmem:[%s190 + $0x48] sm:$0xff] %v209
                  %v211 = vld [vmem:[%s189 + $0xa0] sm:$0xff]
                  %212 = vst [vmem:[%s190 + $0x50] sm:$0xff] %v211
                  %v213 = vld [vmem:[%s189 + $0xb0] sm:$0xff]
                  %214 = vst [vmem:[%s190 + $0x58] sm:$0xff] %v213
                  %v215 = vld [vmem:[%s189 + $0xc0] sm:$0xff]
                  %216 = vst [vmem:[%s190 + $0x60] sm:$0xff] %v215
                  %v217 = vld [vmem:[%s189 + $0xd0] sm:$0xff]
                  %218 = vst [vmem:[%s190 + $0x68] sm:$0xff] %v217
                $region56: #{conv_autoencoder_forward.11} parent=50 // loop_footer
                  %s188 = sadd.s32 1, %s184
                $region57: #{conv_autoencoder_forward.11} parent=50 // loop_footer_branch
                  %183 = sbr.rel target = $region53
                $region58: #{conv_autoencoder_forward.11} parent=50 // loop_exit
                  _
              $region51: #{conv_autoencoder_forward.11} parent=35 // pred_fallthru
                _
              // Predicated region
              $region59: #{conv_autoencoder_forward.11} parent=35 // pred_check
                _
              $region60: #{conv_autoencoder_forward.11} parent=35 // pred_check_branch
                %220 = sbr.rel target = $region62
              $region61: #{conv_autoencoder_forward.11} parent=35 // pred_region
                _
              $region62: #{conv_autoencoder_forward.11} parent=35 // pred_fallthru
                _
            $region36: #{conv_autoencoder_forward.11} parent=31 // pred_fallthru
              _
            // Predicated region
            $region37: #{conv_autoencoder_forward.11} parent=31 // pred_check
              _
            $region38: #{conv_autoencoder_forward.11} parent=31 // pred_check_branch
              %143 = sbr.rel target = $region40
            $region39: #{conv_autoencoder_forward.11} parent=31 // pred_region
              loop: start=0, step=1, limit=1
              $region41: #{conv_autoencoder_forward.11} parent=39 // loop_pre_header
                _
              $region42: #{conv_autoencoder_forward.11} parent=39 // loop_header
                %s146 = sphi 0, %s150
                %p147 = scmp.ge.s32.totalorder %s146, 1
                %s151 = sphi %s137, %s137
                %s152 = sphi %s134, %s134
              $region43: #{conv_autoencoder_forward.11} parent=39 // loop_header_branch
                %149 = sbr.rel (%p147) target = $region47
              $region44: #{conv_autoencoder_forward.11} parent=39 // loop_body
                %v153 = vld [vmem:[%s151] sm:$0xff]
                %154 = vst [vmem:[%s152] sm:$0xff] %v153
                %v155 = vld [vmem:[%s151 + $0x10] sm:$0xff]
                %156 = vst [vmem:[%s152 + $0x8] sm:$0xff] %v155
                %v157 = vld [vmem:[%s151 + $0x20] sm:$0xff]
                %158 = vst [vmem:[%s152 + $0x10] sm:$0xff] %v157
                %v159 = vld [vmem:[%s151 + $0x30] sm:$0xff]
                %160 = vst [vmem:[%s152 + $0x18] sm:$0xff] %v159
                %v161 = vld [vmem:[%s151 + $0x40] sm:$0xff]
                %162 = vst [vmem:[%s152 + $0x20] sm:$0xff] %v161
                %v163 = vld [vmem:[%s151 + $0x50] sm:$0xff]
                %164 = vst [vmem:[%s152 + $0x28] sm:$0xff] %v163
                %v165 = vld [vmem:[%s151 + $0x60] sm:$0xff]
                %166 = vst [vmem:[%s152 + $0x30] sm:$0xff] %v165
                %v167 = vld [vmem:[%s151 + $0x70] sm:$0xff]
                %168 = vst [vmem:[%s152 + $0x38] sm:$0xff] %v167
                %v169 = vld [vmem:[%s151 + $0x80] sm:$0xff]
                %170 = vst [vmem:[%s152 + $0x40] sm:$0xff] %v169
                %v171 = vld [vmem:[%s151 + $0x90] sm:$0xff]
                %172 = vst [vmem:[%s152 + $0x48] sm:$0xff] %v171
                %v173 = vld [vmem:[%s151 + $0xa0] sm:$0xff]
                %174 = vst [vmem:[%s152 + $0x50] sm:$0xff] %v173
                %v175 = vld [vmem:[%s151 + $0xb0] sm:$0xff]
                %176 = vst [vmem:[%s152 + $0x58] sm:$0xff] %v175
                %v177 = vld [vmem:[%s151 + $0xc0] sm:$0xff]
                %178 = vst [vmem:[%s152 + $0x60] sm:$0xff] %v177
                %v179 = vld [vmem:[%s151 + $0xd0] sm:$0xff]
                %180 = vst [vmem:[%s152 + $0x68] sm:$0xff] %v179
              $region45: #{conv_autoencoder_forward.11} parent=39 // loop_footer
                %s150 = sadd.s32 1, %s146
              $region46: #{conv_autoencoder_forward.11} parent=39 // loop_footer_branch
                %145 = sbr.rel target = $region42
              $region47: #{conv_autoencoder_forward.11} parent=39 // loop_exit
                _
            $region40: #{conv_autoencoder_forward.11} parent=31 // pred_fallthru
              _
          $region32: #{conv_autoencoder_forward.11} parent=27 // pred_fallthru
            _
          %221 = vnop
        $region28: #{conv_autoencoder_forward.11} parent=23 // pred_fallthru
          _
      $region24: #{conv_autoencoder_forward.11} parent=5 // pred_fallthru
        _
      %p222 = scmp.le.s32.totalorder 1, %s9
      %p223 = scmp.lt.s32.totalorder %s9, 3
      %p224 = pnand %p222, %p223
      %p225 = pneg %p224
      // Predicated region
      $region63: #{conv_autoencoder_forward.11} parent=5 // pred_check
        _
      $region64: #{conv_autoencoder_forward.11} parent=5 // pred_check_branch
        %227 = sbr.rel (%p224) target = $region66
      $region65: #{conv_autoencoder_forward.11} parent=5 // pred_region
        %s228 = ssub.s32 %s9, 1
        %s229 = sand.u32 %s43, 1
        %s230 = sand.u32 %s43, 1
        %s231 = smul.addr %s230, 112
        %s232 = scalar_lea.vmem [#allocation2], %s231
        // Predicated region
        $region67: #{conv_autoencoder_forward.11} parent=65 // pred_check
          %p233 = pneg %p56
        $region68: #{conv_autoencoder_forward.11} parent=65 // pred_check_branch
          %235 = sbr.rel (%p233) target = $region70
        $region69: #{conv_autoencoder_forward.11} parent=65 // pred_region
          _
        $region70: #{conv_autoencoder_forward.11} parent=65 // pred_fallthru
          _
        %p236 = pneg %p30
        %p237 = pneg %p27
        %s238 = sand.u32 %s43, 1
        %s239 = sand.u32 %s43, 1
        %s240 = smul.addr %s239, 112
        %s241 = scalar_lea.vmem [#allocation2], %s240
        %p242 = pneg %p56
        %p243 = pneg %p53
        %p244 = pneg %p77
        %p245 = pneg %p74
        %p246 = pneg %p103
        %p247 = pneg %p100
        %s248 = sand.u32 %s90, 1
        %s249 = sand.u32 %s90, 1
        %s250 = smul.addr %s249, 16
        %s251 = scalar_lea.vmem [#allocation3], %s250
        %s252 = smul.u32 2, %s14
        %s253 = smul.u32 2, %s14
        %v255 = vld [vmem:[%s0] sm:$0xf]
        %v256 = vld [vmem:[%s0 + $0x4] sm:$0xf]
        %v257 = vld [vmem:[%s232] sm:$0xff]
        %v258 = vld [vmem:[%s232 + $0x8] sm:$0xff]
        %v259 = vld [vmem:[%s232 + $0x10] sm:$0xff]
        %v260 = vld [vmem:[%s232 + $0x18] sm:$0xff]
        %v261 = vld [vmem:[%s232 + $0x20] sm:$0xff]
        %v262 = vld [vmem:[%s232 + $0x28] sm:$0xff]
        %v263 = vld [vmem:[%s232 + $0x30] sm:$0xff]
        %v264 = vld [vmem:[%s232 + $0x38] sm:$0xff]
        %v265 = vld [vmem:[%s232 + $0x40] sm:$0xff]
        %v266 = vld [vmem:[%s232 + $0x48] sm:$0xff]
        %v267 = vld [vmem:[%s232 + $0x50] sm:$0xff]
        %v268 = vld [vmem:[%s232 + $0x58] sm:$0xff]
        %v269 = vld [vmem:[%s232 + $0x60] sm:$0xff]
        %v270 = vld [vmem:[%s232 + $0x68] sm:$0x33]
        %v271 = vld [vmem:[%s2] sm:$0xff]
        %v272 = vld [vmem:[%s2 + $0x8] sm:$0xff]
        %274 = vset.pattern.permute.xlu0 0
        %275 = vperm.xlu0 %274, %v271
        %v276 = vpop.permute.xlu0 %275
        %279 = vset.pattern.permute.xlu0 0
        %280 = vperm.xlu0 %279, %v272
        %v281 = vpop.permute.xlu0 %280
        %v285 = vunpack.c.l.b16 %v255
        %v286 = vunpack.c.l.b16 %v256
        %v287 = vpack.c.b16 %v286, %v285
        %v302 = vunpack.c.l.b16 %v257
        %v303 = vunpack.c.h.b16 %v257
        %v304 = vunpack.c.l.b16 %v258
        %v305 = vunpack.c.h.b16 %v258
        %v306 = vunpack.c.l.b16 %v259
        %v307 = vunpack.c.h.b16 %v259
        %v308 = vunpack.c.l.b16 %v260
        %v309 = vunpack.c.h.b16 %v260
        %v310 = vunpack.c.l.b16 %v261
        %v311 = vunpack.c.h.b16 %v261
        %v312 = vunpack.c.l.b16 %v262
        %v313 = vunpack.c.h.b16 %v262
        %v314 = vunpack.c.l.b16 %v263
        %v315 = vunpack.c.h.b16 %v263
        %v316 = vunpack.c.l.b16 %v264
        %v317 = vunpack.c.h.b16 %v264
        %v318 = vunpack.c.l.b16 %v265
        %v319 = vunpack.c.h.b16 %v265
        %v320 = vunpack.c.l.b16 %v266
        %v321 = vunpack.c.h.b16 %v266
        %v322 = vunpack.c.l.b16 %v267
        %v323 = vunpack.c.h.b16 %v267
        %v324 = vunpack.c.l.b16 %v268
        %v325 = vunpack.c.h.b16 %v268
        %v326 = vunpack.c.l.b16 %v269
        %v327 = vunpack.c.h.b16 %v269
        %v328 = vunpack.c.l.b16 %v270
        %v329 = vunpack.c.h.b16 %v270
        %v330 = vpack.c.b16 %v304, %v302
        %v331 = vpack.c.b16 %v305, %v303
        %v332 = vpack.c.b16 %v308, %v306
        %v333 = vpack.c.b16 %v309, %v307
        %v334 = vpack.c.b16 %v312, %v310
        %v335 = vpack.c.b16 %v313, %v311
        %v336 = vpack.c.b16 %v316, %v314
        %v337 = vpack.c.b16 %v317, %v315
        %v338 = vpack.c.b16 %v320, %v318
        %v339 = vpack.c.b16 %v321, %v319
        %v340 = vpack.c.b16 %v324, %v322
        %v341 = vpack.c.b16 %v325, %v323
        %v342 = vpack.c.b16 %v328, %v326
        %v343 = vpack.c.b16 %v329, %v327
        %vm356 = vcmask 883712
        %v358 = vsel %vm356, %v287, 0
        %vm360 = vcmask 1045504
        %v362 = vsel %vm360, %v342, 0
        %v365 = vsel %vm360, %v343, 0
        %367 = vmatprep.subr.bf16.mxu0 %v331
        %368 = vmatpush1.bf16.msra.mxu0 %v330
        %369 = vmatprep.subr.bf16.mxu0 %v333
        %370 = vmatpush1.bf16.msra.mxu0 %v332
        %371 = vmatprep.subr.bf16.mxu0 %v335
        %372 = vmatpush1.bf16.msra.mxu0 %v334
        %373 = vmatprep.subr.bf16.mxu0 %v337
        %374 = vmatpush1.bf16.msra.mxu0 %v336
        %375 = vmatprep.subr.bf16.mxu0 %v339
        %376 = vmatpush1.bf16.msra.mxu0 %v338
        %377 = vmatprep.subr.bf16.mxu0 %v341
        %378 = vmatpush1.bf16.msra.mxu0 %v340
        %379 = vmatprep.subr.bf16.mxu0 %v365
        %380 = vmatpush1.bf16.msra.mxu0 %v362
        %381 = vmatprep.subr.bf16.mxu0 0
        %382 = vmatpush1.bf16.msra.mxu0 0
        %383 = vmatprep.subr.bf16.mxu0 0
        %384 = vmatpush1.bf16.msra.mxu0 0
        %385 = vmatprep.subr.bf16.mxu0 0
        %386 = vmatpush1.bf16.msra.mxu0 0
        %387 = vmatprep.subr.bf16.mxu0 0
        %388 = vmatpush1.bf16.msra.mxu0 0
        %389 = vmatprep.subr.bf16.mxu0 0
        %390 = vmatpush1.bf16.msra.mxu0 0
        %391 = vmatprep.subr.bf16.mxu0 0
        %392 = vmatpush1.bf16.msra.mxu0 0
        %393 = vmatprep.subr.bf16.mxu0 0
        %394 = vmatpush1.bf16.msra.mxu0 0
        %395 = vmatprep.subr.bf16.mxu0 0
        %396 = vmatpush1.bf16.msra.mxu0 0
        %397 = vmatprep.subr.bf16.mxu0 0
        %398 = vmatpush1.bf16.msra.mxu0 0
        %399 = vmatprep.mubr.bf16.mxu0 0
        %400 = vmatmul.mubr.bf16.gmra.mrb[0].mxu0 %v358
        %v401 = vpop.f32.mrb[0].mxu0
        %v402 = vadd.f32 %v276, %v401
        %v403 = vpop.f32.mrb[0].mxu0
        %v404 = vadd.f32 %v276, %v403
        %v405 = vpop.f32.mrb[0].mxu0
        %v406 = vadd.f32 %v281, %v405
        %v407 = vpop.f32.mrb[0].mxu0
        %v408 = vadd.f32 %v281, %v407
        %409 = vdwg.mxu0
        %v410 = vtanh.pop %v402
        %v411 = vtanh.pop %v404
        %v412 = vtanh.pop %v406
        %v413 = vtanh.pop %v408
        %v414 = vpack.c.bf16 %v412, %v410
        %v415 = vpack.c.bf16 %v413, %v411
        %v418 = vunpack.c.l.b16 %v414
        %v419 = vunpack.c.l.b16 %v415
        %v420 = vunpack.c.h.b16 %v414
        %v421 = vunpack.c.h.b16 %v415
        %v422 = vpack.c.b16 %v419, %v418
        %v423 = vpack.c.b16 %v421, %v420
        %426 = vst [vmem:[%s251] sm:$0xff] %v422
        %427 = vst [vmem:[%s251 + $0x8] sm:$0xff] %v423
        %s428 = sand.u32 %s90, 1
        %s429 = sand.u32 %s90, 1
        %s430 = smul.addr %s429, 16
        %s431 = scalar_lea.vmem [#allocation3], %s430
        // Predicated region
        $region71: #{conv_autoencoder_forward.11} parent=65 // pred_check
          %p432 = pneg %p100
        $region72: #{conv_autoencoder_forward.11} parent=65 // pred_check_branch
          %434 = sbr.rel (%p432) target = $region74
        $region73: #{conv_autoencoder_forward.11} parent=65 // pred_region
          %s435 = smul.u32 2, %s14
          %s436 = smul.addr %s435, 4
          %s437 = scalar_lea.vmem %s3, %s436
          // Predicated region
          $region75: #{conv_autoencoder_forward.11} parent=73 // pred_check
            _
          $region76: #{conv_autoencoder_forward.11} parent=73 // pred_check_branch
            %439 = sbr.rel (0) target = $region78
          $region77: #{conv_autoencoder_forward.11} parent=73 // pred_region
            // Predicated region
            $region79: #{conv_autoencoder_forward.11} parent=77 // pred_check
              _
            $region80: #{conv_autoencoder_forward.11} parent=77 // pred_check_branch
              %441 = sbr.rel (0) target = $region82
            $region81: #{conv_autoencoder_forward.11} parent=77 // pred_region
              // Predicated region
              $region94: #{conv_autoencoder_forward.11} parent=81 // pred_check
                _
              $region95: #{conv_autoencoder_forward.11} parent=81 // pred_check_branch
                %458 = sbr.rel (0) target = $region97
              $region96: #{conv_autoencoder_forward.11} parent=81 // pred_region
                loop: start=0, step=1, limit=1
                $region98: #{conv_autoencoder_forward.11} parent=96 // loop_pre_header
                  _
                $region99: #{conv_autoencoder_forward.11} parent=96 // loop_header
                  %s460 = sphi 0, %s464
                  %p461 = scmp.ge.s32.totalorder %s460, 1
                  %s465 = sphi %s431, %s431
                  %s466 = sphi %s437, %s437
                $region100: #{conv_autoencoder_forward.11} parent=96 // loop_header_branch
                  %463 = sbr.rel (%p461) target = $region104
                $region101: #{conv_autoencoder_forward.11} parent=96 // loop_body
                  %v467 = vld [vmem:[%s465] sm:$0xff]
                  %468 = vst [vmem:[%s466] sm:$0xff] %v467
                  %v469 = vld [vmem:[%s465 + $0x8] sm:$0xff]
                  %470 = vst [vmem:[%s466 + $0x10] sm:$0xff] %v469
                $region102: #{conv_autoencoder_forward.11} parent=96 // loop_footer
                  %s464 = sadd.s32 1, %s460
                $region103: #{conv_autoencoder_forward.11} parent=96 // loop_footer_branch
                  %459 = sbr.rel target = $region99
                $region104: #{conv_autoencoder_forward.11} parent=96 // loop_exit
                  _
              $region97: #{conv_autoencoder_forward.11} parent=81 // pred_fallthru
                _
              // Predicated region
              $region105: #{conv_autoencoder_forward.11} parent=81 // pred_check
                _
              $region106: #{conv_autoencoder_forward.11} parent=81 // pred_check_branch
                %472 = sbr.rel target = $region108
              $region107: #{conv_autoencoder_forward.11} parent=81 // pred_region
                _
              $region108: #{conv_autoencoder_forward.11} parent=81 // pred_fallthru
                _
            $region82: #{conv_autoencoder_forward.11} parent=77 // pred_fallthru
              _
            // Predicated region
            $region83: #{conv_autoencoder_forward.11} parent=77 // pred_check
              _
            $region84: #{conv_autoencoder_forward.11} parent=77 // pred_check_branch
              %443 = sbr.rel target = $region86
            $region85: #{conv_autoencoder_forward.11} parent=77 // pred_region
              loop: start=0, step=1, limit=1
              $region87: #{conv_autoencoder_forward.11} parent=85 // loop_pre_header
                _
              $region88: #{conv_autoencoder_forward.11} parent=85 // loop_header
                %s446 = sphi 0, %s450
                %p447 = scmp.ge.s32.totalorder %s446, 1
                %s451 = sphi %s431, %s431
                %s452 = sphi %s437, %s437
              $region89: #{conv_autoencoder_forward.11} parent=85 // loop_header_branch
                %449 = sbr.rel (%p447) target = $region93
              $region90: #{conv_autoencoder_forward.11} parent=85 // loop_body
                %v453 = vld [vmem:[%s451] sm:$0xff]
                %454 = vst [vmem:[%s452] sm:$0xff] %v453
                %v455 = vld [vmem:[%s451 + $0x8] sm:$0xff]
                %456 = vst [vmem:[%s452 + $0x10] sm:$0xff] %v455
              $region91: #{conv_autoencoder_forward.11} parent=85 // loop_footer
                %s450 = sadd.s32 1, %s446
              $region92: #{conv_autoencoder_forward.11} parent=85 // loop_footer_branch
                %445 = sbr.rel target = $region88
              $region93: #{conv_autoencoder_forward.11} parent=85 // loop_exit
                _
            $region86: #{conv_autoencoder_forward.11} parent=77 // pred_fallthru
              _
          $region78: #{conv_autoencoder_forward.11} parent=73 // pred_fallthru
            _
          %473 = vnop
        $region74: #{conv_autoencoder_forward.11} parent=65 // pred_fallthru
          _
      $region66: #{conv_autoencoder_forward.11} parent=5 // pred_fallthru
        _
      %p474 = scmp.le.s32.totalorder 2, %s9
      // Predicated region
      $region109: #{conv_autoencoder_forward.11} parent=5 // pred_check
        %p475 = pneg %p474
      $region110: #{conv_autoencoder_forward.11} parent=5 // pred_check_branch
        %477 = sbr.rel (%p475) target = $region112
      $region111: #{conv_autoencoder_forward.11} parent=5 // pred_region
        %s478 = ssub.s32 %s9, 2
        // Predicated region
        $region113: #{conv_autoencoder_forward.11} parent=111 // pred_check
          %p479 = pneg %p106
        $region114: #{conv_autoencoder_forward.11} parent=111 // pred_check_branch
          %481 = sbr.rel (%p479) target = $region116
        $region115: #{conv_autoencoder_forward.11} parent=111 // pred_region
          %s482 = sand.u32 %s91, 1
          %s483 = sand.u32 %s91, 1
          %s484 = smul.addr %s483, 16
          %s485 = scalar_lea.vmem [#allocation3], %s484
        $region116: #{conv_autoencoder_forward.11} parent=111 // pred_fallthru
          _
      $region112: #{conv_autoencoder_forward.11} parent=5 // pred_fallthru
        _
    $region6: #{conv_autoencoder_forward.11} parent=1 // loop_footer
      %s13 = sadd.s32 1, %s9
    $region7: #{conv_autoencoder_forward.11} parent=1 // loop_footer_branch
      %8 = sbr.rel target = $region3
    $region8: #{conv_autoencoder_forward.11} parent=1 // loop_exit
      _

</llo_original>
